<compile_context>
chip_gen: v6e
topology: v6e:2x2x1
jax: 0.10.0
libtpu: 0.0.40
codegen_flags: <defaults>
</compile_context>

<pallas_src>
import jax
import jax.numpy as jnp
import numpy as np
from jax.experimental import pallas as pl
from jax.experimental.pallas import tpu as pltpu


# ----------------------------------------------------------------------------
# Static per-tap metadata for a stride-1 'same' conv over an HxW map that is
# flattened to N = H*W on the lane axis: lane-roll shift, border-validity
# mask, and whether the mask is actually needed (interior taps skip it).
# ----------------------------------------------------------------------------
def _same_conv_tap_meta(k, H, W):
    pad = (k - 1) // 2
    N = H * W
    hh, ww = np.meshgrid(np.arange(H), np.arange(W), indexing="ij")
    shifts, masks, needs_mask = [], [], []
    for dh in range(k):
        for dw in range(k):
            oh, ow = dh - pad, dw - pad
            off = oh * W + ow                     # flat source offset
            shifts.append(int((-off) % N))        # roll(x, s)[n] == x[n + off]
            m = ((hh + oh >= 0) & (hh + oh < H) &
                 (ww + ow >= 0) & (ww + ow < W)).reshape(1, N)
            masks.append(m.astype(np.float32))
            needs_mask.append(not bool(m.all()))
    return shifts, np.stack(masks, axis=0), needs_mask   # masks: (k*k, 1, N)


# ----------------------------------------------------------------------------
# Fused kernel: one grid step == one autoregressive timestep of one batch elem
# ----------------------------------------------------------------------------
def _make_fused_predictor_kernel(*, Cin, Ch, N, meta_i, meta_h, meta_t):
    shifts_i, needs_i = meta_i
    shifts_h, needs_h = meta_h
    shifts_t, needs_t = meta_t

    def same_conv(src, w_ref, m_ref, shifts, needs_mask):
        # src: (C_in, N) f32 value; w_ref: (k*k, C_out, C_in); m_ref: (k*k,1,N)
        c_out = w_ref.shape[1]
        acc = jnp.zeros((c_out, N), jnp.float32)          # register accumulator
        for tap, s in enumerate(shifts):
            v = src if s == 0 else pltpu.roll(src, shift=s, axis=1)   # XLU
            if needs_mask[tap]:
                v = v * m_ref[tap]                        # zero-padding border
            acc = acc + jnp.dot(w_ref[tap], v,
                                preferred_element_type=jnp.float32)
        return acc

    def kernel(x0_ref, h0_ref, c0_ref,
               w_inp_ref, w_hid_ref, b_lstm_ref, w_tc_ref, b_tc_ref,
               m_i_ref, m_h_ref, m_t_ref,
               out_ref, x_sc, h_sc, c_sc):
        t = pl.program_id(1)

        # ---- rollout-state init for this batch element --------------------
        @pl.when(t == 0)
        def _init():
            x_sc[...] = x0_ref[...].astype(jnp.float32)
            h_sc[...] = h0_ref[...].astype(jnp.float32)
            c_sc[...] = c0_ref[...].astype(jnp.float32)

        # ---- ConvLSTM gates: inp_conv(x) + hid_conv(h) + fused biases ------
        acc = same_conv(x_sc[...], w_inp_ref, m_i_ref, shifts_i, needs_i)
        acc = acc + same_conv(h_sc[...], w_hid_ref, m_h_ref, shifts_h, needs_h)
        acc = acc + b_lstm_ref[...]               # (4*Ch, 1) broadcast on lanes

        # torch.split channel-block order: i | f | o | g (Ch sublanes each)
        sig = jax.nn.sigmoid(acc[:3 * Ch])
        g = jnp.tanh(acc[3 * Ch:])
        i_g, f_g, o_g = sig[:Ch], sig[Ch:2 * Ch], sig[2 * Ch:]

        c_next = f_g * c_sc[...] + i_g * g        # f32 cell state
        h_next = o_g * jnp.tanh(c_next)
        c_sc[...] = c_next
        h_sc[...] = h_next

        # ---- ConvTranspose2d(stride=1) == 'same' conv with flipped kernel --
        img = same_conv(h_next, w_tc_ref, m_t_ref, shifts_t, needs_t)
        img = img + b_tc_ref[...]
        x_sc[...] = img                           # feeds the next timestep
        out_ref[t] = img.astype(out_ref.dtype)    # lane-dense (Cin, N) store

    return kernel


# ----------------------------------------------------------------------------
# Wrapper: NCHW in / NCHW out, one pallas_call for the whole rollout
# ----------------------------------------------------------------------------
def predictor_forward(first_imgs, T, conv_params, conv_params_t, params, key,
                      normal_init=True):
    """Matches Predictor.forward.  first_imgs: (B, C, H, W) -> (B, T, C, H, W)."""
    B, Cin, H, W = first_imgs.shape
    Ch = conv_params["hidden_channels"]
    ki = conv_params["inp_kernel_size"]
    kh = conv_params["hid_kernel_size"]
    kt = conv_params_t["kernel_size"]
    pad_i = conv_params["inp_padding"]
    p_t = conv_params_t["inp_padding"]

    # Supported configuration (== module defaults).
    assert conv_params["inp_stride"] == 1, "TODO(synk): stride>1 unsupported"
    assert conv_params["ik_dilation"] == 1, "TODO(synk): dilation>1 unsupported"
    assert conv_params_t["output_padding"] == 0, \
        "TODO(synk): output_padding>0 unsupported"
    assert ki % 2 == 1 and kh % 2 == 1 and kt % 2 == 1, "odd kernels only"
    # Autoregressive feedback requires every conv to preserve H x W.
    assert pad_i == (ki - 1) // 2, "TODO(synk): non-'same' input conv unsupported"
    assert p_t == (kt - 1) // 2, "TODO(synk): size-changing transp. conv unsupported"

    N = H * W
    dtype = first_imgs.dtype
    if T <= 1:
        return first_imgs[:, None].astype(dtype)

    # Initial hidden/cell state, like init_hidden_from_normal(std=0.1).
    if normal_init:
        k_h, k_c = jax.random.split(key)
        h0 = 0.1 * jax.random.normal(k_h, (B, Ch, H, W), dtype)
        c0 = 0.1 * jax.random.normal(k_c, (B, Ch, H, W), dtype)
    else:
        h0 = jnp.zeros((B, Ch, H, W), dtype)
        c0 = jnp.zeros((B, Ch, H, W), dtype)

    # Channels-on-sublanes / spatial-on-lanes layout is just flattened NCHW.
    x0 = first_imgs.reshape(B, Cin, N)
    h0 = h0.reshape(B, Ch, N)
    c0 = c0.reshape(B, Ch, N)

    # Weights: torch OIHW -> (tap, C_out, C_in).  ConvTranspose2d weight
    # (Ch, Cin, kt, kt) -> equivalent forward-conv weight (spatially flipped).
    w_inp = jnp.transpose(params["w_inp"], (2, 3, 0, 1)).reshape(ki * ki, 4 * Ch, Cin)
    w_hid = jnp.transpose(params["w_hid"], (2, 3, 0, 1)).reshape(kh * kh, 4 * Ch, Ch)
    w_tc = jnp.transpose(jnp.flip(params["w_tconv"], axis=(2, 3)),
                         (2, 3, 1, 0)).reshape(kt * kt, Cin, Ch)
    # Fold conv biases + per-gate biases into one f32 (4*Ch, 1) vector.
    b_lstm = (params["b_inp"] + params["b_hid"]
              + params["gate_bias"].reshape(-1)).astype(jnp.float32).reshape(4 * Ch, 1)
    b_tc = params["b_tconv"].astype(jnp.float32).reshape(Cin, 1)

    shifts_i, masks_i, needs_i = _same_conv_tap_meta(ki, H, W)
    shifts_h, masks_h, needs_h = _same_conv_tap_meta(kh, H, W)
    shifts_t, masks_t, needs_t = _same_conv_tap_meta(kt, H, W)

    kernel = _make_fused_predictor_kernel(
        Cin=Cin, Ch=Ch, N=N,
        meta_i=(shifts_i, needs_i),
        meta_h=(shifts_h, needs_h),
        meta_t=(shifts_t, needs_t))

    inputs = (x0, h0, c0, w_inp, w_hid, b_lstm, w_tc, b_tc,
              jnp.asarray(masks_i), jnp.asarray(masks_h), jnp.asarray(masks_t))

    def resident(a):      # fully VMEM-resident, never re-fetched across the grid
        nd = a.ndim
        return pl.BlockSpec(a.shape, lambda b, t, _nd=nd: (0,) * _nd)

    in_specs = [
        pl.BlockSpec((None, Cin, N), lambda b, t: (b, 0, 0)),   # x0 (per batch)
        pl.BlockSpec((None, Ch, N), lambda b, t: (b, 0, 0)),    # h0
        pl.BlockSpec((None, Ch, N), lambda b, t: (b, 0, 0)),    # c0
    ] + [resident(a) for a in inputs[3:]]

    preds = pl.pallas_call(
        kernel,
        grid=(B, T - 1),
        in_specs=in_specs,
        # Output block is resident across the whole rollout of one batch
        # element (index_map constant in t) and lane-dense (last dim N).
        out_specs=pl.BlockSpec((None, T - 1, Cin, N), lambda b, t: (b, 0, 0, 0)),
        out_shape=jax.ShapeDtypeStruct((B, T - 1, Cin, N), dtype),
        scratch_shapes=[
            pltpu.VMEM((Cin, N), jnp.float32),   # predicted frame (next input)
            pltpu.VMEM((Ch, N), jnp.float32),    # hidden state h
            pltpu.VMEM((Ch, N), jnp.float32),    # cell state c (f32 always)
        ],
        compiler_params=pltpu.CompilerParams(
            dimension_semantics=("parallel", "arbitrary")),
    )(*inputs)

    # (B, T-1, Cin, N) -> (B, T-1, Cin, H, W); prepend the conditioning frame.
    preds = preds.reshape(B, T - 1, Cin, H, W)
    return jnp.concatenate([first_imgs[:, None], preds], axis=1)


# ----------------------------------------------------------------------------
# Deterministic parameter init (synthetic, torch-style layouts and bounds)
# ----------------------------------------------------------------------------
def init_params(key, conv_params, conv_params_t, dtype=jnp.float32):
    Cin = conv_params["input_channels"]
    Ch = conv_params["hidden_channels"]
    ki = conv_params["inp_kernel_size"]
    kh = conv_params["hid_kernel_size"]
    kt = conv_params_t["kernel_size"]
    ks = jax.random.split(key, 6)

    def u(k, shape, fan_in):
        b = float(fan_in) ** -0.5
        return jax.random.uniform(k, shape, dtype, -b, b)

    return dict(
        w_inp=u(ks[0], (4 * Ch, Cin, ki, ki), Cin * ki * ki),   # torch OIHW
        b_inp=u(ks[1], (4 * Ch,), Cin * ki * ki),
        w_hid=u(ks[2], (4 * Ch, Ch, kh, kh), Ch * kh * kh),
        b_hid=u(ks[3], (4 * Ch,), Ch * kh * kh),
        gate_bias=jnp.zeros((4, Ch), dtype),                    # i,f,o,g (zeros)
        w_tconv=u(ks[4], (Ch, Cin, kt, kt), Ch * kt * kt),      # torch tconv layout
        b_tconv=u(ks[5], (Cin,), Ch * kt * kt),
    )


# ----------------------------------------------------------------------------
if __name__ == "__main__":
    conv_params = dict(input_channels=3, hidden_channels=8, inp_kernel_size=3,
                       hid_kernel_size=3, inp_stride=1, inp_padding=1,
                       ik_dilation=1, bias=True)
    conv_params_t = dict(kernel_size=3, ik_dilation=1, inp_padding=1,
                         output_padding=0, bias=True)

    key = jax.random.PRNGKey(0)
    k_img, k_param, k_state = jax.random.split(key, 3)

    B, H, W, T = 2, 16, 16, 8
    first_imgs = jax.random.normal(k_img, (B, 3, H, W), jnp.float32)   # NCHW

    params = init_params(k_param, conv_params, conv_params_t)

    fwd = jax.jit(lambda imgs, k: predictor_forward(
        imgs, T, conv_params, conv_params_t, params, k, normal_init=True))
    out = jax.block_until_ready(fwd(first_imgs, k_state))

    assert out.shape == (B, T, 3, H, W), out.shape
    assert bool(jnp.all(jnp.isfinite(out)))
    print("KERNEL_OK")
</pallas_src>

<mosaic_0001>
module attributes {stable_mosaic.version = 11 : i64} {
  func.func @kernel(%arg0: i32, %arg1: i32, %arg2: memref<1x3x256xf32, #tpu.memory_space<vmem>>, %arg3: memref<1x8x256xf32, #tpu.memory_space<vmem>>, %arg4: memref<1x8x256xf32, #tpu.memory_space<vmem>>, %arg5: memref<9x32x3xf32, #tpu.memory_space<vmem>>, %arg6: memref<9x32x8xf32, #tpu.memory_space<vmem>>, %arg7: memref<32x1xf32, #tpu.memory_space<vmem>>, %arg8: memref<9x3x8xf32, #tpu.memory_space<vmem>>, %arg9: memref<3x1xf32, #tpu.memory_space<vmem>>, %arg10: memref<9x1x256xf32, #tpu.memory_space<vmem>>, %arg11: memref<9x1x256xf32, #tpu.memory_space<vmem>>, %arg12: memref<9x1x256xf32, #tpu.memory_space<vmem>>, %arg13: memref<1x7x3x256xf32, #tpu.memory_space<vmem>>, %arg14: memref<3x256xf32, #tpu.memory_space<vmem>>, %arg15: memref<8x256xf32, #tpu.memory_space<vmem>>, %arg16: memref<8x256xf32, #tpu.memory_space<vmem>>) attributes {dimension_semantics = [#tpu.dimension_semantics<parallel>, #tpu.dimension_semantics<arbitrary>], iteration_bounds = array<i64: 2, 7>, scalar_prefetch = 0 : i64, scratch_operands = 3 : i64, tpu.core_type = #tpu.core_type<tc>, window_params = [{transform_indices = @transform_0, window_bounds = array<i64: 1, 3, 256>}, {transform_indices = @transform_1, window_bounds = array<i64: 1, 8, 256>}, {transform_indices = @transform_2, window_bounds = array<i64: 1, 8, 256>}, {pipeline_mode = #tpu.pipeline_mode<synchronous>, transform_indices = @transform_3, window_bounds = array<i64: 9, 32, 3>}, {pipeline_mode = #tpu.pipeline_mode<synchronous>, transform_indices = @transform_4, window_bounds = array<i64: 9, 32, 8>}, {pipeline_mode = #tpu.pipeline_mode<synchronous>, transform_indices = @transform_5, window_bounds = array<i64: 32, 1>}, {pipeline_mode = #tpu.pipeline_mode<synchronous>, transform_indices = @transform_6, window_bounds = array<i64: 9, 3, 8>}, {pipeline_mode = #tpu.pipeline_mode<synchronous>, transform_indices = @transform_7, window_bounds = array<i64: 3, 1>}, {pipeline_mode = #tpu.pipeline_mode<synchronous>, transform_indices = @transform_8, window_bounds = array<i64: 9, 1, 256>}, {pipeline_mode = #tpu.pipeline_mode<synchronous>, transform_indices = @transform_9, window_bounds = array<i64: 9, 1, 256>}, {pipeline_mode = #tpu.pipeline_mode<synchronous>, transform_indices = @transform_10, window_bounds = array<i64: 9, 1, 256>}, {transform_indices = @transform_11, window_bounds = array<i64: 1, 7, 3, 256>}]} {
    %c0_i32 = arith.constant 0 : i32
    %0 = arith.cmpi eq, %arg1, %c0_i32 : i32
    %1 = arith.extui %0 : i1 to i32
    %c0_i32_0 = arith.constant 0 : i32
    %2 = arith.cmpi ne, %1, %c0_i32_0 : i32
    scf.if %2 {
      %c0_210 = arith.constant 0 : index
      %c0_211 = arith.constant 0 : index
      %c0_212 = arith.constant 0 : index
      %267 = vector.load %arg2[%c0_210, %c0_211, %c0_212] : memref<1x3x256xf32, #tpu.memory_space<vmem>>, vector<1x3x256xf32>
      %268 = vector.shape_cast %267 : vector<1x3x256xf32> to vector<3x256xf32>
      %c0_213 = arith.constant 0 : index
      %c0_214 = arith.constant 0 : index
      %269 = vector.load %arg14[%c0_213, %c0_214] : memref<3x256xf32, #tpu.memory_space<vmem>>, vector<3x256xf32>
      tpu.vector_store %arg14[%c0_213, %c0_214], %268 {strides = array<i32>} : memref<3x256xf32, #tpu.memory_space<vmem>>, vector<3x256xf32>,
      %c0_215 = arith.constant 0 : index
      %c0_216 = arith.constant 0 : index
      %c0_217 = arith.constant 0 : index
      %270 = vector.load %arg3[%c0_215, %c0_216, %c0_217] : memref<1x8x256xf32, #tpu.memory_space<vmem>>, vector<1x8x256xf32>
      %271 = vector.shape_cast %270 : vector<1x8x256xf32> to vector<8x256xf32>
      %c0_218 = arith.constant 0 : index
      %c0_219 = arith.constant 0 : index
      %272 = vector.load %arg15[%c0_218, %c0_219] : memref<8x256xf32, #tpu.memory_space<vmem>>, vector<8x256xf32>
      tpu.vector_store %arg15[%c0_218, %c0_219], %271 {strides = array<i32>} : memref<8x256xf32, #tpu.memory_space<vmem>>, vector<8x256xf32>,
      %c0_220 = arith.constant 0 : index
      %c0_221 = arith.constant 0 : index
      %c0_222 = arith.constant 0 : index
      %273 = vector.load %arg4[%c0_220, %c0_221, %c0_222] : memref<1x8x256xf32, #tpu.memory_space<vmem>>, vector<1x8x256xf32>
      %274 = vector.shape_cast %273 : vector<1x8x256xf32> to vector<8x256xf32>
      %c0_223 = arith.constant 0 : index
      %c0_224 = arith.constant 0 : index
      %275 = vector.load %arg16[%c0_223, %c0_224] : memref<8x256xf32, #tpu.memory_space<vmem>>, vector<8x256xf32>
      tpu.vector_store %arg16[%c0_223, %c0_224], %274 {strides = array<i32>} : memref<8x256xf32, #tpu.memory_space<vmem>>, vector<8x256xf32>,
    } else {
    }
    %c0 = arith.constant 0 : index
    %c0_1 = arith.constant 0 : index
    %3 = vector.load %arg14[%c0, %c0_1] : memref<3x256xf32, #tpu.memory_space<vmem>>, vector<3x256xf32>
    %cst = arith.constant 0.000000e+00 : f32
    %4 = vector.broadcast %cst : f32 to vector<32x256xf32>
    %c17_i32 = arith.constant 17 : i32
    %5 = tpu.dynamic_rotate %3 by %c17_i32 dim 1 : vector<3x256xf32>, i32 -> vector<3x256xf32>
    %c0_2 = arith.constant 0 : index
    %c0_3 = arith.constant 0 : index
    %c0_4 = arith.constant 0 : index
    %6 = vector.load %arg10[%c0_2, %c0_3, %c0_4] : memref<9x1x256xf32, #tpu.memory_space<vmem>>, vector<1x1x256xf32>
    %7 = vector.shape_cast %6 : vector<1x1x256xf32> to vector<1x256xf32>
    %8 = vector.broadcast %7 : vector<1x256xf32> to vector<3x256xf32>
    %9 = arith.mulf %5, %8 : vector<3x256xf32>
    %c0_5 = arith.constant 0 : index
    %c0_6 = arith.constant 0 : index
    %c0_7 = arith.constant 0 : index
    %10 = vector.load %arg5[%c0_5, %c0_6, %c0_7] : memref<9x32x3xf32, #tpu.memory_space<vmem>>, vector<1x32x3xf32>
    %11 = vector.shape_cast %10 : vector<1x32x3xf32> to vector<32x3xf32>
    %cst_8 = arith.constant dense<0.000000e+00> : vector<32x256xf32>
    %12 = tpu.matmul %11, %9, %cst_8 {dimension_numbers = #tpu.dot_dimension_numbers<[1], [0], [0], [1], [0, 0, 1, 1], [], []>} : vector<32x3xf32>, vector<3x256xf32>, vector<32x256xf32> -> vector<32x256xf32>
    %13 = arith.addf %4, %12 : vector<32x256xf32>
    %c16_i32 = arith.constant 16 : i32
    %14 = tpu.dynamic_rotate %3 by %c16_i32 dim 1 : vector<3x256xf32>, i32 -> vector<3x256xf32>
    %c1 = arith.constant 1 : index
    %c0_9 = arith.constant 0 : index
    %c0_10 = arith.constant 0 : index
    %15 = vector.load %arg10[%c1, %c0_9, %c0_10] : memref<9x1x256xf32, #tpu.memory_space<vmem>>, vector<1x1x256xf32>
    %16 = vector.shape_cast %15 : vector<1x1x256xf32> to vector<1x256xf32>
    %17 = vector.broadcast %16 : vector<1x256xf32> to vector<3x256xf32>
    %18 = arith.mulf %14, %17 : vector<3x256xf32>
    %c1_11 = arith.constant 1 : index
    %c0_12 = arith.constant 0 : index
    %c0_13 = arith.constant 0 : index
    %19 = vector.load %arg5[%c1_11, %c0_12, %c0_13] : memref<9x32x3xf32, #tpu.memory_space<vmem>>, vector<1x32x3xf32>
    %20 = vector.shape_cast %19 : vector<1x32x3xf32> to vector<32x3xf32>
    %cst_14 = arith.constant dense<0.000000e+00> : vector<32x256xf32>
    %21 = tpu.matmul %20, %18, %cst_14 {dimension_numbers = #tpu.dot_dimension_numbers<[1], [0], [0], [1], [0, 0, 1, 1], [], []>} : vector<32x3xf32>, vector<3x256xf32>, vector<32x256xf32> -> vector<32x256xf32>
    %22 = arith.addf %13, %21 : vector<32x256xf32>
    %c15_i32 = arith.constant 15 : i32
    %23 = tpu.dynamic_rotate %3 by %c15_i32 dim 1 : vector<3x256xf32>, i32 -> vector<3x256xf32>
    %c2 = arith.constant 2 : index
    %c0_15 = arith.constant 0 : index
    %c0_16 = arith.constant 0 : index
    %24 = vector.load %arg10[%c2, %c0_15, %c0_16] : memref<9x1x256xf32, #tpu.memory_space<vmem>>, vector<1x1x256xf32>
    %25 = vector.shape_cast %24 : vector<1x1x256xf32> to vector<1x256xf32>
    %26 = vector.broadcast %25 : vector<1x256xf32> to vector<3x256xf32>
    %27 = arith.mulf %23, %26 : vector<3x256xf32>
    %c2_17 = arith.constant 2 : index
    %c0_18 = arith.constant 0 : index
    %c0_19 = arith.constant 0 : index
    %28 = vector.load %arg5[%c2_17, %c0_18, %c0_19] : memref<9x32x3xf32, #tpu.memory_space<vmem>>, vector<1x32x3xf32>
    %29 = vector.shape_cast %28 : vector<1x32x3xf32> to vector<32x3xf32>
    %cst_20 = arith.constant dense<0.000000e+00> : vector<32x256xf32>
    %30 = tpu.matmul %29, %27, %cst_20 {dimension_numbers = #tpu.dot_dimension_numbers<[1], [0], [0], [1], [0, 0, 1, 1], [], []>} : vector<32x3xf32>, vector<3x256xf32>, vector<32x256xf32> -> vector<32x256xf32>
    %31 = arith.addf %22, %30 : vector<32x256xf32>
    %c1_i32 = arith.constant 1 : i32
    %32 = tpu.dynamic_rotate %3 by %c1_i32 dim 1 : vector<3x256xf32>, i32 -> vector<3x256xf32>
    %c3 = arith.constant 3 : index
    %c0_21 = arith.constant 0 : index
    %c0_22 = arith.constant 0 : index
    %33 = vector.load %arg10[%c3, %c0_21, %c0_22] : memref<9x1x256xf32, #tpu.memory_space<vmem>>, vector<1x1x256xf32>
    %34 = vector.shape_cast %33 : vector<1x1x256xf32> to vector<1x256xf32>
    %35 = vector.broadcast %34 : vector<1x256xf32> to vector<3x256xf32>
    %36 = arith.mulf %32, %35 : vector<3x256xf32>
    %c3_23 = arith.constant 3 : index
    %c0_24 = arith.constant 0 : index
    %c0_25 = arith.constant 0 : index
    %37 = vector.load %arg5[%c3_23, %c0_24, %c0_25] : memref<9x32x3xf32, #tpu.memory_space<vmem>>, vector<1x32x3xf32>
    %38 = vector.shape_cast %37 : vector<1x32x3xf32> to vector<32x3xf32>
    %cst_26 = arith.constant dense<0.000000e+00> : vector<32x256xf32>
    %39 = tpu.matmul %38, %36, %cst_26 {dimension_numbers = #tpu.dot_dimension_numbers<[1], [0], [0], [1], [0, 0, 1, 1], [], []>} : vector<32x3xf32>, vector<3x256xf32>, vector<32x256xf32> -> vector<32x256xf32>
    %40 = arith.addf %31, %39 : vector<32x256xf32>
    %c4 = arith.constant 4 : index
    %c0_27 = arith.constant 0 : index
    %c0_28 = arith.constant 0 : index
    %41 = vector.load %arg5[%c4, %c0_27, %c0_28] : memref<9x32x3xf32, #tpu.memory_space<vmem>>, vector<1x32x3xf32>
    %42 = vector.shape_cast %41 : vector<1x32x3xf32> to vector<32x3xf32>
    %cst_29 = arith.constant dense<0.000000e+00> : vector<32x256xf32>
    %43 = tpu.matmul %42, %3, %cst_29 {dimension_numbers = #tpu.dot_dimension_numbers<[1], [0], [0], [1], [0, 0, 1, 1], [], []>} : vector<32x3xf32>, vector<3x256xf32>, vector<32x256xf32> -> vector<32x256xf32>
    %44 = arith.addf %40, %43 : vector<32x256xf32>
    %c255_i32 = arith.constant 255 : i32
    %45 = tpu.dynamic_rotate %3 by %c255_i32 dim 1 : vector<3x256xf32>, i32 -> vector<3x256xf32>
    %c5 = arith.constant 5 : index
    %c0_30 = arith.constant 0 : index
    %c0_31 = arith.constant 0 : index
    %46 = vector.load %arg10[%c5, %c0_30, %c0_31] : memref<9x1x256xf32, #tpu.memory_space<vmem>>, vector<1x1x256xf32>
    %47 = vector.shape_cast %46 : vector<1x1x256xf32> to vector<1x256xf32>
    %48 = vector.broadcast %47 : vector<1x256xf32> to vector<3x256xf32>
    %49 = arith.mulf %45, %48 : vector<3x256xf32>
    %c5_32 = arith.constant 5 : index
    %c0_33 = arith.constant 0 : index
    %c0_34 = arith.constant 0 : index
    %50 = vector.load %arg5[%c5_32, %c0_33, %c0_34] : memref<9x32x3xf32, #tpu.memory_space<vmem>>, vector<1x32x3xf32>
    %51 = vector.shape_cast %50 : vector<1x32x3xf32> to vector<32x3xf32>
    %cst_35 = arith.constant dense<0.000000e+00> : vector<32x256xf32>
    %52 = tpu.matmul %51, %49, %cst_35 {dimension_numbers = #tpu.dot_dimension_numbers<[1], [0], [0], [1], [0, 0, 1, 1], [], []>} : vector<32x3xf32>, vector<3x256xf32>, vector<32x256xf32> -> vector<32x256xf32>
    %53 = arith.addf %44, %52 : vector<32x256xf32>
    %c241_i32 = arith.constant 241 : i32
    %54 = tpu.dynamic_rotate %3 by %c241_i32 dim 1 : vector<3x256xf32>, i32 -> vector<3x256xf32>
    %c6 = arith.constant 6 : index
    %c0_36 = arith.constant 0 : index
    %c0_37 = arith.constant 0 : index
    %55 = vector.load %arg10[%c6, %c0_36, %c0_37] : memref<9x1x256xf32, #tpu.memory_space<vmem>>, vector<1x1x256xf32>
    %56 = vector.shape_cast %55 : vector<1x1x256xf32> to vector<1x256xf32>
    %57 = vector.broadcast %56 : vector<1x256xf32> to vector<3x256xf32>
    %58 = arith.mulf %54, %57 : vector<3x256xf32>
    %c6_38 = arith.constant 6 : index
    %c0_39 = arith.constant 0 : index
    %c0_40 = arith.constant 0 : index
    %59 = vector.load %arg5[%c6_38, %c0_39, %c0_40] : memref<9x32x3xf32, #tpu.memory_space<vmem>>, vector<1x32x3xf32>
    %60 = vector.shape_cast %59 : vector<1x32x3xf32> to vector<32x3xf32>
    %cst_41 = arith.constant dense<0.000000e+00> : vector<32x256xf32>
    %61 = tpu.matmul %60, %58, %cst_41 {dimension_numbers = #tpu.dot_dimension_numbers<[1], [0], [0], [1], [0, 0, 1, 1], [], []>} : vector<32x3xf32>, vector<3x256xf32>, vector<32x256xf32> -> vector<32x256xf32>
    %62 = arith.addf %53, %61 : vector<32x256xf32>
    %c240_i32 = arith.constant 240 : i32
    %63 = tpu.dynamic_rotate %3 by %c240_i32 dim 1 : vector<3x256xf32>, i32 -> vector<3x256xf32>
    %c7 = arith.constant 7 : index
    %c0_42 = arith.constant 0 : index
    %c0_43 = arith.constant 0 : index
    %64 = vector.load %arg10[%c7, %c0_42, %c0_43] : memref<9x1x256xf32, #tpu.memory_space<vmem>>, vector<1x1x256xf32>
    %65 = vector.shape_cast %64 : vector<1x1x256xf32> to vector<1x256xf32>
    %66 = vector.broadcast %65 : vector<1x256xf32> to vector<3x256xf32>
    %67 = arith.mulf %63, %66 : vector<3x256xf32>
    %c7_44 = arith.constant 7 : index
    %c0_45 = arith.constant 0 : index
    %c0_46 = arith.constant 0 : index
    %68 = vector.load %arg5[%c7_44, %c0_45, %c0_46] : memref<9x32x3xf32, #tpu.memory_space<vmem>>, vector<1x32x3xf32>
    %69 = vector.shape_cast %68 : vector<1x32x3xf32> to vector<32x3xf32>
    %cst_47 = arith.constant dense<0.000000e+00> : vector<32x256xf32>
    %70 = tpu.matmul %69, %67, %cst_47 {dimension_numbers = #tpu.dot_dimension_numbers<[1], [0], [0], [1], [0, 0, 1, 1], [], []>} : vector<32x3xf32>, vector<3x256xf32>, vector<32x256xf32> -> vector<32x256xf32>
    %71 = arith.addf %62, %70 : vector<32x256xf32>
    %c239_i32 = arith.constant 239 : i32
    %72 = tpu.dynamic_rotate %3 by %c239_i32 dim 1 : vector<3x256xf32>, i32 -> vector<3x256xf32>
    %c8 = arith.constant 8 : index
    %c0_48 = arith.constant 0 : index
    %c0_49 = arith.constant 0 : index
    %73 = vector.load %arg10[%c8, %c0_48, %c0_49] : memref<9x1x256xf32, #tpu.memory_space<vmem>>, vector<1x1x256xf32>
    %74 = vector.shape_cast %73 : vector<1x1x256xf32> to vector<1x256xf32>
    %75 = vector.broadcast %74 : vector<1x256xf32> to vector<3x256xf32>
    %76 = arith.mulf %72, %75 : vector<3x256xf32>
    %c8_50 = arith.constant 8 : index
    %c0_51 = arith.constant 0 : index
    %c0_52 = arith.constant 0 : index
    %77 = vector.load %arg5[%c8_50, %c0_51, %c0_52] : memref<9x32x3xf32, #tpu.memory_space<vmem>>, vector<1x32x3xf32>
    %78 = vector.shape_cast %77 : vector<1x32x3xf32> to vector<32x3xf32>
    %cst_53 = arith.constant dense<0.000000e+00> : vector<32x256xf32>
    %79 = tpu.matmul %78, %76, %cst_53 {dimension_numbers = #tpu.dot_dimension_numbers<[1], [0], [0], [1], [0, 0, 1, 1], [], []>} : vector<32x3xf32>, vector<3x256xf32>, vector<32x256xf32> -> vector<32x256xf32>
    %80 = arith.addf %71, %79 : vector<32x256xf32>
    %c0_54 = arith.constant 0 : index
    %c0_55 = arith.constant 0 : index
    %81 = vector.load %arg15[%c0_54, %c0_55] : memref<8x256xf32, #tpu.memory_space<vmem>>, vector<8x256xf32>
    %cst_56 = arith.constant 0.000000e+00 : f32
    %82 = vector.broadcast %cst_56 : f32 to vector<32x256xf32>
    %c17_i32_57 = arith.constant 17 : i32
    %83 = tpu.dynamic_rotate %81 by %c17_i32_57 dim 1 : vector<8x256xf32>, i32 -> vector<8x256xf32>
    %c0_58 = arith.constant 0 : index
    %c0_59 = arith.constant 0 : index
    %c0_60 = arith.constant 0 : index
    %84 = vector.load %arg11[%c0_58, %c0_59, %c0_60] : memref<9x1x256xf32, #tpu.memory_space<vmem>>, vector<1x1x256xf32>
    %85 = vector.shape_cast %84 : vector<1x1x256xf32> to vector<1x256xf32>
    %86 = vector.broadcast %85 : vector<1x256xf32> to vector<8x256xf32>
    %87 = arith.mulf %83, %86 : vector<8x256xf32>
    %c0_61 = arith.constant 0 : index
    %c0_62 = arith.constant 0 : index
    %c0_63 = arith.constant 0 : index
    %88 = vector.load %arg6[%c0_61, %c0_62, %c0_63] : memref<9x32x8xf32, #tpu.memory_space<vmem>>, vector<1x32x8xf32>
    %89 = vector.shape_cast %88 : vector<1x32x8xf32> to vector<32x8xf32>
    %cst_64 = arith.constant dense<0.000000e+00> : vector<32x256xf32>
    %90 = tpu.matmul %89, %87, %cst_64 {dimension_numbers = #tpu.dot_dimension_numbers<[1], [0], [0], [1], [0, 0, 1, 1], [], []>} : vector<32x8xf32>, vector<8x256xf32>, vector<32x256xf32> -> vector<32x256xf32>
    %91 = arith.addf %82, %90 : vector<32x256xf32>
    %c16_i32_65 = arith.constant 16 : i32
    %92 = tpu.dynamic_rotate %81 by %c16_i32_65 dim 1 : vector<8x256xf32>, i32 -> vector<8x256xf32>
    %c1_66 = arith.constant 1 : index
    %c0_67 = arith.constant 0 : index
    %c0_68 = arith.constant 0 : index
    %93 = vector.load %arg11[%c1_66, %c0_67, %c0_68] : memref<9x1x256xf32, #tpu.memory_space<vmem>>, vector<1x1x256xf32>
    %94 = vector.shape_cast %93 : vector<1x1x256xf32> to vector<1x256xf32>
    %95 = vector.broadcast %94 : vector<1x256xf32> to vector<8x256xf32>
    %96 = arith.mulf %92, %95 : vector<8x256xf32>
    %c1_69 = arith.constant 1 : index
    %c0_70 = arith.constant 0 : index
    %c0_71 = arith.constant 0 : index
    %97 = vector.load %arg6[%c1_69, %c0_70, %c0_71] : memref<9x32x8xf32, #tpu.memory_space<vmem>>, vector<1x32x8xf32>
    %98 = vector.shape_cast %97 : vector<1x32x8xf32> to vector<32x8xf32>
    %cst_72 = arith.constant dense<0.000000e+00> : vector<32x256xf32>
    %99 = tpu.matmul %98, %96, %cst_72 {dimension_numbers = #tpu.dot_dimension_numbers<[1], [0], [0], [1], [0, 0, 1, 1], [], []>} : vector<32x8xf32>, vector<8x256xf32>, vector<32x256xf32> -> vector<32x256xf32>
    %100 = arith.addf %91, %99 : vector<32x256xf32>
    %c15_i32_73 = arith.constant 15 : i32
    %101 = tpu.dynamic_rotate %81 by %c15_i32_73 dim 1 : vector<8x256xf32>, i32 -> vector<8x256xf32>
    %c2_74 = arith.constant 2 : index
    %c0_75 = arith.constant 0 : index
    %c0_76 = arith.constant 0 : index
    %102 = vector.load %arg11[%c2_74, %c0_75, %c0_76] : memref<9x1x256xf32, #tpu.memory_space<vmem>>, vector<1x1x256xf32>
    %103 = vector.shape_cast %102 : vector<1x1x256xf32> to vector<1x256xf32>
    %104 = vector.broadcast %103 : vector<1x256xf32> to vector<8x256xf32>
    %105 = arith.mulf %101, %104 : vector<8x256xf32>
    %c2_77 = arith.constant 2 : index
    %c0_78 = arith.constant 0 : index
    %c0_79 = arith.constant 0 : index
    %106 = vector.load %arg6[%c2_77, %c0_78, %c0_79] : memref<9x32x8xf32, #tpu.memory_space<vmem>>, vector<1x32x8xf32>
    %107 = vector.shape_cast %106 : vector<1x32x8xf32> to vector<32x8xf32>
    %cst_80 = arith.constant dense<0.000000e+00> : vector<32x256xf32>
    %108 = tpu.matmul %107, %105, %cst_80 {dimension_numbers = #tpu.dot_dimension_numbers<[1], [0], [0], [1], [0, 0, 1, 1], [], []>} : vector<32x8xf32>, vector<8x256xf32>, vector<32x256xf32> -> vector<32x256xf32>
    %109 = arith.addf %100, %108 : vector<32x256xf32>
    %c1_i32_81 = arith.constant 1 : i32
    %110 = tpu.dynamic_rotate %81 by %c1_i32_81 dim 1 : vector<8x256xf32>, i32 -> vector<8x256xf32>
    %c3_82 = arith.constant 3 : index
    %c0_83 = arith.constant 0 : index
    %c0_84 = arith.constant 0 : index
    %111 = vector.load %arg11[%c3_82, %c0_83, %c0_84] : memref<9x1x256xf32, #tpu.memory_space<vmem>>, vector<1x1x256xf32>
    %112 = vector.shape_cast %111 : vector<1x1x256xf32> to vector<1x256xf32>
    %113 = vector.broadcast %112 : vector<1x256xf32> to vector<8x256xf32>
    %114 = arith.mulf %110, %113 : vector<8x256xf32>
    %c3_85 = arith.constant 3 : index
    %c0_86 = arith.constant 0 : index
    %c0_87 = arith.constant 0 : index
    %115 = vector.load %arg6[%c3_85, %c0_86, %c0_87] : memref<9x32x8xf32, #tpu.memory_space<vmem>>, vector<1x32x8xf32>
    %116 = vector.shape_cast %115 : vector<1x32x8xf32> to vector<32x8xf32>
    %cst_88 = arith.constant dense<0.000000e+00> : vector<32x256xf32>
    %117 = tpu.matmul %116, %114, %cst_88 {dimension_numbers = #tpu.dot_dimension_numbers<[1], [0], [0], [1], [0, 0, 1, 1], [], []>} : vector<32x8xf32>, vector<8x256xf32>, vector<32x256xf32> -> vector<32x256xf32>
    %118 = arith.addf %109, %117 : vector<32x256xf32>
    %c4_89 = arith.constant 4 : index
    %c0_90 = arith.constant 0 : index
    %c0_91 = arith.constant 0 : index
    %119 = vector.load %arg6[%c4_89, %c0_90, %c0_91] : memref<9x32x8xf32, #tpu.memory_space<vmem>>, vector<1x32x8xf32>
    %120 = vector.shape_cast %119 : vector<1x32x8xf32> to vector<32x8xf32>
    %cst_92 = arith.constant dense<0.000000e+00> : vector<32x256xf32>
    %121 = tpu.matmul %120, %81, %cst_92 {dimension_numbers = #tpu.dot_dimension_numbers<[1], [0], [0], [1], [0, 0, 1, 1], [], []>} : vector<32x8xf32>, vector<8x256xf32>, vector<32x256xf32> -> vector<32x256xf32>
    %122 = arith.addf %118, %121 : vector<32x256xf32>
    %c255_i32_93 = arith.constant 255 : i32
    %123 = tpu.dynamic_rotate %81 by %c255_i32_93 dim 1 : vector<8x256xf32>, i32 -> vector<8x256xf32>
    %c5_94 = arith.constant 5 : index
    %c0_95 = arith.constant 0 : index
    %c0_96 = arith.constant 0 : index
    %124 = vector.load %arg11[%c5_94, %c0_95, %c0_96] : memref<9x1x256xf32, #tpu.memory_space<vmem>>, vector<1x1x256xf32>
    %125 = vector.shape_cast %124 : vector<1x1x256xf32> to vector<1x256xf32>
    %126 = vector.broadcast %125 : vector<1x256xf32> to vector<8x256xf32>
    %127 = arith.mulf %123, %126 : vector<8x256xf32>
    %c5_97 = arith.constant 5 : index
    %c0_98 = arith.constant 0 : index
    %c0_99 = arith.constant 0 : index
    %128 = vector.load %arg6[%c5_97, %c0_98, %c0_99] : memref<9x32x8xf32, #tpu.memory_space<vmem>>, vector<1x32x8xf32>
    %129 = vector.shape_cast %128 : vector<1x32x8xf32> to vector<32x8xf32>
    %cst_100 = arith.constant dense<0.000000e+00> : vector<32x256xf32>
    %130 = tpu.matmul %129, %127, %cst_100 {dimension_numbers = #tpu.dot_dimension_numbers<[1], [0], [0], [1], [0, 0, 1, 1], [], []>} : vector<32x8xf32>, vector<8x256xf32>, vector<32x256xf32> -> vector<32x256xf32>
    %131 = arith.addf %122, %130 : vector<32x256xf32>
    %c241_i32_101 = arith.constant 241 : i32
    %132 = tpu.dynamic_rotate %81 by %c241_i32_101 dim 1 : vector<8x256xf32>, i32 -> vector<8x256xf32>
    %c6_102 = arith.constant 6 : index
    %c0_103 = arith.constant 0 : index
    %c0_104 = arith.constant 0 : index
    %133 = vector.load %arg11[%c6_102, %c0_103, %c0_104] : memref<9x1x256xf32, #tpu.memory_space<vmem>>, vector<1x1x256xf32>
    %134 = vector.shape_cast %133 : vector<1x1x256xf32> to vector<1x256xf32>
    %135 = vector.broadcast %134 : vector<1x256xf32> to vector<8x256xf32>
    %136 = arith.mulf %132, %135 : vector<8x256xf32>
    %c6_105 = arith.constant 6 : index
    %c0_106 = arith.constant 0 : index
    %c0_107 = arith.constant 0 : index
    %137 = vector.load %arg6[%c6_105, %c0_106, %c0_107] : memref<9x32x8xf32, #tpu.memory_space<vmem>>, vector<1x32x8xf32>
    %138 = vector.shape_cast %137 : vector<1x32x8xf32> to vector<32x8xf32>
    %cst_108 = arith.constant dense<0.000000e+00> : vector<32x256xf32>
    %139 = tpu.matmul %138, %136, %cst_108 {dimension_numbers = #tpu.dot_dimension_numbers<[1], [0], [0], [1], [0, 0, 1, 1], [], []>} : vector<32x8xf32>, vector<8x256xf32>, vector<32x256xf32> -> vector<32x256xf32>
    %140 = arith.addf %131, %139 : vector<32x256xf32>
    %c240_i32_109 = arith.constant 240 : i32
    %141 = tpu.dynamic_rotate %81 by %c240_i32_109 dim 1 : vector<8x256xf32>, i32 -> vector<8x256xf32>
    %c7_110 = arith.constant 7 : index
    %c0_111 = arith.constant 0 : index
    %c0_112 = arith.constant 0 : index
    %142 = vector.load %arg11[%c7_110, %c0_111, %c0_112] : memref<9x1x256xf32, #tpu.memory_space<vmem>>, vector<1x1x256xf32>
    %143 = vector.shape_cast %142 : vector<1x1x256xf32> to vector<1x256xf32>
    %144 = vector.broadcast %143 : vector<1x256xf32> to vector<8x256xf32>
    %145 = arith.mulf %141, %144 : vector<8x256xf32>
    %c7_113 = arith.constant 7 : index
    %c0_114 = arith.constant 0 : index
    %c0_115 = arith.constant 0 : index
    %146 = vector.load %arg6[%c7_113, %c0_114, %c0_115] : memref<9x32x8xf32, #tpu.memory_space<vmem>>, vector<1x32x8xf32>
    %147 = vector.shape_cast %146 : vector<1x32x8xf32> to vector<32x8xf32>
    %cst_116 = arith.constant dense<0.000000e+00> : vector<32x256xf32>
    %148 = tpu.matmul %147, %145, %cst_116 {dimension_numbers = #tpu.dot_dimension_numbers<[1], [0], [0], [1], [0, 0, 1, 1], [], []>} : vector<32x8xf32>, vector<8x256xf32>, vector<32x256xf32> -> vector<32x256xf32>
    %149 = arith.addf %140, %148 : vector<32x256xf32>
    %c239_i32_117 = arith.constant 239 : i32
    %150 = tpu.dynamic_rotate %81 by %c239_i32_117 dim 1 : vector<8x256xf32>, i32 -> vector<8x256xf32>
    %c8_118 = arith.constant 8 : index
    %c0_119 = arith.constant 0 : index
    %c0_120 = arith.constant 0 : index
    %151 = vector.load %arg11[%c8_118, %c0_119, %c0_120] : memref<9x1x256xf32, #tpu.memory_space<vmem>>, vector<1x1x256xf32>
    %152 = vector.shape_cast %151 : vector<1x1x256xf32> to vector<1x256xf32>
    %153 = vector.broadcast %152 : vector<1x256xf32> to vector<8x256xf32>
    %154 = arith.mulf %150, %153 : vector<8x256xf32>
    %c8_121 = arith.constant 8 : index
    %c0_122 = arith.constant 0 : index
    %c0_123 = arith.constant 0 : index
    %155 = vector.load %arg6[%c8_121, %c0_122, %c0_123] : memref<9x32x8xf32, #tpu.memory_space<vmem>>, vector<1x32x8xf32>
    %156 = vector.shape_cast %155 : vector<1x32x8xf32> to vector<32x8xf32>
    %cst_124 = arith.constant dense<0.000000e+00> : vector<32x256xf32>
    %157 = tpu.matmul %156, %154, %cst_124 {dimension_numbers = #tpu.dot_dimension_numbers<[1], [0], [0], [1], [0, 0, 1, 1], [], []>} : vector<32x8xf32>, vector<8x256xf32>, vector<32x256xf32> -> vector<32x256xf32>
    %158 = arith.addf %149, %157 : vector<32x256xf32>
    %159 = arith.addf %80, %158 : vector<32x256xf32>
    %c0_125 = arith.constant 0 : index
    %c0_126 = arith.constant 0 : index
    %160 = vector.load %arg7[%c0_125, %c0_126] : memref<32x1xf32, #tpu.memory_space<vmem>>, vector<32x1xf32>
    %161 = vector.broadcast %160 : vector<32x1xf32> to vector<32x256xf32>
    %162 = arith.addf %159, %161 : vector<32x256xf32>
    %163 = vector.extract_strided_slice %162 {offsets = [0, 0], sizes = [24, 256], strides = [1, 1]} : vector<32x256xf32> to vector<24x256xf32>
    %164 = arith.negf %163 : vector<24x256xf32>
    %165 = math.exp %164 : vector<24x256xf32>
    %cst_127 = arith.constant 1.000000e+00 : f32
    %166 = vector.broadcast %cst_127 : f32 to vector<24x256xf32>
    %167 = arith.addf %166, %165 : vector<24x256xf32>
    %168 = arith.divf %166, %167 : vector<24x256xf32>
    %169 = vector.extract_strided_slice %162 {offsets = [24, 0], sizes = [8, 256], strides = [1, 1]} : vector<32x256xf32> to vector<8x256xf32>
    %170 = math.tanh %169 : vector<8x256xf32>
    %171 = vector.extract_strided_slice %168 {offsets = [0, 0], sizes = [8, 256], strides = [1, 1]} : vector<24x256xf32> to vector<8x256xf32>
    %172 = vector.extract_strided_slice %168 {offsets = [8, 0], sizes = [8, 256], strides = [1, 1]} : vector<24x256xf32> to vector<8x256xf32>
    %173 = vector.extract_strided_slice %168 {offsets = [16, 0], sizes = [8, 256], strides = [1, 1]} : vector<24x256xf32> to vector<8x256xf32>
    %c0_128 = arith.constant 0 : index
    %c0_129 = arith.constant 0 : index
    %174 = vector.load %arg16[%c0_128, %c0_129] : memref<8x256xf32, #tpu.memory_space<vmem>>, vector<8x256xf32>
    %175 = arith.mulf %172, %174 : vector<8x256xf32>
    %176 = arith.mulf %171, %170 : vector<8x256xf32>
    %177 = arith.addf %175, %176 : vector<8x256xf32>
    %178 = math.tanh %177 : vector<8x256xf32>
    %179 = arith.mulf %173, %178 : vector<8x256xf32>
    %c0_130 = arith.constant 0 : index
    %c0_131 = arith.constant 0 : index
    %180 = vector.load %arg16[%c0_130, %c0_131] : memref<8x256xf32, #tpu.memory_space<vmem>>, vector<8x256xf32>
    tpu.vector_store %arg16[%c0_130, %c0_131], %177 {strides = array<i32>} : memref<8x256xf32, #tpu.memory_space<vmem>>, vector<8x256xf32>,
    %c0_132 = arith.constant 0 : index
    %c0_133 = arith.constant 0 : index
    %181 = vector.load %arg15[%c0_132, %c0_133] : memref<8x256xf32, #tpu.memory_space<vmem>>, vector<8x256xf32>
    tpu.vector_store %arg15[%c0_132, %c0_133], %179 {strides = array<i32>} : memref<8x256xf32, #tpu.memory_space<vmem>>, vector<8x256xf32>,
    %cst_134 = arith.constant 0.000000e+00 : f32
    %182 = vector.broadcast %cst_134 : f32 to vector<3x256xf32>
    %c17_i32_135 = arith.constant 17 : i32
    %183 = tpu.dynamic_rotate %179 by %c17_i32_135 dim 1 : vector<8x256xf32>, i32 -> vector<8x256xf32>
    %c0_136 = arith.constant 0 : index
    %c0_137 = arith.constant 0 : index
    %c0_138 = arith.constant 0 : index
    %184 = vector.load %arg12[%c0_136, %c0_137, %c0_138] : memref<9x1x256xf32, #tpu.memory_space<vmem>>, vector<1x1x256xf32>
    %185 = vector.shape_cast %184 : vector<1x1x256xf32> to vector<1x256xf32>
    %186 = vector.broadcast %185 : vector<1x256xf32> to vector<8x256xf32>
    %187 = arith.mulf %183, %186 : vector<8x256xf32>
    %c0_139 = arith.constant 0 : index
    %c0_140 = arith.constant 0 : index
    %c0_141 = arith.constant 0 : index
    %188 = vector.load %arg8[%c0_139, %c0_140, %c0_141] : memref<9x3x8xf32, #tpu.memory_space<vmem>>, vector<1x3x8xf32>
    %189 = vector.shape_cast %188 : vector<1x3x8xf32> to vector<3x8xf32>
    %cst_142 = arith.constant dense<0.000000e+00> : vector<3x256xf32>
    %190 = tpu.matmul %189, %187, %cst_142 {dimension_numbers = #tpu.dot_dimension_numbers<[1], [0], [0], [1], [0, 0, 1, 1], [], []>} : vector<3x8xf32>, vector<8x256xf32>, vector<3x256xf32> -> vector<3x256xf32>
    %191 = arith.addf %182, %190 : vector<3x256xf32>
    %c16_i32_143 = arith.constant 16 : i32
    %192 = tpu.dynamic_rotate %179 by %c16_i32_143 dim 1 : vector<8x256xf32>, i32 -> vector<8x256xf32>
    %c1_144 = arith.constant 1 : index
    %c0_145 = arith.constant 0 : index
    %c0_146 = arith.constant 0 : index
    %193 = vector.load %arg12[%c1_144, %c0_145, %c0_146] : memref<9x1x256xf32, #tpu.memory_space<vmem>>, vector<1x1x256xf32>
    %194 = vector.shape_cast %193 : vector<1x1x256xf32> to vector<1x256xf32>
    %195 = vector.broadcast %194 : vector<1x256xf32> to vector<8x256xf32>
    %196 = arith.mulf %192, %195 : vector<8x256xf32>
    %c1_147 = arith.constant 1 : index
    %c0_148 = arith.constant 0 : index
    %c0_149 = arith.constant 0 : index
    %197 = vector.load %arg8[%c1_147, %c0_148, %c0_149] : memref<9x3x8xf32, #tpu.memory_space<vmem>>, vector<1x3x8xf32>
    %198 = vector.shape_cast %197 : vector<1x3x8xf32> to vector<3x8xf32>
    %cst_150 = arith.constant dense<0.000000e+00> : vector<3x256xf32>
    %199 = tpu.matmul %198, %196, %cst_150 {dimension_numbers = #tpu.dot_dimension_numbers<[1], [0], [0], [1], [0, 0, 1, 1], [], []>} : vector<3x8xf32>, vector<8x256xf32>, vector<3x256xf32> -> vector<3x256xf32>
    %200 = arith.addf %191, %199 : vector<3x256xf32>
    %c15_i32_151 = arith.constant 15 : i32
    %201 = tpu.dynamic_rotate %179 by %c15_i32_151 dim 1 : vector<8x256xf32>, i32 -> vector<8x256xf32>
    %c2_152 = arith.constant 2 : index
    %c0_153 = arith.constant 0 : index
    %c0_154 = arith.constant 0 : index
    %202 = vector.load %arg12[%c2_152, %c0_153, %c0_154] : memref<9x1x256xf32, #tpu.memory_space<vmem>>, vector<1x1x256xf32>
    %203 = vector.shape_cast %202 : vector<1x1x256xf32> to vector<1x256xf32>
    %204 = vector.broadcast %203 : vector<1x256xf32> to vector<8x256xf32>
    %205 = arith.mulf %201, %204 : vector<8x256xf32>
    %c2_155 = arith.constant 2 : index
    %c0_156 = arith.constant 0 : index
    %c0_157 = arith.constant 0 : index
    %206 = vector.load %arg8[%c2_155, %c0_156, %c0_157] : memref<9x3x8xf32, #tpu.memory_space<vmem>>, vector<1x3x8xf32>
    %207 = vector.shape_cast %206 : vector<1x3x8xf32> to vector<3x8xf32>
    %cst_158 = arith.constant dense<0.000000e+00> : vector<3x256xf32>
    %208 = tpu.matmul %207, %205, %cst_158 {dimension_numbers = #tpu.dot_dimension_numbers<[1], [0], [0], [1], [0, 0, 1, 1], [], []>} : vector<3x8xf32>, vector<8x256xf32>, vector<3x256xf32> -> vector<3x256xf32>
    %209 = arith.addf %200, %208 : vector<3x256xf32>
    %c1_i32_159 = arith.constant 1 : i32
    %210 = tpu.dynamic_rotate %179 by %c1_i32_159 dim 1 : vector<8x256xf32>, i32 -> vector<8x256xf32>
    %c3_160 = arith.constant 3 : index
    %c0_161 = arith.constant 0 : index
    %c0_162 = arith.constant 0 : index
    %211 = vector.load %arg12[%c3_160, %c0_161, %c0_162] : memref<9x1x256xf32, #tpu.memory_space<vmem>>, vector<1x1x256xf32>
    %212 = vector.shape_cast %211 : vector<1x1x256xf32> to vector<1x256xf32>
    %213 = vector.broadcast %212 : vector<1x256xf32> to vector<8x256xf32>
    %214 = arith.mulf %210, %213 : vector<8x256xf32>
    %c3_163 = arith.constant 3 : index
    %c0_164 = arith.constant 0 : index
    %c0_165 = arith.constant 0 : index
    %215 = vector.load %arg8[%c3_163, %c0_164, %c0_165] : memref<9x3x8xf32, #tpu.memory_space<vmem>>, vector<1x3x8xf32>
    %216 = vector.shape_cast %215 : vector<1x3x8xf32> to vector<3x8xf32>
    %cst_166 = arith.constant dense<0.000000e+00> : vector<3x256xf32>
    %217 = tpu.matmul %216, %214, %cst_166 {dimension_numbers = #tpu.dot_dimension_numbers<[1], [0], [0], [1], [0, 0, 1, 1], [], []>} : vector<3x8xf32>, vector<8x256xf32>, vector<3x256xf32> -> vector<3x256xf32>
    %218 = arith.addf %209, %217 : vector<3x256xf32>
    %c4_167 = arith.constant 4 : index
    %c0_168 = arith.constant 0 : index
    %c0_169 = arith.constant 0 : index
    %219 = vector.load %arg8[%c4_167, %c0_168, %c0_169] : memref<9x3x8xf32, #tpu.memory_space<vmem>>, vector<1x3x8xf32>
    %220 = vector.shape_cast %219 : vector<1x3x8xf32> to vector<3x8xf32>
    %cst_170 = arith.constant dense<0.000000e+00> : vector<3x256xf32>
    %221 = tpu.matmul %220, %179, %cst_170 {dimension_numbers = #tpu.dot_dimension_numbers<[1], [0], [0], [1], [0, 0, 1, 1], [], []>} : vector<3x8xf32>, vector<8x256xf32>, vector<3x256xf32> -> vector<3x256xf32>
    %222 = arith.addf %218, %221 : vector<3x256xf32>
    %c255_i32_171 = arith.constant 255 : i32
    %223 = tpu.dynamic_rotate %179 by %c255_i32_171 dim 1 : vector<8x256xf32>, i32 -> vector<8x256xf32>
    %c5_172 = arith.constant 5 : index
    %c0_173 = arith.constant 0 : index
    %c0_174 = arith.constant 0 : index
    %224 = vector.load %arg12[%c5_172, %c0_173, %c0_174] : memref<9x1x256xf32, #tpu.memory_space<vmem>>, vector<1x1x256xf32>
    %225 = vector.shape_cast %224 : vector<1x1x256xf32> to vector<1x256xf32>
    %226 = vector.broadcast %225 : vector<1x256xf32> to vector<8x256xf32>
    %227 = arith.mulf %223, %226 : vector<8x256xf32>
    %c5_175 = arith.constant 5 : index
    %c0_176 = arith.constant 0 : index
    %c0_177 = arith.constant 0 : index
    %228 = vector.load %arg8[%c5_175, %c0_176, %c0_177] : memref<9x3x8xf32, #tpu.memory_space<vmem>>, vector<1x3x8xf32>
    %229 = vector.shape_cast %228 : vector<1x3x8xf32> to vector<3x8xf32>
    %cst_178 = arith.constant dense<0.000000e+00> : vector<3x256xf32>
    %230 = tpu.matmul %229, %227, %cst_178 {dimension_numbers = #tpu.dot_dimension_numbers<[1], [0], [0], [1], [0, 0, 1, 1], [], []>} : vector<3x8xf32>, vector<8x256xf32>, vector<3x256xf32> -> vector<3x256xf32>
    %231 = arith.addf %222, %230 : vector<3x256xf32>
    %c241_i32_179 = arith.constant 241 : i32
    %232 = tpu.dynamic_rotate %179 by %c241_i32_179 dim 1 : vector<8x256xf32>, i32 -> vector<8x256xf32>
    %c6_180 = arith.constant 6 : index
    %c0_181 = arith.constant 0 : index
    %c0_182 = arith.constant 0 : index
    %233 = vector.load %arg12[%c6_180, %c0_181, %c0_182] : memref<9x1x256xf32, #tpu.memory_space<vmem>>, vector<1x1x256xf32>
    %234 = vector.shape_cast %233 : vector<1x1x256xf32> to vector<1x256xf32>
    %235 = vector.broadcast %234 : vector<1x256xf32> to vector<8x256xf32>
    %236 = arith.mulf %232, %235 : vector<8x256xf32>
    %c6_183 = arith.constant 6 : index
    %c0_184 = arith.constant 0 : index
    %c0_185 = arith.constant 0 : index
    %237 = vector.load %arg8[%c6_183, %c0_184, %c0_185] : memref<9x3x8xf32, #tpu.memory_space<vmem>>, vector<1x3x8xf32>
    %238 = vector.shape_cast %237 : vector<1x3x8xf32> to vector<3x8xf32>
    %cst_186 = arith.constant dense<0.000000e+00> : vector<3x256xf32>
    %239 = tpu.matmul %238, %236, %cst_186 {dimension_numbers = #tpu.dot_dimension_numbers<[1], [0], [0], [1], [0, 0, 1, 1], [], []>} : vector<3x8xf32>, vector<8x256xf32>, vector<3x256xf32> -> vector<3x256xf32>
    %240 = arith.addf %231, %239 : vector<3x256xf32>
    %c240_i32_187 = arith.constant 240 : i32
    %241 = tpu.dynamic_rotate %179 by %c240_i32_187 dim 1 : vector<8x256xf32>, i32 -> vector<8x256xf32>
    %c7_188 = arith.constant 7 : index
    %c0_189 = arith.constant 0 : index
    %c0_190 = arith.constant 0 : index
    %242 = vector.load %arg12[%c7_188, %c0_189, %c0_190] : memref<9x1x256xf32, #tpu.memory_space<vmem>>, vector<1x1x256xf32>
    %243 = vector.shape_cast %242 : vector<1x1x256xf32> to vector<1x256xf32>
    %244 = vector.broadcast %243 : vector<1x256xf32> to vector<8x256xf32>
    %245 = arith.mulf %241, %244 : vector<8x256xf32>
    %c7_191 = arith.constant 7 : index
    %c0_192 = arith.constant 0 : index
    %c0_193 = arith.constant 0 : index
    %246 = vector.load %arg8[%c7_191, %c0_192, %c0_193] : memref<9x3x8xf32, #tpu.memory_space<vmem>>, vector<1x3x8xf32>
    %247 = vector.shape_cast %246 : vector<1x3x8xf32> to vector<3x8xf32>
    %cst_194 = arith.constant dense<0.000000e+00> : vector<3x256xf32>
    %248 = tpu.matmul %247, %245, %cst_194 {dimension_numbers = #tpu.dot_dimension_numbers<[1], [0], [0], [1], [0, 0, 1, 1], [], []>} : vector<3x8xf32>, vector<8x256xf32>, vector<3x256xf32> -> vector<3x256xf32>
    %249 = arith.addf %240, %248 : vector<3x256xf32>
    %c239_i32_195 = arith.constant 239 : i32
    %250 = tpu.dynamic_rotate %179 by %c239_i32_195 dim 1 : vector<8x256xf32>, i32 -> vector<8x256xf32>
    %c8_196 = arith.constant 8 : index
    %c0_197 = arith.constant 0 : index
    %c0_198 = arith.constant 0 : index
    %251 = vector.load %arg12[%c8_196, %c0_197, %c0_198] : memref<9x1x256xf32, #tpu.memory_space<vmem>>, vector<1x1x256xf32>
    %252 = vector.shape_cast %251 : vector<1x1x256xf32> to vector<1x256xf32>
    %253 = vector.broadcast %252 : vector<1x256xf32> to vector<8x256xf32>
    %254 = arith.mulf %250, %253 : vector<8x256xf32>
    %c8_199 = arith.constant 8 : index
    %c0_200 = arith.constant 0 : index
    %c0_201 = arith.constant 0 : index
    %255 = vector.load %arg8[%c8_199, %c0_200, %c0_201] : memref<9x3x8xf32, #tpu.memory_space<vmem>>, vector<1x3x8xf32>
    %256 = vector.shape_cast %255 : vector<1x3x8xf32> to vector<3x8xf32>
    %cst_202 = arith.constant dense<0.000000e+00> : vector<3x256xf32>
    %257 = tpu.matmul %256, %254, %cst_202 {dimension_numbers = #tpu.dot_dimension_numbers<[1], [0], [0], [1], [0, 0, 1, 1], [], []>} : vector<3x8xf32>, vector<8x256xf32>, vector<3x256xf32> -> vector<3x256xf32>
    %258 = arith.addf %249, %257 : vector<3x256xf32>
    %c0_203 = arith.constant 0 : index
    %c0_204 = arith.constant 0 : index
    %259 = vector.load %arg9[%c0_203, %c0_204] : memref<3x1xf32, #tpu.memory_space<vmem>>, vector<3x1xf32>
    %260 = vector.broadcast %259 : vector<3x1xf32> to vector<3x256xf32>
    %261 = arith.addf %258, %260 : vector<3x256xf32>
    %c0_205 = arith.constant 0 : index
    %c0_206 = arith.constant 0 : index
    %262 = vector.load %arg14[%c0_205, %c0_206] : memref<3x256xf32, #tpu.memory_space<vmem>>, vector<3x256xf32>
    tpu.vector_store %arg14[%c0_205, %c0_206], %261 {strides = array<i32>} : memref<3x256xf32, #tpu.memory_space<vmem>>, vector<3x256xf32>,
    %c0_207 = arith.constant 0 : index
    %263 = arith.index_cast %arg1 : i32 to index
    %c0_208 = arith.constant 0 : index
    %c0_209 = arith.constant 0 : index
    %264 = vector.load %arg13[%c0_207, %263, %c0_208, %c0_209] : memref<1x7x3x256xf32, #tpu.memory_space<vmem>>, vector<1x1x3x256xf32>
    %265 = vector.shape_cast %264 : vector<1x1x3x256xf32> to vector<3x256xf32>
    %266 = vector.shape_cast %261 : vector<3x256xf32> to vector<1x1x3x256xf32>
    tpu.vector_store %arg13[%c0_207, %263, %c0_208, %c0_209], %266 {strides = array<i32>} : memref<1x7x3x256xf32, #tpu.memory_space<vmem>>, vector<1x1x3x256xf32>,
    return
  }
  func.func @transform_0(%arg0: i32, %arg1: i32) -> (i32, i32, i32) {
    %c0_i32 = arith.constant 0 : i32
    %c0_i32_0 = arith.constant 0 : i32
    %c0_i32_1 = arith.constant 0 : i32
    return %arg0, %c0_i32, %c0_i32_0 : i32, i32, i32
  }
  func.func @transform_1(%arg0: i32, %arg1: i32) -> (i32, i32, i32) {
    %c0_i32 = arith.constant 0 : i32
    %c0_i32_0 = arith.constant 0 : i32
    %c0_i32_1 = arith.constant 0 : i32
    return %arg0, %c0_i32, %c0_i32_0 : i32, i32, i32
  }
  func.func @transform_2(%arg0: i32, %arg1: i32) -> (i32, i32, i32) {
    %c0_i32 = arith.constant 0 : i32
    %c0_i32_0 = arith.constant 0 : i32
    %c0_i32_1 = arith.constant 0 : i32
    return %arg0, %c0_i32, %c0_i32_0 : i32, i32, i32
  }
  func.func @transform_3(%arg0: i32, %arg1: i32) -> (i32, i32, i32) {
    %c0_i32 = arith.constant 0 : i32
    %c0_i32_0 = arith.constant 0 : i32
    %c0_i32_1 = arith.constant 0 : i32
    %c0_i32_2 = arith.constant 0 : i32
    return %c0_i32, %c0_i32_0, %c0_i32_1 : i32, i32, i32
  }
  func.func @transform_4(%arg0: i32, %arg1: i32) -> (i32, i32, i32) {
    %c0_i32 = arith.constant 0 : i32
    %c0_i32_0 = arith.constant 0 : i32
    %c0_i32_1 = arith.constant 0 : i32
    %c0_i32_2 = arith.constant 0 : i32
    return %c0_i32, %c0_i32_0, %c0_i32_1 : i32, i32, i32
  }
  func.func @transform_5(%arg0: i32, %arg1: i32) -> (i32, i32) {
    %c0_i32 = arith.constant 0 : i32
    %c0_i32_0 = arith.constant 0 : i32
    %c0_i32_1 = arith.constant 0 : i32
    return %c0_i32, %c0_i32_0 : i32, i32
  }
  func.func @transform_6(%arg0: i32, %arg1: i32) -> (i32, i32, i32) {
    %c0_i32 = arith.constant 0 : i32
    %c0_i32_0 = arith.constant 0 : i32
    %c0_i32_1 = arith.constant 0 : i32
    %c0_i32_2 = arith.constant 0 : i32
    return %c0_i32, %c0_i32_0, %c0_i32_1 : i32, i32, i32
  }
  func.func @transform_7(%arg0: i32, %arg1: i32) -> (i32, i32) {
    %c0_i32 = arith.constant 0 : i32
    %c0_i32_0 = arith.constant 0 : i32
    %c0_i32_1 = arith.constant 0 : i32
    return %c0_i32, %c0_i32_0 : i32, i32
  }
  func.func @transform_8(%arg0: i32, %arg1: i32) -> (i32, i32, i32) {
    %c0_i32 = arith.constant 0 : i32
    %c0_i32_0 = arith.constant 0 : i32
    %c0_i32_1 = arith.constant 0 : i32
    %c0_i32_2 = arith.constant 0 : i32
    return %c0_i32, %c0_i32_0, %c0_i32_1 : i32, i32, i32
  }
  func.func @transform_9(%arg0: i32, %arg1: i32) -> (i32, i32, i32) {
    %c0_i32 = arith.constant 0 : i32
    %c0_i32_0 = arith.constant 0 : i32
    %c0_i32_1 = arith.constant 0 : i32
    %c0_i32_2 = arith.constant 0 : i32
    return %c0_i32, %c0_i32_0, %c0_i32_1 : i32, i32, i32
  }
  func.func @transform_10(%arg0: i32, %arg1: i32) -> (i32, i32, i32) {
    %c0_i32 = arith.constant 0 : i32
    %c0_i32_0 = arith.constant 0 : i32
    %c0_i32_1 = arith.constant 0 : i32
    %c0_i32_2 = arith.constant 0 : i32
    return %c0_i32, %c0_i32_0, %c0_i32_1 : i32, i32, i32
  }
  func.func @transform_11(%arg0: i32, %arg1: i32) -> (i32, i32, i32, i32) {
    %c0_i32 = arith.constant 0 : i32
    %c0_i32_0 = arith.constant 0 : i32
    %c0_i32_1 = arith.constant 0 : i32
    %c0_i32_2 = arith.constant 0 : i32
    return %arg0, %c0_i32, %c0_i32_0, %c0_i32_1 : i32, i32, i32, i32
  }
}

</mosaic_0001>

<llo_original>
// kernel: _lambda_.1
$region0: #{_lambda_.1}
  #allocation0 [shape = 'u32[]', space=smem, size = 0x4, offset = 0x4, fixed_abs, tag = 'smem constant byte address 0x4 - core index']
  #allocation1 [shape = 'u32[144,128]{1,0:T(1,128)}', space=vmem, size = 0x12000, scoped, tag = 'internal scratch']
  #allocation2 [shape = 'f32[3,256]{1,0:T(4,128)}', space=vmem, size = 0x1000, scoped, tag = 'scratch operand']
  #allocation3 [shape = 'f32[8,256]{1,0:T(8,128)}', space=vmem, size = 0x2000, scoped, tag = 'scratch operand']
  #allocation4 [shape = 'f32[8,256]{1,0:T(8,128)}', space=vmem, size = 0x2000, scoped, tag = 'scratch operand']
  %s0 = inlined_call_operand.vmem [shape: f32[2,3,256], index: 0, kind: input, shape index: {}]
  %s1 = inlined_call_operand.vmem [shape: f32[2,8,256], index: 1, kind: input, shape index: {}]
  %s2 = inlined_call_operand.vmem [shape: f32[2,8,256], index: 2, kind: input, shape index: {}]
  %s3 = inlined_call_operand.vmem [shape: f32[9,32,3], index: 3, kind: input, shape index: {}]
  %s4 = inlined_call_operand.vmem [shape: f32[9,32,8], index: 4, kind: input, shape index: {}]
  %s5 = inlined_call_operand.vmem [shape: f32[32,1], index: 5, kind: input, shape index: {}]
  %s6 = inlined_call_operand.vmem [shape: f32[9,3,8], index: 6, kind: input, shape index: {}]
  %s7 = inlined_call_operand.vmem [shape: f32[3,1], index: 7, kind: input, shape index: {}]
  %s8 = inlined_call_operand.vmem [shape: f32[9,1,256], index: 8, kind: input, shape index: {}, may-alias: {8,9,10}]
  %s9 = inlined_call_operand.vmem [shape: f32[9,1,256], index: 9, kind: input, shape index: {}, may-alias: {8,9,10}]
  %s10 = inlined_call_operand.vmem [shape: f32[9,1,256], index: 10, kind: input, shape index: {}, may-alias: {8,9,10}]
  %s11 = inlined_call_operand.vmem [shape: f32[2,7,3,256], index: 11, kind: output, shape index: {}]
  %s12 = sld [smem:[#allocation0]]
  $region81: #{_lambda_.1} parent=0
    _
  %s14 = ssub.s32 1, %s12
  %s15 = scalar_select 0, %s14, %s12
  loop: start=0, step=1, limit=16
  $region2: #{_lambda_.1} parent=0 // loop_pre_header
    _
  $region3: #{_lambda_.1} parent=0 // loop_header
    %s17 = sphi 0, %s21
    %p18 = scmp.ge.s32.totalorder %s17, 16
    %s24 = sphi 0, %s36
    %s25 = sphi 0, %s32
    %s26 = sphi 0, %s24
    %s27 = sphi 0, %s25
    %s28 = sphi 0, %s26
    %s29 = sphi 0, %s27
    %s39 = sphi 0, %s41
    %s42 = sphi 0, %s39
    %s43 = sphi 0, %s42
    %s59 = sphi 0, %s43
    %s65 = sphi 0, %s67
    %s68 = sphi 0, %s65
    %s69 = sphi 0, %s68
    %s85 = sphi 0, %s69
    %s91 = sphi 0, %s93
    %s94 = sphi 0, %s91
    %s95 = sphi 0, %s94
    %s111 = sphi 0, %s95
    %s115 = sphi 0, %s115
    %s117 = sphi 0, %s115
    %s118 = sphi 0, %s117
    %s132 = sphi 0, %s118
    %s136 = sphi 0, %s136
    %s138 = sphi 0, %s136
    %s139 = sphi 0, %s138
    %s153 = sphi 0, %s139
    %s157 = sphi 0, %s157
    %s159 = sphi 0, %s157
    %s160 = sphi 0, %s159
    %s174 = sphi 0, %s160
    %s178 = sphi 0, %s178
    %s180 = sphi 0, %s178
    %s181 = sphi 0, %s180
    %s195 = sphi 0, %s181
    %s199 = sphi 0, %s199
    %s201 = sphi 0, %s199
    %s202 = sphi 0, %s201
    %s216 = sphi 0, %s202
    %s220 = sphi 0, %s220
    %s222 = sphi 0, %s220
    %s223 = sphi 0, %s222
    %s237 = sphi 0, %s223
    %s241 = sphi 0, %s241
    %s243 = sphi 0, %s241
    %s244 = sphi 0, %s243
    %s258 = sphi 0, %s244
    %s262 = sphi 0, %s262
    %s264 = sphi 0, %s262
    %s265 = sphi 0, %s264
    %s279 = sphi 0, %s265
    %s285 = sphi 0, %s287
    %s288 = sphi 0, %s285
    %s289 = sphi 0, %s288
    %s305 = sphi 0, %s289
  $region4: #{_lambda_.1} parent=0 // loop_header_branch
    %20 = sbr.rel (%p18) target = $region8
  $region5: #{_lambda_.1} parent=0 // loop_body
    %s22 = ssub.s32 %s17, 1
    %s23 = ssub.s32 %s17, 2
    %s30 = sadd.s32 1, %s25
    %p31 = scmp.ge.s32.totalorder %s30, 7
    %s32 = scalar_select %p31, 0, %s30
    %s33 = sadd.s32 1, %s24
    %s34 = scalar_select %p31, %s33, %s24
    %p35 = scmp.ge.s32.totalorder %s34, 2
    %s36 = scalar_select %p35, 0, %s34
    %s37 = ssub.s32 %s24, %s36
    %p38 = scmp.eq.s32.totalorder %s37, 0
    %s40 = sadd.s32 %s39, 1
    %s41 = scalar_select %p38, %s39, %s40
    %p44 = pneg %p38
    %p45 = scmp.eq.s32.totalorder %s17, 13
    %p46 = por %p44, %p45
    %p47 = scmp.ne.s32.totalorder %s39, %s42
    %p48 = scmp.eq.s32.totalorder %s17, 0
    %p49 = por %p47, %p48
    %p50 = scmp.ne.s32.totalorder %s39, %s42
    %p51 = scmp.eq.s32.totalorder %s22, 13
    %p52 = por %p50, %p51
    %p53 = scmp.ne.s32.totalorder %s42, %s43
    %p54 = scmp.eq.s32.totalorder %s22, 0
    %p55 = por %p53, %p54
    %p56 = scmp.ne.s32.totalorder %s42, %s43
    %p57 = scmp.eq.s32.totalorder %s23, 13
    %p58 = por %p56, %p57
    %p60 = scmp.ne.s32.totalorder %s43, %s59
    %p61 = scmp.eq.s32.totalorder %s23, 0
    %p62 = por %p60, %p61
    %s63 = ssub.s32 %s24, %s36
    %p64 = scmp.eq.s32.totalorder %s63, 0
    %s66 = sadd.s32 %s65, 1
    %s67 = scalar_select %p64, %s65, %s66
    %p70 = pneg %p64
    %p71 = scmp.eq.s32.totalorder %s17, 13
    %p72 = por %p70, %p71
    %p73 = scmp.ne.s32.totalorder %s65, %s68
    %p74 = scmp.eq.s32.totalorder %s17, 0
    %p75 = por %p73, %p74
    %p76 = scmp.ne.s32.totalorder %s65, %s68
    %p77 = scmp.eq.s32.totalorder %s22, 13
    %p78 = por %p76, %p77
    %p79 = scmp.ne.s32.totalorder %s68, %s69
    %p80 = scmp.eq.s32.totalorder %s22, 0
    %p81 = por %p79, %p80
    %p82 = scmp.ne.s32.totalorder %s68, %s69
    %p83 = scmp.eq.s32.totalorder %s23, 13
    %p84 = por %p82, %p83
    %p86 = scmp.ne.s32.totalorder %s69, %s85
    %p87 = scmp.eq.s32.totalorder %s23, 0
    %p88 = por %p86, %p87
    %s89 = ssub.s32 %s24, %s36
    %p90 = scmp.eq.s32.totalorder %s89, 0
    %s92 = sadd.s32 %s91, 1
    %s93 = scalar_select %p90, %s91, %s92
    %p96 = pneg %p90
    %p97 = scmp.eq.s32.totalorder %s17, 13
    %p98 = por %p96, %p97
    %p99 = scmp.ne.s32.totalorder %s91, %s94
    %p100 = scmp.eq.s32.totalorder %s17, 0
    %p101 = por %p99, %p100
    %p102 = scmp.ne.s32.totalorder %s91, %s94
    %p103 = scmp.eq.s32.totalorder %s22, 13
    %p104 = por %p102, %p103
    %p105 = scmp.ne.s32.totalorder %s94, %s95
    %p106 = scmp.eq.s32.totalorder %s22, 0
    %p107 = por %p105, %p106
    %p108 = scmp.ne.s32.totalorder %s94, %s95
    %p109 = scmp.eq.s32.totalorder %s23, 13
    %p110 = por %p108, %p109
    %p112 = scmp.ne.s32.totalorder %s95, %s111
    %p113 = scmp.eq.s32.totalorder %s23, 0
    %p114 = por %p112, %p113
    %s116 = sadd.s32 %s115, 1
    %p119 = scmp.eq.s32.totalorder %s17, 13
    %p120 = scmp.ne.s32.totalorder %s115, %s117
    %p121 = scmp.eq.s32.totalorder %s17, 0
    %p122 = por %p120, %p121
    %p123 = scmp.ne.s32.totalorder %s115, %s117
    %p124 = scmp.eq.s32.totalorder %s22, 13
    %p125 = por %p123, %p124
    %p126 = scmp.ne.s32.totalorder %s117, %s118
    %p127 = scmp.eq.s32.totalorder %s22, 0
    %p128 = por %p126, %p127
    %p129 = scmp.ne.s32.totalorder %s117, %s118
    %p130 = scmp.eq.s32.totalorder %s23, 13
    %p131 = por %p129, %p130
    %p133 = scmp.ne.s32.totalorder %s118, %s132
    %p134 = scmp.eq.s32.totalorder %s23, 0
    %p135 = por %p133, %p134
    %s137 = sadd.s32 %s136, 1
    %p140 = scmp.eq.s32.totalorder %s17, 13
    %p141 = scmp.ne.s32.totalorder %s136, %s138
    %p142 = scmp.eq.s32.totalorder %s17, 0
    %p143 = por %p141, %p142
    %p144 = scmp.ne.s32.totalorder %s136, %s138
    %p145 = scmp.eq.s32.totalorder %s22, 13
    %p146 = por %p144, %p145
    %p147 = scmp.ne.s32.totalorder %s138, %s139
    %p148 = scmp.eq.s32.totalorder %s22, 0
    %p149 = por %p147, %p148
    %p150 = scmp.ne.s32.totalorder %s138, %s139
    %p151 = scmp.eq.s32.totalorder %s23, 13
    %p152 = por %p150, %p151
    %p154 = scmp.ne.s32.totalorder %s139, %s153
    %p155 = scmp.eq.s32.totalorder %s23, 0
    %p156 = por %p154, %p155
    %s158 = sadd.s32 %s157, 1
    %p161 = scmp.eq.s32.totalorder %s17, 13
    %p162 = scmp.ne.s32.totalorder %s157, %s159
    %p163 = scmp.eq.s32.totalorder %s17, 0
    %p164 = por %p162, %p163
    %p165 = scmp.ne.s32.totalorder %s157, %s159
    %p166 = scmp.eq.s32.totalorder %s22, 13
    %p167 = por %p165, %p166
    %p168 = scmp.ne.s32.totalorder %s159, %s160
    %p169 = scmp.eq.s32.totalorder %s22, 0
    %p170 = por %p168, %p169
    %p171 = scmp.ne.s32.totalorder %s159, %s160
    %p172 = scmp.eq.s32.totalorder %s23, 13
    %p173 = por %p171, %p172
    %p175 = scmp.ne.s32.totalorder %s160, %s174
    %p176 = scmp.eq.s32.totalorder %s23, 0
    %p177 = por %p175, %p176
    %s179 = sadd.s32 %s178, 1
    %p182 = scmp.eq.s32.totalorder %s17, 13
    %p183 = scmp.ne.s32.totalorder %s178, %s180
    %p184 = scmp.eq.s32.totalorder %s17, 0
    %p185 = por %p183, %p184
    %p186 = scmp.ne.s32.totalorder %s178, %s180
    %p187 = scmp.eq.s32.totalorder %s22, 13
    %p188 = por %p186, %p187
    %p189 = scmp.ne.s32.totalorder %s180, %s181
    %p190 = scmp.eq.s32.totalorder %s22, 0
    %p191 = por %p189, %p190
    %p192 = scmp.ne.s32.totalorder %s180, %s181
    %p193 = scmp.eq.s32.totalorder %s23, 13
    %p194 = por %p192, %p193
    %p196 = scmp.ne.s32.totalorder %s181, %s195
    %p197 = scmp.eq.s32.totalorder %s23, 0
    %p198 = por %p196, %p197
    %s200 = sadd.s32 %s199, 1
    %p203 = scmp.eq.s32.totalorder %s17, 13
    %p204 = scmp.ne.s32.totalorder %s199, %s201
    %p205 = scmp.eq.s32.totalorder %s17, 0
    %p206 = por %p204, %p205
    %p207 = scmp.ne.s32.totalorder %s199, %s201
    %p208 = scmp.eq.s32.totalorder %s22, 13
    %p209 = por %p207, %p208
    %p210 = scmp.ne.s32.totalorder %s201, %s202
    %p211 = scmp.eq.s32.totalorder %s22, 0
    %p212 = por %p210, %p211
    %p213 = scmp.ne.s32.totalorder %s201, %s202
    %p214 = scmp.eq.s32.totalorder %s23, 13
    %p215 = por %p213, %p214
    %p217 = scmp.ne.s32.totalorder %s202, %s216
    %p218 = scmp.eq.s32.totalorder %s23, 0
    %p219 = por %p217, %p218
    %s221 = sadd.s32 %s220, 1
    %p224 = scmp.eq.s32.totalorder %s17, 13
    %p225 = scmp.ne.s32.totalorder %s220, %s222
    %p226 = scmp.eq.s32.totalorder %s17, 0
    %p227 = por %p225, %p226
    %p228 = scmp.ne.s32.totalorder %s220, %s222
    %p229 = scmp.eq.s32.totalorder %s22, 13
    %p230 = por %p228, %p229
    %p231 = scmp.ne.s32.totalorder %s222, %s223
    %p232 = scmp.eq.s32.totalorder %s22, 0
    %p233 = por %p231, %p232
    %p234 = scmp.ne.s32.totalorder %s222, %s223
    %p235 = scmp.eq.s32.totalorder %s23, 13
    %p236 = por %p234, %p235
    %p238 = scmp.ne.s32.totalorder %s223, %s237
    %p239 = scmp.eq.s32.totalorder %s23, 0
    %p240 = por %p238, %p239
    %s242 = sadd.s32 %s241, 1
    %p245 = scmp.eq.s32.totalorder %s17, 13
    %p246 = scmp.ne.s32.totalorder %s241, %s243
    %p247 = scmp.eq.s32.totalorder %s17, 0
    %p248 = por %p246, %p247
    %p249 = scmp.ne.s32.totalorder %s241, %s243
    %p250 = scmp.eq.s32.totalorder %s22, 13
    %p251 = por %p249, %p250
    %p252 = scmp.ne.s32.totalorder %s243, %s244
    %p253 = scmp.eq.s32.totalorder %s22, 0
    %p254 = por %p252, %p253
    %p255 = scmp.ne.s32.totalorder %s243, %s244
    %p256 = scmp.eq.s32.totalorder %s23, 13
    %p257 = por %p255, %p256
    %p259 = scmp.ne.s32.totalorder %s244, %s258
    %p260 = scmp.eq.s32.totalorder %s23, 0
    %p261 = por %p259, %p260
    %s263 = sadd.s32 %s262, 1
    %p266 = scmp.eq.s32.totalorder %s17, 13
    %p267 = scmp.ne.s32.totalorder %s262, %s264
    %p268 = scmp.eq.s32.totalorder %s17, 0
    %p269 = por %p267, %p268
    %p270 = scmp.ne.s32.totalorder %s262, %s264
    %p271 = scmp.eq.s32.totalorder %s22, 13
    %p272 = por %p270, %p271
    %p273 = scmp.ne.s32.totalorder %s264, %s265
    %p274 = scmp.eq.s32.totalorder %s22, 0
    %p275 = por %p273, %p274
    %p276 = scmp.ne.s32.totalorder %s264, %s265
    %p277 = scmp.eq.s32.totalorder %s23, 13
    %p278 = por %p276, %p277
    %p280 = scmp.ne.s32.totalorder %s265, %s279
    %p281 = scmp.eq.s32.totalorder %s23, 0
    %p282 = por %p280, %p281
    %s283 = ssub.s32 %s24, %s36
    %p284 = scmp.eq.s32.totalorder %s283, 0
    %s286 = sadd.s32 %s285, 1
    %s287 = scalar_select %p284, %s285, %s286
    %p290 = pneg %p284
    %p291 = scmp.eq.s32.totalorder %s17, 13
    %p292 = por %p290, %p291
    %p293 = scmp.ne.s32.totalorder %s285, %s288
    %p294 = scmp.eq.s32.totalorder %s17, 0
    %p295 = por %p293, %p294
    %p296 = scmp.ne.s32.totalorder %s285, %s288
    %p297 = scmp.eq.s32.totalorder %s22, 13
    %p298 = por %p296, %p297
    %p299 = scmp.ne.s32.totalorder %s288, %s289
    %p300 = scmp.eq.s32.totalorder %s22, 0
    %p301 = por %p299, %p300
    %p302 = scmp.ne.s32.totalorder %s288, %s289
    %p303 = scmp.eq.s32.totalorder %s23, 13
    %p304 = por %p302, %p303
    %p306 = scmp.ne.s32.totalorder %s289, %s305
    %p307 = scmp.eq.s32.totalorder %s23, 0
    %p308 = por %p306, %p307
    %p309 = scmp.le.s32.totalorder 1, %s17
    %p310 = scmp.lt.s32.totalorder %s17, 15
    %p311 = pnand %p309, %p310
    %p312 = pneg %p311
    // Predicated region
    $region9: #{_lambda_.1} parent=5 // pred_check
      _
    $region10: #{_lambda_.1} parent=5 // pred_check_branch
      %314 = sbr.rel (%p311) target = $region12
    $region11: #{_lambda_.1} parent=5 // pred_region
      %s315 = ssub.s32 %s17, 1
      // Predicated region
      $region13: #{_lambda_.1} parent=11 // pred_check
        %p316 = pneg %p128
      $region14: #{_lambda_.1} parent=11 // pred_check_branch
        %318 = sbr.rel (%p316) target = $region16
      $region15: #{_lambda_.1} parent=11 // pred_region
        _
      $region16: #{_lambda_.1} parent=11 // pred_fallthru
        _
      // Predicated region
      $region17: #{_lambda_.1} parent=11 // pred_check
        %p319 = pneg %p149
      $region18: #{_lambda_.1} parent=11 // pred_check_branch
        %321 = sbr.rel (%p319) target = $region20
      $region19: #{_lambda_.1} parent=11 // pred_region
        _
      $region20: #{_lambda_.1} parent=11 // pred_fallthru
        _
      // Predicated region
      $region21: #{_lambda_.1} parent=11 // pred_check
        %p322 = pneg %p170
      $region22: #{_lambda_.1} parent=11 // pred_check_branch
        %324 = sbr.rel (%p322) target = $region24
      $region23: #{_lambda_.1} parent=11 // pred_region
        _
      $region24: #{_lambda_.1} parent=11 // pred_fallthru
        _
      // Predicated region
      $region25: #{_lambda_.1} parent=11 // pred_check
        %p325 = pneg %p191
      $region26: #{_lambda_.1} parent=11 // pred_check_branch
        %327 = sbr.rel (%p325) target = $region28
      $region27: #{_lambda_.1} parent=11 // pred_region
        _
      $region28: #{_lambda_.1} parent=11 // pred_fallthru
        _
      // Predicated region
      $region29: #{_lambda_.1} parent=11 // pred_check
        %p328 = pneg %p212
      $region30: #{_lambda_.1} parent=11 // pred_check_branch
        %330 = sbr.rel (%p328) target = $region32
      $region31: #{_lambda_.1} parent=11 // pred_region
        _
      $region32: #{_lambda_.1} parent=11 // pred_fallthru
        _
      // Predicated region
      $region33: #{_lambda_.1} parent=11 // pred_check
        %p331 = pneg %p233
      $region34: #{_lambda_.1} parent=11 // pred_check_branch
        %333 = sbr.rel (%p331) target = $region36
      $region35: #{_lambda_.1} parent=11 // pred_region
        _
      $region36: #{_lambda_.1} parent=11 // pred_fallthru
        _
      // Predicated region
      $region37: #{_lambda_.1} parent=11 // pred_check
        %p334 = pneg %p254
      $region38: #{_lambda_.1} parent=11 // pred_check_branch
        %336 = sbr.rel (%p334) target = $region40
      $region39: #{_lambda_.1} parent=11 // pred_region
        _
      $region40: #{_lambda_.1} parent=11 // pred_fallthru
        _
      // Predicated region
      $region41: #{_lambda_.1} parent=11 // pred_check
        %p337 = pneg %p275
      $region42: #{_lambda_.1} parent=11 // pred_check_branch
        %339 = sbr.rel (%p337) target = $region44
      $region43: #{_lambda_.1} parent=11 // pred_region
        _
      $region44: #{_lambda_.1} parent=11 // pred_fallthru
        _
    $region12: #{_lambda_.1} parent=5 // pred_fallthru
      _
    %p340 = scmp.lt.s32.totalorder %s17, 14
    // Predicated region
    $region45: #{_lambda_.1} parent=5 // pred_check
      %p341 = pneg %p340
    $region46: #{_lambda_.1} parent=5 // pred_check_branch
      %343 = sbr.rel (%p341) target = $region48
    $region47: #{_lambda_.1} parent=5 // pred_region
      // Predicated region
      $region49: #{_lambda_.1} parent=47 // pred_check
        %p344 = pneg %p49
      $region50: #{_lambda_.1} parent=47 // pred_check_branch
        %346 = sbr.rel (%p344) target = $region52
      $region51: #{_lambda_.1} parent=47 // pred_region
        %p347 = scmp.lt.s32.totalorder %s24, 1
        %s348 = scalar_select %p347, %s24, 1
        %s349 = smul.addr %s348, 2
        %s350 = smul.addr %s349, 4
        %s351 = scalar_lea.vmem %s0, %s350
      $region52: #{_lambda_.1} parent=47 // pred_fallthru
        _
      // Predicated region
      $region53: #{_lambda_.1} parent=47 // pred_check
        %p352 = pneg %p75
      $region54: #{_lambda_.1} parent=47 // pred_check_branch
        %354 = sbr.rel (%p352) target = $region56
      $region55: #{_lambda_.1} parent=47 // pred_region
        %p355 = scmp.lt.s32.totalorder %s24, 1
        %s356 = scalar_select %p355, %s24, 1
        %s357 = smul.addr %s356, 2
        %s358 = smul.addr %s357, 8
        %s359 = scalar_lea.vmem %s1, %s358
      $region56: #{_lambda_.1} parent=47 // pred_fallthru
        _
      // Predicated region
      $region57: #{_lambda_.1} parent=47 // pred_check
        %p360 = pneg %p101
      $region58: #{_lambda_.1} parent=47 // pred_check_branch
        %362 = sbr.rel (%p360) target = $region60
      $region59: #{_lambda_.1} parent=47 // pred_region
        %p363 = scmp.lt.s32.totalorder %s24, 1
        %s364 = scalar_select %p363, %s24, 1
        %s365 = smul.addr %s364, 2
        %s366 = smul.addr %s365, 8
        %s367 = scalar_lea.vmem %s2, %s366
      $region60: #{_lambda_.1} parent=47 // pred_fallthru
        _
    $region48: #{_lambda_.1} parent=5 // pred_fallthru
      _
    %p368 = scmp.le.s32.totalorder 1, %s17
    %p369 = scmp.lt.s32.totalorder %s17, 15
    %p370 = pnand %p368, %p369
    %p371 = pneg %p370
    // Predicated region
    $region61: #{_lambda_.1} parent=5 // pred_check
      _
    $region62: #{_lambda_.1} parent=5 // pred_check_branch
      %373 = sbr.rel (%p370) target = $region64
    $region63: #{_lambda_.1} parent=5 // pred_region
      %s374 = ssub.s32 %s17, 1
      %p375 = scmp.lt.s32.totalorder %s26, 1
      %s376 = scalar_select %p375, %s26, 1
      %s377 = smul.addr %s376, 2
      %s378 = smul.addr %s377, 4
      %s379 = scalar_lea.vmem %s0, %s378
      %p380 = pneg %p55
      %p381 = pneg %p52
      %p382 = scmp.lt.s32.totalorder %s26, 1
      %s383 = scalar_select %p382, %s26, 1
      %s384 = smul.addr %s383, 2
      %s385 = smul.addr %s384, 8
      %s386 = scalar_lea.vmem %s1, %s385
      %p387 = pneg %p81
      %p388 = pneg %p78
      %p389 = scmp.lt.s32.totalorder %s26, 1
      %s390 = scalar_select %p389, %s26, 1
      %s391 = smul.addr %s390, 2
      %s392 = smul.addr %s391, 8
      %s393 = scalar_lea.vmem %s2, %s392
      %p394 = pneg %p107
      %p395 = pneg %p104
      %p396 = pneg %p128
      %p397 = pneg %p125
      %p398 = pneg %p149
      %p399 = pneg %p146
      %p400 = pneg %p170
      %p401 = pneg %p167
      %p402 = pneg %p191
      %p403 = pneg %p188
      %p404 = pneg %p212
      %p405 = pneg %p209
      %p406 = pneg %p233
      %p407 = pneg %p230
      %p408 = pneg %p254
      %p409 = pneg %p251
      %p410 = pneg %p275
      %p411 = pneg %p272
      %p412 = pneg %p301
      %p413 = pneg %p298
      %p414 = scmp.lt.s32.totalorder %s26, 1
      %s415 = scalar_select %p414, %s26, 1
      %s416 = smul.addr %s415, 14
      %s417 = smul.addr %s416, 4
      %s418 = scalar_lea.vmem %s11, %s417
      %p419 = scmp.lt.s32.totalorder %s26, 1
      %s420 = scalar_select %p419, %s26, 1
      %s421 = smul.addr %s420, 2
      %s422 = smul.addr %s421, 4
      %s423 = scalar_lea.vmem %s0, %s422
      %p424 = scmp.lt.s32.totalorder %s26, 1
      %s425 = scalar_select %p424, %s26, 1
      %s426 = smul.addr %s425, 2
      %s427 = smul.addr %s426, 8
      %s428 = scalar_lea.vmem %s1, %s427
      %p429 = scmp.lt.s32.totalorder %s26, 1
      %s430 = scalar_select %p429, %s26, 1
      %s431 = smul.addr %s430, 2
      %s432 = smul.addr %s431, 8
      %s433 = scalar_lea.vmem %s2, %s432
      %p434 = scmp.lt.s32.totalorder %s26, 1
      %s435 = scalar_select %p434, %s26, 1
      %s436 = smul.addr %s435, 14
      %s437 = smul.addr %s436, 4
      %s438 = scalar_lea.vmem %s11, %s437
      %p439 = scmp.eq.s32.totalorder %s27, 0
      // Predicated region
      $region65: #{_lambda_.1} parent=63 // pred_check
        %p440 = pneg %p439
      $region66: #{_lambda_.1} parent=63 // pred_check_branch
        %442 = sbr.rel (%p440) target = $region68
      $region67: #{_lambda_.1} parent=63 // pred_region
        %v443 = vld [vmem:[%s423] sm:$0x77]
        %444 = vst [vmem:[#allocation2] sm:$0x77] %v443
        %v445 = vld [vmem:[%s428] sm:$0xff]
        %v446 = vld [vmem:[%s428 + $0x8] sm:$0xff]
        %447 = vst [vmem:[#allocation3] sm:$0xff] %v445
        %448 = vst [vmem:[#allocation3 + $0x8] sm:$0xff] %v446
        %v449 = vld [vmem:[%s433] sm:$0xff]
        %v450 = vld [vmem:[%s433 + $0x8] sm:$0xff]
        %451 = vst [vmem:[#allocation4] sm:$0xff] %v449
        %452 = vst [vmem:[#allocation4 + $0x8] sm:$0xff] %v450
      $region68: #{_lambda_.1} parent=63 // pred_fallthru
        _
      %v453 = vld [vmem:[#allocation2] sm:$0x77]
      %v455 = vcombine.high %v453, %v453
      %457 = vrot.lane.b32.xlu0 %v453, 17
      %v458 = vpop.permute.xlu0 %457
      %459 = vrot.lane.b32.xlu0 %v455, 17
      %v460 = vpop.permute.xlu0 %459
      %v461 = vlaneseq
      %v462 = vand.u32 %v461, 127
      %vm463 = vcmp.lt.s32.totalorder %v462, 17
      %v464 = vsel %vm463, %v458, %v460
      %v465 = vsel %vm463, %v460, %v458
      %v466 = vld [vmem:[%s8] sm:$0x3]
      %v468 = vlaneseq
      %v469 = vshrl.u32 %v468, 7
      %v470 = vsub.s32 0, %v469
      %v471 = vrot.slane %v466, %v470
      %v472 = vlaneseq
      %v473 = vshrl.u32 %v472, 7
      %v474 = vsub.s32 1, %v473
      %v475 = vrot.slane %v466, %v474
      %v478 = vmul.f32 %v465, %v471
      %v479 = vmul.f32 %v464, %v475
      %v480 = vld [vmem:[%s3] sm:$0xff]
      %v481 = vld [vmem:[%s3 + $0x8] sm:$0xff]
      %v482 = vld [vmem:[%s3 + $0x10] sm:$0xff]
      %v483 = vld [vmem:[%s3 + $0x18] sm:$0xff]
      %484 = vrot.lane.b32.xlu0 %v453, 16
      %v485 = vpop.permute.xlu0 %484
      %486 = vrot.lane.b32.xlu0 %v455, 16
      %v487 = vpop.permute.xlu0 %486
      %vm488 = vcmp.lt.s32.totalorder %v462, 16
      %v489 = vsel %vm488, %v485, %v487
      %v490 = vsel %vm488, %v487, %v485
      %s491 = scalar_lea.vmem %s8, 2
      %v492 = vld [vmem:[%s491] sm:$0x3]
      %v494 = vlaneseq
      %v495 = vshrl.u32 %v494, 7
      %v496 = vsub.s32 0, %v495
      %v497 = vrot.slane %v492, %v496
      %v498 = vlaneseq
      %v499 = vshrl.u32 %v498, 7
      %v500 = vsub.s32 1, %v499
      %v501 = vrot.slane %v492, %v500
      %v504 = vmul.f32 %v490, %v497
      %v505 = vmul.f32 %v489, %v501
      %s506 = scalar_lea.vmem %s3, 32
      %v507 = vld [vmem:[%s506] sm:$0xff]
      %v508 = vld [vmem:[%s506 + $0x8] sm:$0xff]
      %v509 = vld [vmem:[%s506 + $0x10] sm:$0xff]
      %v510 = vld [vmem:[%s506 + $0x18] sm:$0xff]
      %vm511 = vcmask 23552
      %v513 = vsel %vm511, %v507, 0
      %v516 = vsel %vm511, %v508, 0
      %v519 = vsel %vm511, %v509, 0
      %v522 = vsel %vm511, %v510, 0
      %vm524 = vcmask 1042432
      %v526 = vsel %vm524, %v504, 0
      %v529 = vsel %vm524, %v505, 0
      %531 = vmatprep.subr.mxu0 0.0
      %532 = vmatpush1.msra.mxu0 0.0
      %533 = vmatprep.subr.mxu0 0.0
      %534 = vmatpush1.msra.mxu0 0.0
      %535 = vmatprep.subr.mxu0 0.0
      %536 = vmatpush1.msra.mxu0 0.0
      %537 = vmatprep.subr.mxu0 0.0
      %538 = vmatpush1.msra.mxu0 0.0
      %539 = vmatprep.subr.mxu0 0.0
      %540 = vmatpush1.msra.mxu0 0.0
      %541 = vmatprep.subr.mxu0 0.0
      %542 = vmatpush1.msra.mxu0 0.0
      %543 = vmatprep.subr.mxu0 0.0
      %544 = vmatpush1.msra.mxu0 0.0
      %545 = vmatprep.subr.mxu0 0.0
      %546 = vmatpush1.msra.mxu0 0.0
      %547 = vmatprep.subr.mxu0 0.0
      %548 = vmatpush1.msra.mxu0 0.0
      %549 = vmatprep.subr.mxu0 0.0
      %550 = vmatpush1.msra.mxu0 0.0
      %551 = vmatprep.subr.mxu0 0.0
      %552 = vmatpush1.msra.mxu0 0.0
      %553 = vmatprep.subr.mxu0 0.0
      %554 = vmatpush1.msra.mxu0 0.0
      %555 = vmatprep.subr.mxu0 0.0
      %556 = vmatpush1.msra.mxu0 0.0
      %557 = vmatprep.subr.mxu0 0.0
      %558 = vmatpush1.msra.mxu0 0.0
      %559 = vmatprep.subr.mxu0 0.0
      %560 = vmatpush1.msra.mxu0 0.0
      %561 = vmatprep.subr.mxu0 %v529
      %562 = vmatpush1.msra.mxu0 %v526
      %563 = vmatprep.subr.mxu0 0.0
      %564 = vmatpush2.msra.mxu0 0.0
      %565 = vmatprep.subr.mxu0 0.0
      %566 = vmatpush2.msra.mxu0 0.0
      %567 = vmatprep.subr.mxu0 0.0
      %568 = vmatpush2.msra.mxu0 0.0
      %569 = vmatprep.subr.mxu0 0.0
      %570 = vmatpush2.msra.mxu0 0.0
      %571 = vmatprep.subr.mxu0 0.0
      %572 = vmatpush2.msra.mxu0 0.0
      %573 = vmatprep.subr.mxu0 0.0
      %574 = vmatpush2.msra.mxu0 0.0
      %575 = vmatprep.subr.mxu0 0.0
      %576 = vmatpush2.msra.mxu0 0.0
      %577 = vmatprep.subr.mxu0 0.0
      %578 = vmatpush2.msra.mxu0 0.0
      %579 = vmatprep.subr.mxu0 0.0
      %580 = vmatpush2.msra.mxu0 0.0
      %581 = vmatprep.subr.mxu0 0.0
      %582 = vmatpush2.msra.mxu0 0.0
      %583 = vmatprep.subr.mxu0 0.0
      %584 = vmatpush2.msra.mxu0 0.0
      %585 = vmatprep.subr.mxu0 0.0
      %586 = vmatpush2.msra.mxu0 0.0
      %587 = vmatprep.subr.mxu0 0.0
      %588 = vmatpush2.msra.mxu0 0.0
      %589 = vmatprep.subr.mxu0 0.0
      %590 = vmatpush2.msra.mxu0 0.0
      %591 = vmatprep.subr.mxu0 0.0
      %592 = vmatpush2.msra.mxu0 0.0
      %593 = vmatprep.subr.mxu0 0.0
      %594 = vmatpush2.msra.mxu0 0.0
      %595 = vmatprep.mubr.f32.mxu0 0.0
      %596 = vmatmul.mubr.f32.gmra.mxu0 %v513
      %v597 = vpop.f32.mrf.mxu0
      %v598 = vadd.f32 0.0, %v597
      %v599 = vpop.f32.mrf.mxu0
      %v600 = vadd.f32 0.0, %v599
      %601 = vmatprep.mubr.f32.mxu0 0.0
      %602 = vmatmul.mubr.f32.gmra.mxu0 %v516
      %v603 = vpop.f32.mrf.mxu0
      %v604 = vadd.f32 0.0, %v603
      %v605 = vpop.f32.mrf.mxu0
      %v606 = vadd.f32 0.0, %v605
      %607 = vmatprep.mubr.f32.mxu0 0.0
      %608 = vmatmul.mubr.f32.gmra.mxu0 %v519
      %v609 = vpop.f32.mrf.mxu0
      %v610 = vadd.f32 0.0, %v609
      %v611 = vpop.f32.mrf.mxu0
      %v612 = vadd.f32 0.0, %v611
      %613 = vmatprep.mubr.f32.mxu0 0.0
      %614 = vmatmul.mubr.f32.gmra.mxu0 %v522
      %v615 = vpop.f32.mrf.mxu0
      %v616 = vadd.f32 0.0, %v615
      %v617 = vpop.f32.mrf.mxu0
      %v618 = vadd.f32 0.0, %v617
      %619 = vdwg.mxu0
      %v621 = vsel %vm511, %v480, 0
      %v624 = vsel %vm511, %v481, 0
      %v627 = vsel %vm511, %v482, 0
      %v630 = vsel %vm511, %v483, 0
      %v633 = vsel %vm524, %v478, 0
      %v636 = vsel %vm524, %v479, 0
      %638 = vmatprep.subr.mxu0 0.0
      %639 = vmatpush1.msra.mxu0 0.0
      %640 = vmatprep.subr.mxu0 0.0
      %641 = vmatpush1.msra.mxu0 0.0
      %642 = vmatprep.subr.mxu0 0.0
      %643 = vmatpush1.msra.mxu0 0.0
      %644 = vmatprep.subr.mxu0 0.0
      %645 = vmatpush1.msra.mxu0 0.0
      %646 = vmatprep.subr.mxu0 0.0
      %647 = vmatpush1.msra.mxu0 0.0
      %648 = vmatprep.subr.mxu0 0.0
      %649 = vmatpush1.msra.mxu0 0.0
      %650 = vmatprep.subr.mxu0 0.0
      %651 = vmatpush1.msra.mxu0 0.0
      %652 = vmatprep.subr.mxu0 0.0
      %653 = vmatpush1.msra.mxu0 0.0
      %654 = vmatprep.subr.mxu0 0.0
      %655 = vmatpush1.msra.mxu0 0.0
      %656 = vmatprep.subr.mxu0 0.0
      %657 = vmatpush1.msra.mxu0 0.0
      %658 = vmatprep.subr.mxu0 0.0
      %659 = vmatpush1.msra.mxu0 0.0
      %660 = vmatprep.subr.mxu0 0.0
      %661 = vmatpush1.msra.mxu0 0.0
      %662 = vmatprep.subr.mxu0 0.0
      %663 = vmatpush1.msra.mxu0 0.0
      %664 = vmatprep.subr.mxu0 0.0
      %665 = vmatpush1.msra.mxu0 0.0
      %666 = vmatprep.subr.mxu0 0.0
      %667 = vmatpush1.msra.mxu0 0.0
      %668 = vmatprep.subr.mxu0 %v636
      %669 = vmatpush1.msra.mxu0 %v633
      %670 = vmatprep.subr.mxu0 0.0
      %671 = vmatpush2.msra.mxu0 0.0
      %672 = vmatprep.subr.mxu0 0.0
      %673 = vmatpush2.msra.mxu0 0.0
      %674 = vmatprep.subr.mxu0 0.0
      %675 = vmatpush2.msra.mxu0 0.0
      %676 = vmatprep.subr.mxu0 0.0
      %677 = vmatpush2.msra.mxu0 0.0
      %678 = vmatprep.subr.mxu0 0.0
      %679 = vmatpush2.msra.mxu0 0.0
      %680 = vmatprep.subr.mxu0 0.0
      %681 = vmatpush2.msra.mxu0 0.0
      %682 = vmatprep.subr.mxu0 0.0
      %683 = vmatpush2.msra.mxu0 0.0
      %684 = vmatprep.subr.mxu0 0.0
      %685 = vmatpush2.msra.mxu0 0.0
      %686 = vmatprep.subr.mxu0 0.0
      %687 = vmatpush2.msra.mxu0 0.0
      %688 = vmatprep.subr.mxu0 0.0
      %689 = vmatpush2.msra.mxu0 0.0
      %690 = vmatprep.subr.mxu0 0.0
      %691 = vmatpush2.msra.mxu0 0.0
      %692 = vmatprep.subr.mxu0 0.0
      %693 = vmatpush2.msra.mxu0 0.0
      %694 = vmatprep.subr.mxu0 0.0
      %695 = vmatpush2.msra.mxu0 0.0
      %696 = vmatprep.subr.mxu0 0.0
      %697 = vmatpush2.msra.mxu0 0.0
      %698 = vmatprep.subr.mxu0 0.0
      %699 = vmatpush2.msra.mxu0 0.0
      %700 = vmatprep.subr.mxu0 0.0
      %701 = vmatpush2.msra.mxu0 0.0
      %702 = vmatprep.mubr.f32.mxu0 0.0
      %703 = vmatmul.mubr.f32.gmra.mxu0 %v621
      %v704 = vpop.f32.mrf.mxu0
      %v705 = vadd.f32 %v598, %v704
      %v706 = vpop.f32.mrf.mxu0
      %v707 = vadd.f32 %v600, %v706
      %708 = vmatprep.mubr.f32.mxu0 0.0
      %709 = vmatmul.mubr.f32.gmra.mxu0 %v624
      %v710 = vpop.f32.mrf.mxu0
      %v711 = vadd.f32 %v604, %v710
      %v712 = vpop.f32.mrf.mxu0
      %v713 = vadd.f32 %v606, %v712
      %714 = vmatprep.mubr.f32.mxu0 0.0
      %715 = vmatmul.mubr.f32.gmra.mxu0 %v627
      %v716 = vpop.f32.mrf.mxu0
      %v717 = vadd.f32 %v610, %v716
      %v718 = vpop.f32.mrf.mxu0
      %v719 = vadd.f32 %v612, %v718
      %720 = vmatprep.mubr.f32.mxu0 0.0
      %721 = vmatmul.mubr.f32.gmra.mxu0 %v630
      %v722 = vpop.f32.mrf.mxu0
      %v723 = vadd.f32 %v616, %v722
      %v724 = vpop.f32.mrf.mxu0
      %v725 = vadd.f32 %v618, %v724
      %726 = vdwg.mxu0
      %727 = vrot.lane.b32.xlu0 %v453, 15
      %v728 = vpop.permute.xlu0 %727
      %729 = vrot.lane.b32.xlu0 %v455, 15
      %v730 = vpop.permute.xlu0 %729
      %vm731 = vcmp.lt.s32.totalorder %v462, 15
      %v732 = vsel %vm731, %v728, %v730
      %v733 = vsel %vm731, %v730, %v728
      %s734 = scalar_lea.vmem %s8, 4
      %v735 = vld [vmem:[%s734] sm:$0x3]
      %v737 = vlaneseq
      %v738 = vshrl.u32 %v737, 7
      %v739 = vsub.s32 0, %v738
      %v740 = vrot.slane %v735, %v739
      %v741 = vlaneseq
      %v742 = vshrl.u32 %v741, 7
      %v743 = vsub.s32 1, %v742
      %v744 = vrot.slane %v735, %v743
      %v747 = vmul.f32 %v733, %v740
      %v748 = vmul.f32 %v732, %v744
      %s749 = scalar_lea.vmem %s3, 64
      %v750 = vld [vmem:[%s749] sm:$0xff]
      %v751 = vld [vmem:[%s749 + $0x8] sm:$0xff]
      %v752 = vld [vmem:[%s749 + $0x10] sm:$0xff]
      %v753 = vld [vmem:[%s749 + $0x18] sm:$0xff]
      %v755 = vsel %vm511, %v750, 0
      %v758 = vsel %vm511, %v751, 0
      %v761 = vsel %vm511, %v752, 0
      %v764 = vsel %vm511, %v753, 0
      %v767 = vsel %vm524, %v747, 0
      %v770 = vsel %vm524, %v748, 0
      %772 = vmatprep.subr.mxu0 0.0
      %773 = vmatpush1.msra.mxu0 0.0
      %774 = vmatprep.subr.mxu0 0.0
      %775 = vmatpush1.msra.mxu0 0.0
      %776 = vmatprep.subr.mxu0 0.0
      %777 = vmatpush1.msra.mxu0 0.0
      %778 = vmatprep.subr.mxu0 0.0
      %779 = vmatpush1.msra.mxu0 0.0
      %780 = vmatprep.subr.mxu0 0.0
      %781 = vmatpush1.msra.mxu0 0.0
      %782 = vmatprep.subr.mxu0 0.0
      %783 = vmatpush1.msra.mxu0 0.0
      %784 = vmatprep.subr.mxu0 0.0
      %785 = vmatpush1.msra.mxu0 0.0
      %786 = vmatprep.subr.mxu0 0.0
      %787 = vmatpush1.msra.mxu0 0.0
      %788 = vmatprep.subr.mxu0 0.0
      %789 = vmatpush1.msra.mxu0 0.0
      %790 = vmatprep.subr.mxu0 0.0
      %791 = vmatpush1.msra.mxu0 0.0
      %792 = vmatprep.subr.mxu0 0.0
      %793 = vmatpush1.msra.mxu0 0.0
      %794 = vmatprep.subr.mxu0 0.0
      %795 = vmatpush1.msra.mxu0 0.0
      %796 = vmatprep.subr.mxu0 0.0
      %797 = vmatpush1.msra.mxu0 0.0
      %798 = vmatprep.subr.mxu0 0.0
      %799 = vmatpush1.msra.mxu0 0.0
      %800 = vmatprep.subr.mxu0 0.0
      %801 = vmatpush1.msra.mxu0 0.0
      %802 = vmatprep.subr.mxu0 %v770
      %803 = vmatpush1.msra.mxu0 %v767
      %804 = vmatprep.subr.mxu0 0.0
      %805 = vmatpush2.msra.mxu0 0.0
      %806 = vmatprep.subr.mxu0 0.0
      %807 = vmatpush2.msra.mxu0 0.0
      %808 = vmatprep.subr.mxu0 0.0
      %809 = vmatpush2.msra.mxu0 0.0
      %810 = vmatprep.subr.mxu0 0.0
      %811 = vmatpush2.msra.mxu0 0.0
      %812 = vmatprep.subr.mxu0 0.0
      %813 = vmatpush2.msra.mxu0 0.0
      %814 = vmatprep.subr.mxu0 0.0
      %815 = vmatpush2.msra.mxu0 0.0
      %816 = vmatprep.subr.mxu0 0.0
      %817 = vmatpush2.msra.mxu0 0.0
      %818 = vmatprep.subr.mxu0 0.0
      %819 = vmatpush2.msra.mxu0 0.0
      %820 = vmatprep.subr.mxu0 0.0
      %821 = vmatpush2.msra.mxu0 0.0
      %822 = vmatprep.subr.mxu0 0.0
      %823 = vmatpush2.msra.mxu0 0.0
      %824 = vmatprep.subr.mxu0 0.0
      %825 = vmatpush2.msra.mxu0 0.0
      %826 = vmatprep.subr.mxu0 0.0
      %827 = vmatpush2.msra.mxu0 0.0
      %828 = vmatprep.subr.mxu0 0.0
      %829 = vmatpush2.msra.mxu0 0.0
      %830 = vmatprep.subr.mxu0 0.0
      %831 = vmatpush2.msra.mxu0 0.0
      %832 = vmatprep.subr.mxu0 0.0
      %833 = vmatpush2.msra.mxu0 0.0
      %834 = vmatprep.subr.mxu0 0.0
      %835 = vmatpush2.msra.mxu0 0.0
      %836 = vmatprep.mubr.f32.mxu0 0.0
      %837 = vmatmul.mubr.f32.gmra.mxu0 %v755
      %v838 = vpop.f32.mrf.mxu0
      %v839 = vadd.f32 0.0, %v838
      %v840 = vpop.f32.mrf.mxu0
      %v841 = vadd.f32 0.0, %v840
      %842 = vmatprep.mubr.f32.mxu0 0.0
      %843 = vmatmul.mubr.f32.gmra.mxu0 %v758
      %v844 = vpop.f32.mrf.mxu0
      %v845 = vadd.f32 0.0, %v844
      %v846 = vpop.f32.mrf.mxu0
      %v847 = vadd.f32 0.0, %v846
      %848 = vmatprep.mubr.f32.mxu0 0.0
      %849 = vmatmul.mubr.f32.gmra.mxu0 %v761
      %v850 = vpop.f32.mrf.mxu0
      %v851 = vadd.f32 0.0, %v850
      %v852 = vpop.f32.mrf.mxu0
      %v853 = vadd.f32 0.0, %v852
      %854 = vmatprep.mubr.f32.mxu0 0.0
      %855 = vmatmul.mubr.f32.gmra.mxu0 %v764
      %v856 = vpop.f32.mrf.mxu0
      %v857 = vadd.f32 0.0, %v856
      %v858 = vpop.f32.mrf.mxu0
      %v859 = vadd.f32 0.0, %v858
      %860 = vdwg.mxu0
      %v861 = vadd.f32 %v705, %v839
      %v862 = vadd.f32 %v707, %v841
      %v863 = vadd.f32 %v711, %v845
      %v864 = vadd.f32 %v713, %v847
      %v865 = vadd.f32 %v717, %v851
      %v866 = vadd.f32 %v719, %v853
      %v867 = vadd.f32 %v723, %v857
      %v868 = vadd.f32 %v725, %v859
      %869 = vrot.lane.b32.xlu0 %v453, 1
      %v870 = vpop.permute.xlu0 %869
      %871 = vrot.lane.b32.xlu0 %v455, 1
      %v872 = vpop.permute.xlu0 %871
      %vm873 = vcmp.lt.s32.totalorder %v462, 1
      %v874 = vsel %vm873, %v870, %v872
      %v875 = vsel %vm873, %v872, %v870
      %s876 = scalar_lea.vmem %s8, 6
      %v877 = vld [vmem:[%s876] sm:$0x3]
      %v879 = vlaneseq
      %v880 = vshrl.u32 %v879, 7
      %v881 = vsub.s32 0, %v880
      %v882 = vrot.slane %v877, %v881
      %v883 = vlaneseq
      %v884 = vshrl.u32 %v883, 7
      %v885 = vsub.s32 1, %v884
      %v886 = vrot.slane %v877, %v885
      %v889 = vmul.f32 %v875, %v882
      %v890 = vmul.f32 %v874, %v886
      %s891 = scalar_lea.vmem %s3, 96
      %v892 = vld [vmem:[%s891] sm:$0xff]
      %v893 = vld [vmem:[%s891 + $0x8] sm:$0xff]
      %v894 = vld [vmem:[%s891 + $0x10] sm:$0xff]
      %v895 = vld [vmem:[%s891 + $0x18] sm:$0xff]
      %v897 = vsel %vm511, %v892, 0
      %v900 = vsel %vm511, %v893, 0
      %v903 = vsel %vm511, %v894, 0
      %v906 = vsel %vm511, %v895, 0
      %v909 = vsel %vm524, %v889, 0
      %v912 = vsel %vm524, %v890, 0
      %914 = vmatprep.subr.mxu0 0.0
      %915 = vmatpush1.msra.mxu0 0.0
      %916 = vmatprep.subr.mxu0 0.0
      %917 = vmatpush1.msra.mxu0 0.0
      %918 = vmatprep.subr.mxu0 0.0
      %919 = vmatpush1.msra.mxu0 0.0
      %920 = vmatprep.subr.mxu0 0.0
      %921 = vmatpush1.msra.mxu0 0.0
      %922 = vmatprep.subr.mxu0 0.0
      %923 = vmatpush1.msra.mxu0 0.0
      %924 = vmatprep.subr.mxu0 0.0
      %925 = vmatpush1.msra.mxu0 0.0
      %926 = vmatprep.subr.mxu0 0.0
      %927 = vmatpush1.msra.mxu0 0.0
      %928 = vmatprep.subr.mxu0 0.0
      %929 = vmatpush1.msra.mxu0 0.0
      %930 = vmatprep.subr.mxu0 0.0
      %931 = vmatpush1.msra.mxu0 0.0
      %932 = vmatprep.subr.mxu0 0.0
      %933 = vmatpush1.msra.mxu0 0.0
      %934 = vmatprep.subr.mxu0 0.0
      %935 = vmatpush1.msra.mxu0 0.0
      %936 = vmatprep.subr.mxu0 0.0
      %937 = vmatpush1.msra.mxu0 0.0
      %938 = vmatprep.subr.mxu0 0.0
      %939 = vmatpush1.msra.mxu0 0.0
      %940 = vmatprep.subr.mxu0 0.0
      %941 = vmatpush1.msra.mxu0 0.0
      %942 = vmatprep.subr.mxu0 0.0
      %943 = vmatpush1.msra.mxu0 0.0
      %944 = vmatprep.subr.mxu0 %v912
      %945 = vmatpush1.msra.mxu0 %v909
      %946 = vmatprep.subr.mxu0 0.0
      %947 = vmatpush2.msra.mxu0 0.0
      %948 = vmatprep.subr.mxu0 0.0
      %949 = vmatpush2.msra.mxu0 0.0
      %950 = vmatprep.subr.mxu0 0.0
      %951 = vmatpush2.msra.mxu0 0.0
      %952 = vmatprep.subr.mxu0 0.0
      %953 = vmatpush2.msra.mxu0 0.0
      %954 = vmatprep.subr.mxu0 0.0
      %955 = vmatpush2.msra.mxu0 0.0
      %956 = vmatprep.subr.mxu0 0.0
      %957 = vmatpush2.msra.mxu0 0.0
      %958 = vmatprep.subr.mxu0 0.0
      %959 = vmatpush2.msra.mxu0 0.0
      %960 = vmatprep.subr.mxu0 0.0
      %961 = vmatpush2.msra.mxu0 0.0
      %962 = vmatprep.subr.mxu0 0.0
      %963 = vmatpush2.msra.mxu0 0.0
      %964 = vmatprep.subr.mxu0 0.0
      %965 = vmatpush2.msra.mxu0 0.0
      %966 = vmatprep.subr.mxu0 0.0
      %967 = vmatpush2.msra.mxu0 0.0
      %968 = vmatprep.subr.mxu0 0.0
      %969 = vmatpush2.msra.mxu0 0.0
      %970 = vmatprep.subr.mxu0 0.0
      %971 = vmatpush2.msra.mxu0 0.0
      %972 = vmatprep.subr.mxu0 0.0
      %973 = vmatpush2.msra.mxu0 0.0
      %974 = vmatprep.subr.mxu0 0.0
      %975 = vmatpush2.msra.mxu0 0.0
      %976 = vmatprep.subr.mxu0 0.0
      %977 = vmatpush2.msra.mxu0 0.0
      %978 = vmatprep.mubr.f32.mxu0 0.0
      %979 = vmatmul.mubr.f32.gmra.mxu0 %v897
      %v980 = vpop.f32.mrf.mxu0
      %v981 = vadd.f32 0.0, %v980
      %v982 = vpop.f32.mrf.mxu0
      %v983 = vadd.f32 0.0, %v982
      %984 = vmatprep.mubr.f32.mxu0 0.0
      %985 = vmatmul.mubr.f32.gmra.mxu0 %v900
      %v986 = vpop.f32.mrf.mxu0
      %v987 = vadd.f32 0.0, %v986
      %v988 = vpop.f32.mrf.mxu0
      %v989 = vadd.f32 0.0, %v988
      %990 = vmatprep.mubr.f32.mxu0 0.0
      %991 = vmatmul.mubr.f32.gmra.mxu0 %v903
      %v992 = vpop.f32.mrf.mxu0
      %v993 = vadd.f32 0.0, %v992
      %v994 = vpop.f32.mrf.mxu0
      %v995 = vadd.f32 0.0, %v994
      %996 = vmatprep.mubr.f32.mxu0 0.0
      %997 = vmatmul.mubr.f32.gmra.mxu0 %v906
      %v998 = vpop.f32.mrf.mxu0
      %v999 = vadd.f32 0.0, %v998
      %v1000 = vpop.f32.mrf.mxu0
      %v1001 = vadd.f32 0.0, %v1000
      %1002 = vdwg.mxu0
      %v1003 = vadd.f32 %v861, %v981
      %v1004 = vadd.f32 %v862, %v983
      %v1005 = vadd.f32 %v863, %v987
      %v1006 = vadd.f32 %v864, %v989
      %v1007 = vadd.f32 %v865, %v993
      %v1008 = vadd.f32 %v866, %v995
      %v1009 = vadd.f32 %v867, %v999
      %v1010 = vadd.f32 %v868, %v1001
      %s1011 = scalar_lea.vmem %s3, 128
      %v1012 = vld [vmem:[%s1011] sm:$0xff]
      %v1013 = vld [vmem:[%s1011 + $0x8] sm:$0xff]
      %v1014 = vld [vmem:[%s1011 + $0x10] sm:$0xff]
      %v1015 = vld [vmem:[%s1011 + $0x18] sm:$0xff]
      %v1017 = vsel %vm511, %v1012, 0
      %v1020 = vsel %vm511, %v1013, 0
      %v1023 = vsel %vm511, %v1014, 0
      %v1026 = vsel %vm511, %v1015, 0
      %v1028 = vsel %vm524, %v453, 0
      %v1030 = vsel %vm524, %v455, 0
      %1032 = vmatprep.subr.mxu0 0.0
      %1033 = vmatpush1.msra.mxu0 0.0
      %1034 = vmatprep.subr.mxu0 0.0
      %1035 = vmatpush1.msra.mxu0 0.0
      %1036 = vmatprep.subr.mxu0 0.0
      %1037 = vmatpush1.msra.mxu0 0.0
      %1038 = vmatprep.subr.mxu0 0.0
      %1039 = vmatpush1.msra.mxu0 0.0
      %1040 = vmatprep.subr.mxu0 0.0
      %1041 = vmatpush1.msra.mxu0 0.0
      %1042 = vmatprep.subr.mxu0 0.0
      %1043 = vmatpush1.msra.mxu0 0.0
      %1044 = vmatprep.subr.mxu0 0.0
      %1045 = vmatpush1.msra.mxu0 0.0
      %1046 = vmatprep.subr.mxu0 0.0
      %1047 = vmatpush1.msra.mxu0 0.0
      %1048 = vmatprep.subr.mxu0 0.0
      %1049 = vmatpush1.msra.mxu0 0.0
      %1050 = vmatprep.subr.mxu0 0.0
      %1051 = vmatpush1.msra.mxu0 0.0
      %1052 = vmatprep.subr.mxu0 0.0
      %1053 = vmatpush1.msra.mxu0 0.0
      %1054 = vmatprep.subr.mxu0 0.0
      %1055 = vmatpush1.msra.mxu0 0.0
      %1056 = vmatprep.subr.mxu0 0.0
      %1057 = vmatpush1.msra.mxu0 0.0
      %1058 = vmatprep.subr.mxu0 0.0
      %1059 = vmatpush1.msra.mxu0 0.0
      %1060 = vmatprep.subr.mxu0 0.0
      %1061 = vmatpush1.msra.mxu0 0.0
      %1062 = vmatprep.subr.mxu0 %v1030
      %1063 = vmatpush1.msra.mxu0 %v1028
      %1064 = vmatprep.subr.mxu0 0.0
      %1065 = vmatpush2.msra.mxu0 0.0
      %1066 = vmatprep.subr.mxu0 0.0
      %1067 = vmatpush2.msra.mxu0 0.0
      %1068 = vmatprep.subr.mxu0 0.0
      %1069 = vmatpush2.msra.mxu0 0.0
      %1070 = vmatprep.subr.mxu0 0.0
      %1071 = vmatpush2.msra.mxu0 0.0
      %1072 = vmatprep.subr.mxu0 0.0
      %1073 = vmatpush2.msra.mxu0 0.0
      %1074 = vmatprep.subr.mxu0 0.0
      %1075 = vmatpush2.msra.mxu0 0.0
      %1076 = vmatprep.subr.mxu0 0.0
      %1077 = vmatpush2.msra.mxu0 0.0
      %1078 = vmatprep.subr.mxu0 0.0
      %1079 = vmatpush2.msra.mxu0 0.0
      %1080 = vmatprep.subr.mxu0 0.0
      %1081 = vmatpush2.msra.mxu0 0.0
      %1082 = vmatprep.subr.mxu0 0.0
      %1083 = vmatpush2.msra.mxu0 0.0
      %1084 = vmatprep.subr.mxu0 0.0
      %1085 = vmatpush2.msra.mxu0 0.0
      %1086 = vmatprep.subr.mxu0 0.0
      %1087 = vmatpush2.msra.mxu0 0.0
      %1088 = vmatprep.subr.mxu0 0.0
      %1089 = vmatpush2.msra.mxu0 0.0
      %1090 = vmatprep.subr.mxu0 0.0
      %1091 = vmatpush2.msra.mxu0 0.0
      %1092 = vmatprep.subr.mxu0 0.0
      %1093 = vmatpush2.msra.mxu0 0.0
      %1094 = vmatprep.subr.mxu0 0.0
      %1095 = vmatpush2.msra.mxu0 0.0
      %1096 = vmatprep.mubr.f32.mxu0 0.0
      %1097 = vmatmul.mubr.f32.gmra.mxu0 %v1017
      %v1098 = vpop.f32.mrf.mxu0
      %v1099 = vadd.f32 0.0, %v1098
      %v1100 = vpop.f32.mrf.mxu0
      %v1101 = vadd.f32 0.0, %v1100
      %1102 = vmatprep.mubr.f32.mxu0 0.0
      %1103 = vmatmul.mubr.f32.gmra.mxu0 %v1020
      %v1104 = vpop.f32.mrf.mxu0
      %v1105 = vadd.f32 0.0, %v1104
      %v1106 = vpop.f32.mrf.mxu0
      %v1107 = vadd.f32 0.0, %v1106
      %1108 = vmatprep.mubr.f32.mxu0 0.0
      %1109 = vmatmul.mubr.f32.gmra.mxu0 %v1023
      %v1110 = vpop.f32.mrf.mxu0
      %v1111 = vadd.f32 0.0, %v1110
      %v1112 = vpop.f32.mrf.mxu0
      %v1113 = vadd.f32 0.0, %v1112
      %1114 = vmatprep.mubr.f32.mxu0 0.0
      %1115 = vmatmul.mubr.f32.gmra.mxu0 %v1026
      %v1116 = vpop.f32.mrf.mxu0
      %v1117 = vadd.f32 0.0, %v1116
      %v1118 = vpop.f32.mrf.mxu0
      %v1119 = vadd.f32 0.0, %v1118
      %1120 = vdwg.mxu0
      %v1121 = vadd.f32 %v1003, %v1099
      %v1122 = vadd.f32 %v1004, %v1101
      %v1123 = vadd.f32 %v1005, %v1105
      %v1124 = vadd.f32 %v1006, %v1107
      %v1125 = vadd.f32 %v1007, %v1111
      %v1126 = vadd.f32 %v1008, %v1113
      %v1127 = vadd.f32 %v1009, %v1117
      %v1128 = vadd.f32 %v1010, %v1119
      %1129 = vrot.lane.b32.xlu0 %v453, 127
      %v1130 = vpop.permute.xlu0 %1129
      %1131 = vrot.lane.b32.xlu0 %v455, 127
      %v1132 = vpop.permute.xlu0 %1131
      %vm1133 = vcmp.lt.s32.totalorder %v462, 127
      %v1134 = vsel %vm1133, %v1130, %v1132
      %v1135 = vsel %vm1133, %v1132, %v1130
      %s1136 = scalar_lea.vmem %s8, 10
      %v1137 = vld [vmem:[%s1136] sm:$0x3]
      %v1139 = vlaneseq
      %v1140 = vshrl.u32 %v1139, 7
      %v1141 = vsub.s32 0, %v1140
      %v1142 = vrot.slane %v1137, %v1141
      %v1143 = vlaneseq
      %v1144 = vshrl.u32 %v1143, 7
      %v1145 = vsub.s32 1, %v1144
      %v1146 = vrot.slane %v1137, %v1145
      %v1149 = vmul.f32 %v1134, %v1142
      %v1150 = vmul.f32 %v1135, %v1146
      %s1151 = scalar_lea.vmem %s3, 160
      %v1152 = vld [vmem:[%s1151] sm:$0xff]
      %v1153 = vld [vmem:[%s1151 + $0x8] sm:$0xff]
      %v1154 = vld [vmem:[%s1151 + $0x10] sm:$0xff]
      %v1155 = vld [vmem:[%s1151 + $0x18] sm:$0xff]
      %v1157 = vsel %vm511, %v1152, 0
      %v1160 = vsel %vm511, %v1153, 0
      %v1163 = vsel %vm511, %v1154, 0
      %v1166 = vsel %vm511, %v1155, 0
      %v1169 = vsel %vm524, %v1149, 0
      %v1172 = vsel %vm524, %v1150, 0
      %1174 = vmatprep.subr.mxu0 0.0
      %1175 = vmatpush1.msra.mxu0 0.0
      %1176 = vmatprep.subr.mxu0 0.0
      %1177 = vmatpush1.msra.mxu0 0.0
      %1178 = vmatprep.subr.mxu0 0.0
      %1179 = vmatpush1.msra.mxu0 0.0
      %1180 = vmatprep.subr.mxu0 0.0
      %1181 = vmatpush1.msra.mxu0 0.0
      %1182 = vmatprep.subr.mxu0 0.0
      %1183 = vmatpush1.msra.mxu0 0.0
      %1184 = vmatprep.subr.mxu0 0.0
      %1185 = vmatpush1.msra.mxu0 0.0
      %1186 = vmatprep.subr.mxu0 0.0
      %1187 = vmatpush1.msra.mxu0 0.0
      %1188 = vmatprep.subr.mxu0 0.0
      %1189 = vmatpush1.msra.mxu0 0.0
      %1190 = vmatprep.subr.mxu0 0.0
      %1191 = vmatpush1.msra.mxu0 0.0
      %1192 = vmatprep.subr.mxu0 0.0
      %1193 = vmatpush1.msra.mxu0 0.0
      %1194 = vmatprep.subr.mxu0 0.0
      %1195 = vmatpush1.msra.mxu0 0.0
      %1196 = vmatprep.subr.mxu0 0.0
      %1197 = vmatpush1.msra.mxu0 0.0
      %1198 = vmatprep.subr.mxu0 0.0
      %1199 = vmatpush1.msra.mxu0 0.0
      %1200 = vmatprep.subr.mxu0 0.0
      %1201 = vmatpush1.msra.mxu0 0.0
      %1202 = vmatprep.subr.mxu0 0.0
      %1203 = vmatpush1.msra.mxu0 0.0
      %1204 = vmatprep.subr.mxu0 %v1172
      %1205 = vmatpush1.msra.mxu0 %v1169
      %1206 = vmatprep.subr.mxu0 0.0
      %1207 = vmatpush2.msra.mxu0 0.0
      %1208 = vmatprep.subr.mxu0 0.0
      %1209 = vmatpush2.msra.mxu0 0.0
      %1210 = vmatprep.subr.mxu0 0.0
      %1211 = vmatpush2.msra.mxu0 0.0
      %1212 = vmatprep.subr.mxu0 0.0
      %1213 = vmatpush2.msra.mxu0 0.0
      %1214 = vmatprep.subr.mxu0 0.0
      %1215 = vmatpush2.msra.mxu0 0.0
      %1216 = vmatprep.subr.mxu0 0.0
      %1217 = vmatpush2.msra.mxu0 0.0
      %1218 = vmatprep.subr.mxu0 0.0
      %1219 = vmatpush2.msra.mxu0 0.0
      %1220 = vmatprep.subr.mxu0 0.0
      %1221 = vmatpush2.msra.mxu0 0.0
      %1222 = vmatprep.subr.mxu0 0.0
      %1223 = vmatpush2.msra.mxu0 0.0
      %1224 = vmatprep.subr.mxu0 0.0
      %1225 = vmatpush2.msra.mxu0 0.0
      %1226 = vmatprep.subr.mxu0 0.0
      %1227 = vmatpush2.msra.mxu0 0.0
      %1228 = vmatprep.subr.mxu0 0.0
      %1229 = vmatpush2.msra.mxu0 0.0
      %1230 = vmatprep.subr.mxu0 0.0
      %1231 = vmatpush2.msra.mxu0 0.0
      %1232 = vmatprep.subr.mxu0 0.0
      %1233 = vmatpush2.msra.mxu0 0.0
      %1234 = vmatprep.subr.mxu0 0.0
      %1235 = vmatpush2.msra.mxu0 0.0
      %1236 = vmatprep.subr.mxu0 0.0
      %1237 = vmatpush2.msra.mxu0 0.0
      %1238 = vmatprep.mubr.f32.mxu0 0.0
      %1239 = vmatmul.mubr.f32.gmra.mxu0 %v1157
      %v1240 = vpop.f32.mrf.mxu0
      %v1241 = vadd.f32 0.0, %v1240
      %v1242 = vpop.f32.mrf.mxu0
      %v1243 = vadd.f32 0.0, %v1242
      %1244 = vmatprep.mubr.f32.mxu0 0.0
      %1245 = vmatmul.mubr.f32.gmra.mxu0 %v1160
      %v1246 = vpop.f32.mrf.mxu0
      %v1247 = vadd.f32 0.0, %v1246
      %v1248 = vpop.f32.mrf.mxu0
      %v1249 = vadd.f32 0.0, %v1248
      %1250 = vmatprep.mubr.f32.mxu0 0.0
      %1251 = vmatmul.mubr.f32.gmra.mxu0 %v1163
      %v1252 = vpop.f32.mrf.mxu0
      %v1253 = vadd.f32 0.0, %v1252
      %v1254 = vpop.f32.mrf.mxu0
      %v1255 = vadd.f32 0.0, %v1254
      %1256 = vmatprep.mubr.f32.mxu0 0.0
      %1257 = vmatmul.mubr.f32.gmra.mxu0 %v1166
      %v1258 = vpop.f32.mrf.mxu0
      %v1259 = vadd.f32 0.0, %v1258
      %v1260 = vpop.f32.mrf.mxu0
      %v1261 = vadd.f32 0.0, %v1260
      %1262 = vdwg.mxu0
      %v1263 = vadd.f32 %v1121, %v1241
      %v1264 = vadd.f32 %v1122, %v1243
      %v1265 = vadd.f32 %v1123, %v1247
      %v1266 = vadd.f32 %v1124, %v1249
      %v1267 = vadd.f32 %v1125, %v1253
      %v1268 = vadd.f32 %v1126, %v1255
      %v1269 = vadd.f32 %v1127, %v1259
      %v1270 = vadd.f32 %v1128, %v1261
      %1271 = vrot.lane.b32.xlu0 %v453, 113
      %v1272 = vpop.permute.xlu0 %1271
      %1273 = vrot.lane.b32.xlu0 %v455, 113
      %v1274 = vpop.permute.xlu0 %1273
      %vm1275 = vcmp.lt.s32.totalorder %v462, 113
      %v1276 = vsel %vm1275, %v1272, %v1274
      %v1277 = vsel %vm1275, %v1274, %v1272
      %s1278 = scalar_lea.vmem %s8, 12
      %v1279 = vld [vmem:[%s1278] sm:$0x3]
      %v1281 = vlaneseq
      %v1282 = vshrl.u32 %v1281, 7
      %v1283 = vsub.s32 0, %v1282
      %v1284 = vrot.slane %v1279, %v1283
      %v1285 = vlaneseq
      %v1286 = vshrl.u32 %v1285, 7
      %v1287 = vsub.s32 1, %v1286
      %v1288 = vrot.slane %v1279, %v1287
      %v1291 = vmul.f32 %v1276, %v1284
      %v1292 = vmul.f32 %v1277, %v1288
      %s1293 = scalar_lea.vmem %s3, 192
      %v1294 = vld [vmem:[%s1293] sm:$0xff]
      %v1295 = vld [vmem:[%s1293 + $0x8] sm:$0xff]
      %v1296 = vld [vmem:[%s1293 + $0x10] sm:$0xff]
      %v1297 = vld [vmem:[%s1293 + $0x18] sm:$0xff]
      %v1299 = vsel %vm511, %v1294, 0
      %v1302 = vsel %vm511, %v1295, 0
      %v1305 = vsel %vm511, %v1296, 0
      %v1308 = vsel %vm511, %v1297, 0
      %v1311 = vsel %vm524, %v1291, 0
      %v1314 = vsel %vm524, %v1292, 0
      %1316 = vmatprep.subr.mxu0 0.0
      %1317 = vmatpush1.msra.mxu0 0.0
      %1318 = vmatprep.subr.mxu0 0.0
      %1319 = vmatpush1.msra.mxu0 0.0
      %1320 = vmatprep.subr.mxu0 0.0
      %1321 = vmatpush1.msra.mxu0 0.0
      %1322 = vmatprep.subr.mxu0 0.0
      %1323 = vmatpush1.msra.mxu0 0.0
      %1324 = vmatprep.subr.mxu0 0.0
      %1325 = vmatpush1.msra.mxu0 0.0
      %1326 = vmatprep.subr.mxu0 0.0
      %1327 = vmatpush1.msra.mxu0 0.0
      %1328 = vmatprep.subr.mxu0 0.0
      %1329 = vmatpush1.msra.mxu0 0.0
      %1330 = vmatprep.subr.mxu0 0.0
      %1331 = vmatpush1.msra.mxu0 0.0
      %1332 = vmatprep.subr.mxu0 0.0
      %1333 = vmatpush1.msra.mxu0 0.0
      %1334 = vmatprep.subr.mxu0 0.0
      %1335 = vmatpush1.msra.mxu0 0.0
      %1336 = vmatprep.subr.mxu0 0.0
      %1337 = vmatpush1.msra.mxu0 0.0
      %1338 = vmatprep.subr.mxu0 0.0
      %1339 = vmatpush1.msra.mxu0 0.0
      %1340 = vmatprep.subr.mxu0 0.0
      %1341 = vmatpush1.msra.mxu0 0.0
      %1342 = vmatprep.subr.mxu0 0.0
      %1343 = vmatpush1.msra.mxu0 0.0
      %1344 = vmatprep.subr.mxu0 0.0
      %1345 = vmatpush1.msra.mxu0 0.0
      %1346 = vmatprep.subr.mxu0 %v1314
      %1347 = vmatpush1.msra.mxu0 %v1311
      %1348 = vmatprep.subr.mxu0 0.0
      %1349 = vmatpush2.msra.mxu0 0.0
      %1350 = vmatprep.subr.mxu0 0.0
      %1351 = vmatpush2.msra.mxu0 0.0
      %1352 = vmatprep.subr.mxu0 0.0
      %1353 = vmatpush2.msra.mxu0 0.0
      %1354 = vmatprep.subr.mxu0 0.0
      %1355 = vmatpush2.msra.mxu0 0.0
      %1356 = vmatprep.subr.mxu0 0.0
      %1357 = vmatpush2.msra.mxu0 0.0
      %1358 = vmatprep.subr.mxu0 0.0
      %1359 = vmatpush2.msra.mxu0 0.0
      %1360 = vmatprep.subr.mxu0 0.0
      %1361 = vmatpush2.msra.mxu0 0.0
      %1362 = vmatprep.subr.mxu0 0.0
      %1363 = vmatpush2.msra.mxu0 0.0
      %1364 = vmatprep.subr.mxu0 0.0
      %1365 = vmatpush2.msra.mxu0 0.0
      %1366 = vmatprep.subr.mxu0 0.0
      %1367 = vmatpush2.msra.mxu0 0.0
      %1368 = vmatprep.subr.mxu0 0.0
      %1369 = vmatpush2.msra.mxu0 0.0
      %1370 = vmatprep.subr.mxu0 0.0
      %1371 = vmatpush2.msra.mxu0 0.0
      %1372 = vmatprep.subr.mxu0 0.0
      %1373 = vmatpush2.msra.mxu0 0.0
      %1374 = vmatprep.subr.mxu0 0.0
      %1375 = vmatpush2.msra.mxu0 0.0
      %1376 = vmatprep.subr.mxu0 0.0
      %1377 = vmatpush2.msra.mxu0 0.0
      %1378 = vmatprep.subr.mxu0 0.0
      %1379 = vmatpush2.msra.mxu0 0.0
      %1380 = vmatprep.mubr.f32.mxu0 0.0
      %1381 = vmatmul.mubr.f32.gmra.mxu0 %v1299
      %v1382 = vpop.f32.mrf.mxu0
      %v1383 = vadd.f32 0.0, %v1382
      %v1384 = vpop.f32.mrf.mxu0
      %v1385 = vadd.f32 0.0, %v1384
      %1386 = vmatprep.mubr.f32.mxu0 0.0
      %1387 = vmatmul.mubr.f32.gmra.mxu0 %v1302
      %v1388 = vpop.f32.mrf.mxu0
      %v1389 = vadd.f32 0.0, %v1388
      %v1390 = vpop.f32.mrf.mxu0
      %v1391 = vadd.f32 0.0, %v1390
      %1392 = vmatprep.mubr.f32.mxu0 0.0
      %1393 = vmatmul.mubr.f32.gmra.mxu0 %v1305
      %v1394 = vpop.f32.mrf.mxu0
      %v1395 = vadd.f32 0.0, %v1394
      %v1396 = vpop.f32.mrf.mxu0
      %v1397 = vadd.f32 0.0, %v1396
      %1398 = vmatprep.mubr.f32.mxu0 0.0
      %1399 = vmatmul.mubr.f32.gmra.mxu0 %v1308
      %v1400 = vpop.f32.mrf.mxu0
      %v1401 = vadd.f32 0.0, %v1400
      %v1402 = vpop.f32.mrf.mxu0
      %v1403 = vadd.f32 0.0, %v1402
      %1404 = vdwg.mxu0
      %v1405 = vadd.f32 %v1263, %v1383
      %v1406 = vadd.f32 %v1264, %v1385
      %v1407 = vadd.f32 %v1265, %v1389
      %v1408 = vadd.f32 %v1266, %v1391
      %v1409 = vadd.f32 %v1267, %v1395
      %v1410 = vadd.f32 %v1268, %v1397
      %v1411 = vadd.f32 %v1269, %v1401
      %v1412 = vadd.f32 %v1270, %v1403
      %1413 = vrot.lane.b32.xlu0 %v453, 112
      %v1414 = vpop.permute.xlu0 %1413
      %1415 = vrot.lane.b32.xlu0 %v455, 112
      %v1416 = vpop.permute.xlu0 %1415
      %vm1417 = vcmp.lt.s32.totalorder %v462, 112
      %v1418 = vsel %vm1417, %v1414, %v1416
      %v1419 = vsel %vm1417, %v1416, %v1414
      %s1420 = scalar_lea.vmem %s8, 14
      %v1421 = vld [vmem:[%s1420] sm:$0x3]
      %v1423 = vlaneseq
      %v1424 = vshrl.u32 %v1423, 7
      %v1425 = vsub.s32 0, %v1424
      %v1426 = vrot.slane %v1421, %v1425
      %v1427 = vlaneseq
      %v1428 = vshrl.u32 %v1427, 7
      %v1429 = vsub.s32 1, %v1428
      %v1430 = vrot.slane %v1421, %v1429
      %v1433 = vmul.f32 %v1418, %v1426
      %v1434 = vmul.f32 %v1419, %v1430
      %s1435 = scalar_lea.vmem %s3, 224
      %v1436 = vld [vmem:[%s1435] sm:$0xff]
      %v1437 = vld [vmem:[%s1435 + $0x8] sm:$0xff]
      %v1438 = vld [vmem:[%s1435 + $0x10] sm:$0xff]
      %v1439 = vld [vmem:[%s1435 + $0x18] sm:$0xff]
      %v1441 = vsel %vm511, %v1436, 0
      %v1444 = vsel %vm511, %v1437, 0
      %v1447 = vsel %vm511, %v1438, 0
      %v1450 = vsel %vm511, %v1439, 0
      %v1453 = vsel %vm524, %v1433, 0
      %v1456 = vsel %vm524, %v1434, 0
      %1458 = vmatprep.subr.mxu0 0.0
      %1459 = vmatpush1.msra.mxu0 0.0
      %1460 = vmatprep.subr.mxu0 0.0
      %1461 = vmatpush1.msra.mxu0 0.0
      %1462 = vmatprep.subr.mxu0 0.0
      %1463 = vmatpush1.msra.mxu0 0.0
      %1464 = vmatprep.subr.mxu0 0.0
      %1465 = vmatpush1.msra.mxu0 0.0
      %1466 = vmatprep.subr.mxu0 0.0
      %1467 = vmatpush1.msra.mxu0 0.0
      %1468 = vmatprep.subr.mxu0 0.0
      %1469 = vmatpush1.msra.mxu0 0.0
      %1470 = vmatprep.subr.mxu0 0.0
      %1471 = vmatpush1.msra.mxu0 0.0
      %1472 = vmatprep.subr.mxu0 0.0
      %1473 = vmatpush1.msra.mxu0 0.0
      %1474 = vmatprep.subr.mxu0 0.0
      %1475 = vmatpush1.msra.mxu0 0.0
      %1476 = vmatprep.subr.mxu0 0.0
      %1477 = vmatpush1.msra.mxu0 0.0
      %1478 = vmatprep.subr.mxu0 0.0
      %1479 = vmatpush1.msra.mxu0 0.0
      %1480 = vmatprep.subr.mxu0 0.0
      %1481 = vmatpush1.msra.mxu0 0.0
      %1482 = vmatprep.subr.mxu0 0.0
      %1483 = vmatpush1.msra.mxu0 0.0
      %1484 = vmatprep.subr.mxu0 0.0
      %1485 = vmatpush1.msra.mxu0 0.0
      %1486 = vmatprep.subr.mxu0 0.0
      %1487 = vmatpush1.msra.mxu0 0.0
      %1488 = vmatprep.subr.mxu0 %v1456
      %1489 = vmatpush1.msra.mxu0 %v1453
      %1490 = vmatprep.subr.mxu0 0.0
      %1491 = vmatpush2.msra.mxu0 0.0
      %1492 = vmatprep.subr.mxu0 0.0
      %1493 = vmatpush2.msra.mxu0 0.0
      %1494 = vmatprep.subr.mxu0 0.0
      %1495 = vmatpush2.msra.mxu0 0.0
      %1496 = vmatprep.subr.mxu0 0.0
      %1497 = vmatpush2.msra.mxu0 0.0
      %1498 = vmatprep.subr.mxu0 0.0
      %1499 = vmatpush2.msra.mxu0 0.0
      %1500 = vmatprep.subr.mxu0 0.0
      %1501 = vmatpush2.msra.mxu0 0.0
      %1502 = vmatprep.subr.mxu0 0.0
      %1503 = vmatpush2.msra.mxu0 0.0
      %1504 = vmatprep.subr.mxu0 0.0
      %1505 = vmatpush2.msra.mxu0 0.0
      %1506 = vmatprep.subr.mxu0 0.0
      %1507 = vmatpush2.msra.mxu0 0.0
      %1508 = vmatprep.subr.mxu0 0.0
      %1509 = vmatpush2.msra.mxu0 0.0
      %1510 = vmatprep.subr.mxu0 0.0
      %1511 = vmatpush2.msra.mxu0 0.0
      %1512 = vmatprep.subr.mxu0 0.0
      %1513 = vmatpush2.msra.mxu0 0.0
      %1514 = vmatprep.subr.mxu0 0.0
      %1515 = vmatpush2.msra.mxu0 0.0
      %1516 = vmatprep.subr.mxu0 0.0
      %1517 = vmatpush2.msra.mxu0 0.0
      %1518 = vmatprep.subr.mxu0 0.0
      %1519 = vmatpush2.msra.mxu0 0.0
      %1520 = vmatprep.subr.mxu0 0.0
      %1521 = vmatpush2.msra.mxu0 0.0
      %1522 = vmatprep.mubr.f32.mxu0 0.0
      %1523 = vmatmul.mubr.f32.gmra.mxu0 %v1441
      %v1524 = vpop.f32.mrf.mxu0
      %v1525 = vadd.f32 0.0, %v1524
      %v1526 = vpop.f32.mrf.mxu0
      %v1527 = vadd.f32 0.0, %v1526
      %1528 = vmatprep.mubr.f32.mxu0 0.0
      %1529 = vmatmul.mubr.f32.gmra.mxu0 %v1444
      %v1530 = vpop.f32.mrf.mxu0
      %v1531 = vadd.f32 0.0, %v1530
      %v1532 = vpop.f32.mrf.mxu0
      %v1533 = vadd.f32 0.0, %v1532
      %1534 = vmatprep.mubr.f32.mxu0 0.0
      %1535 = vmatmul.mubr.f32.gmra.mxu0 %v1447
      %v1536 = vpop.f32.mrf.mxu0
      %v1537 = vadd.f32 0.0, %v1536
      %v1538 = vpop.f32.mrf.mxu0
      %v1539 = vadd.f32 0.0, %v1538
      %1540 = vmatprep.mubr.f32.mxu0 0.0
      %1541 = vmatmul.mubr.f32.gmra.mxu0 %v1450
      %v1542 = vpop.f32.mrf.mxu0
      %v1543 = vadd.f32 0.0, %v1542
      %v1544 = vpop.f32.mrf.mxu0
      %v1545 = vadd.f32 0.0, %v1544
      %1546 = vdwg.mxu0
      %v1547 = vadd.f32 %v1405, %v1525
      %v1548 = vadd.f32 %v1406, %v1527
      %v1549 = vadd.f32 %v1407, %v1531
      %v1550 = vadd.f32 %v1408, %v1533
      %v1551 = vadd.f32 %v1409, %v1537
      %v1552 = vadd.f32 %v1410, %v1539
      %v1553 = vadd.f32 %v1411, %v1543
      %v1554 = vadd.f32 %v1412, %v1545
      %1555 = vrot.lane.b32.xlu0 %v453, 111
      %v1556 = vpop.permute.xlu0 %1555
      %1557 = vrot.lane.b32.xlu0 %v455, 111
      %v1558 = vpop.permute.xlu0 %1557
      %vm1559 = vcmp.lt.s32.totalorder %v462, 111
      %v1560 = vsel %vm1559, %v1556, %v1558
      %v1561 = vsel %vm1559, %v1558, %v1556
      %s1562 = scalar_lea.vmem %s8, 16
      %v1563 = vld [vmem:[%s1562] sm:$0x3]
      %v1565 = vlaneseq
      %v1566 = vshrl.u32 %v1565, 7
      %v1567 = vsub.s32 0, %v1566
      %v1568 = vrot.slane %v1563, %v1567
      %v1569 = vlaneseq
      %v1570 = vshrl.u32 %v1569, 7
      %v1571 = vsub.s32 1, %v1570
      %v1572 = vrot.slane %v1563, %v1571
      %v1575 = vmul.f32 %v1560, %v1568
      %v1576 = vmul.f32 %v1561, %v1572
      %s1577 = scalar_lea.vmem %s3, 256
      %v1578 = vld [vmem:[%s1577] sm:$0xff]
      %v1579 = vld [vmem:[%s1577 + $0x8] sm:$0xff]
      %v1580 = vld [vmem:[%s1577 + $0x10] sm:$0xff]
      %v1581 = vld [vmem:[%s1577 + $0x18] sm:$0xff]
      %v1583 = vsel %vm511, %v1578, 0
      %v1586 = vsel %vm511, %v1579, 0
      %v1589 = vsel %vm511, %v1580, 0
      %v1592 = vsel %vm511, %v1581, 0
      %v1595 = vsel %vm524, %v1575, 0
      %v1598 = vsel %vm524, %v1576, 0
      %1600 = vmatprep.subr.mxu0 0.0
      %1601 = vmatpush1.msra.mxu0 0.0
      %1602 = vmatprep.subr.mxu0 0.0
      %1603 = vmatpush1.msra.mxu0 0.0
      %1604 = vmatprep.subr.mxu0 0.0
      %1605 = vmatpush1.msra.mxu0 0.0
      %1606 = vmatprep.subr.mxu0 0.0
      %1607 = vmatpush1.msra.mxu0 0.0
      %1608 = vmatprep.subr.mxu0 0.0
      %1609 = vmatpush1.msra.mxu0 0.0
      %1610 = vmatprep.subr.mxu0 0.0
      %1611 = vmatpush1.msra.mxu0 0.0
      %1612 = vmatprep.subr.mxu0 0.0
      %1613 = vmatpush1.msra.mxu0 0.0
      %1614 = vmatprep.subr.mxu0 0.0
      %1615 = vmatpush1.msra.mxu0 0.0
      %1616 = vmatprep.subr.mxu0 0.0
      %1617 = vmatpush1.msra.mxu0 0.0
      %1618 = vmatprep.subr.mxu0 0.0
      %1619 = vmatpush1.msra.mxu0 0.0
      %1620 = vmatprep.subr.mxu0 0.0
      %1621 = vmatpush1.msra.mxu0 0.0
      %1622 = vmatprep.subr.mxu0 0.0
      %1623 = vmatpush1.msra.mxu0 0.0
      %1624 = vmatprep.subr.mxu0 0.0
      %1625 = vmatpush1.msra.mxu0 0.0
      %1626 = vmatprep.subr.mxu0 0.0
      %1627 = vmatpush1.msra.mxu0 0.0
      %1628 = vmatprep.subr.mxu0 0.0
      %1629 = vmatpush1.msra.mxu0 0.0
      %1630 = vmatprep.subr.mxu0 %v1598
      %1631 = vmatpush1.msra.mxu0 %v1595
      %1632 = vmatprep.subr.mxu0 0.0
      %1633 = vmatpush2.msra.mxu0 0.0
      %1634 = vmatprep.subr.mxu0 0.0
      %1635 = vmatpush2.msra.mxu0 0.0
      %1636 = vmatprep.subr.mxu0 0.0
      %1637 = vmatpush2.msra.mxu0 0.0
      %1638 = vmatprep.subr.mxu0 0.0
      %1639 = vmatpush2.msra.mxu0 0.0
      %1640 = vmatprep.subr.mxu0 0.0
      %1641 = vmatpush2.msra.mxu0 0.0
      %1642 = vmatprep.subr.mxu0 0.0
      %1643 = vmatpush2.msra.mxu0 0.0
      %1644 = vmatprep.subr.mxu0 0.0
      %1645 = vmatpush2.msra.mxu0 0.0
      %1646 = vmatprep.subr.mxu0 0.0
      %1647 = vmatpush2.msra.mxu0 0.0
      %1648 = vmatprep.subr.mxu0 0.0
      %1649 = vmatpush2.msra.mxu0 0.0
      %1650 = vmatprep.subr.mxu0 0.0
      %1651 = vmatpush2.msra.mxu0 0.0
      %1652 = vmatprep.subr.mxu0 0.0
      %1653 = vmatpush2.msra.mxu0 0.0
      %1654 = vmatprep.subr.mxu0 0.0
      %1655 = vmatpush2.msra.mxu0 0.0
      %1656 = vmatprep.subr.mxu0 0.0
      %1657 = vmatpush2.msra.mxu0 0.0
      %1658 = vmatprep.subr.mxu0 0.0
      %1659 = vmatpush2.msra.mxu0 0.0
      %1660 = vmatprep.subr.mxu0 0.0
      %1661 = vmatpush2.msra.mxu0 0.0
      %1662 = vmatprep.subr.mxu0 0.0
      %1663 = vmatpush2.msra.mxu0 0.0
      %1664 = vmatprep.mubr.f32.mxu0 0.0
      %1665 = vmatmul.mubr.f32.gmra.mxu0 %v1583
      %v1666 = vpop.f32.mrf.mxu0
      %v1667 = vadd.f32 0.0, %v1666
      %v1668 = vpop.f32.mrf.mxu0
      %v1669 = vadd.f32 0.0, %v1668
      %1670 = vmatprep.mubr.f32.mxu0 0.0
      %1671 = vmatmul.mubr.f32.gmra.mxu0 %v1586
      %v1672 = vpop.f32.mrf.mxu0
      %v1673 = vadd.f32 0.0, %v1672
      %v1674 = vpop.f32.mrf.mxu0
      %v1675 = vadd.f32 0.0, %v1674
      %1676 = vmatprep.mubr.f32.mxu0 0.0
      %1677 = vmatmul.mubr.f32.gmra.mxu0 %v1589
      %v1678 = vpop.f32.mrf.mxu0
      %v1679 = vadd.f32 0.0, %v1678
      %v1680 = vpop.f32.mrf.mxu0
      %v1681 = vadd.f32 0.0, %v1680
      %1682 = vmatprep.mubr.f32.mxu0 0.0
      %1683 = vmatmul.mubr.f32.gmra.mxu0 %v1592
      %v1684 = vpop.f32.mrf.mxu0
      %v1685 = vadd.f32 0.0, %v1684
      %v1686 = vpop.f32.mrf.mxu0
      %v1687 = vadd.f32 0.0, %v1686
      %1688 = vdwg.mxu0
      %v1689 = vadd.f32 %v1547, %v1667
      %v1690 = vadd.f32 %v1548, %v1669
      %v1691 = vadd.f32 %v1549, %v1673
      %v1692 = vadd.f32 %v1550, %v1675
      %v1693 = vadd.f32 %v1551, %v1679
      %v1694 = vadd.f32 %v1552, %v1681
      %v1695 = vadd.f32 %v1553, %v1685
      %v1696 = vadd.f32 %v1554, %v1687
      %v1697 = vld [vmem:[#allocation3] sm:$0xff]
      %v1698 = vld [vmem:[#allocation3 + $0x8] sm:$0xff]
      %1699 = vrot.lane.b32.xlu0 %v1697, 17
      %v1700 = vpop.permute.xlu0 %1699
      %1701 = vrot.lane.b32.xlu0 %v1698, 17
      %v1702 = vpop.permute.xlu0 %1701
      %v1703 = vsel %vm463, %v1700, %v1702
      %v1704 = vsel %vm463, %v1702, %v1700
      %v1705 = vld [vmem:[%s9] sm:$0x3]
      %v1707 = vlaneseq
      %v1708 = vshrl.u32 %v1707, 7
      %v1709 = vsub.s32 0, %v1708
      %v1710 = vrot.slane %v1705, %v1709
      %v1711 = vlaneseq
      %v1712 = vshrl.u32 %v1711, 7
      %v1713 = vsub.s32 1, %v1712
      %v1714 = vrot.slane %v1705, %v1713
      %v1717 = vmul.f32 %v1704, %v1710
      %v1718 = vmul.f32 %v1703, %v1714
      %v1719 = vld [vmem:[%s4] sm:$0xff]
      %v1720 = vld [vmem:[%s4 + $0x8] sm:$0xff]
      %v1721 = vld [vmem:[%s4 + $0x10] sm:$0xff]
      %v1722 = vld [vmem:[%s4 + $0x18] sm:$0xff]
      %1723 = vrot.lane.b32.xlu0 %v1697, 16
      %v1724 = vpop.permute.xlu0 %1723
      %1725 = vrot.lane.b32.xlu0 %v1698, 16
      %v1726 = vpop.permute.xlu0 %1725
      %v1727 = vsel %vm488, %v1724, %v1726
      %v1728 = vsel %vm488, %v1726, %v1724
      %s1729 = scalar_lea.vmem %s9, 2
      %v1730 = vld [vmem:[%s1729] sm:$0x3]
      %v1732 = vlaneseq
      %v1733 = vshrl.u32 %v1732, 7
      %v1734 = vsub.s32 0, %v1733
      %v1735 = vrot.slane %v1730, %v1734
      %v1736 = vlaneseq
      %v1737 = vshrl.u32 %v1736, 7
      %v1738 = vsub.s32 1, %v1737
      %v1739 = vrot.slane %v1730, %v1738
      %v1742 = vmul.f32 %v1728, %v1735
      %v1743 = vmul.f32 %v1727, %v1739
      %s1744 = scalar_lea.vmem %s4, 32
      %v1745 = vld [vmem:[%s1744] sm:$0xff]
      %v1746 = vld [vmem:[%s1744 + $0x8] sm:$0xff]
      %v1747 = vld [vmem:[%s1744 + $0x10] sm:$0xff]
      %v1748 = vld [vmem:[%s1744 + $0x18] sm:$0xff]
      %vm1749 = vcmask 64512
      %v1751 = vsel %vm1749, %v1745, 0
      %v1754 = vsel %vm1749, %v1746, 0
      %v1757 = vsel %vm1749, %v1747, 0
      %v1760 = vsel %vm1749, %v1748, 0
      %1762 = vmatprep.subr.mxu0 0.0
      %1763 = vmatpush1.msra.mxu0 0.0
      %1764 = vmatprep.subr.mxu0 0.0
      %1765 = vmatpush1.msra.mxu0 0.0
      %1766 = vmatprep.subr.mxu0 0.0
      %1767 = vmatpush1.msra.mxu0 0.0
      %1768 = vmatprep.subr.mxu0 0.0
      %1769 = vmatpush1.msra.mxu0 0.0
      %1770 = vmatprep.subr.mxu0 0.0
      %1771 = vmatpush1.msra.mxu0 0.0
      %1772 = vmatprep.subr.mxu0 0.0
      %1773 = vmatpush1.msra.mxu0 0.0
      %1774 = vmatprep.subr.mxu0 0.0
      %1775 = vmatpush1.msra.mxu0 0.0
      %1776 = vmatprep.subr.mxu0 0.0
      %1777 = vmatpush1.msra.mxu0 0.0
      %1778 = vmatprep.subr.mxu0 0.0
      %1779 = vmatpush1.msra.mxu0 0.0
      %1780 = vmatprep.subr.mxu0 0.0
      %1781 = vmatpush1.msra.mxu0 0.0
      %1782 = vmatprep.subr.mxu0 0.0
      %1783 = vmatpush1.msra.mxu0 0.0
      %1784 = vmatprep.subr.mxu0 0.0
      %1785 = vmatpush1.msra.mxu0 0.0
      %1786 = vmatprep.subr.mxu0 0.0
      %1787 = vmatpush1.msra.mxu0 0.0
      %1788 = vmatprep.subr.mxu0 0.0
      %1789 = vmatpush1.msra.mxu0 0.0
      %1790 = vmatprep.subr.mxu0 0.0
      %1791 = vmatpush1.msra.mxu0 0.0
      %1792 = vmatprep.subr.mxu0 %v1743
      %1793 = vmatpush1.msra.mxu0 %v1742
      %1794 = vmatprep.subr.mxu0 0.0
      %1795 = vmatpush2.msra.mxu0 0.0
      %1796 = vmatprep.subr.mxu0 0.0
      %1797 = vmatpush2.msra.mxu0 0.0
      %1798 = vmatprep.subr.mxu0 0.0
      %1799 = vmatpush2.msra.mxu0 0.0
      %1800 = vmatprep.subr.mxu0 0.0
      %1801 = vmatpush2.msra.mxu0 0.0
      %1802 = vmatprep.subr.mxu0 0.0
      %1803 = vmatpush2.msra.mxu0 0.0
      %1804 = vmatprep.subr.mxu0 0.0
      %1805 = vmatpush2.msra.mxu0 0.0
      %1806 = vmatprep.subr.mxu0 0.0
      %1807 = vmatpush2.msra.mxu0 0.0
      %1808 = vmatprep.subr.mxu0 0.0
      %1809 = vmatpush2.msra.mxu0 0.0
      %1810 = vmatprep.subr.mxu0 0.0
      %1811 = vmatpush2.msra.mxu0 0.0
      %1812 = vmatprep.subr.mxu0 0.0
      %1813 = vmatpush2.msra.mxu0 0.0
      %1814 = vmatprep.subr.mxu0 0.0
      %1815 = vmatpush2.msra.mxu0 0.0
      %1816 = vmatprep.subr.mxu0 0.0
      %1817 = vmatpush2.msra.mxu0 0.0
      %1818 = vmatprep.subr.mxu0 0.0
      %1819 = vmatpush2.msra.mxu0 0.0
      %1820 = vmatprep.subr.mxu0 0.0
      %1821 = vmatpush2.msra.mxu0 0.0
      %1822 = vmatprep.subr.mxu0 0.0
      %1823 = vmatpush2.msra.mxu0 0.0
      %1824 = vmatprep.subr.mxu0 0.0
      %1825 = vmatpush2.msra.mxu0 0.0
      %1826 = vmatprep.mubr.f32.mxu0 0.0
      %1827 = vmatmul.mubr.f32.gmra.mxu0 %v1751
      %v1828 = vpop.f32.mrf.mxu0
      %v1829 = vadd.f32 0.0, %v1828
      %v1830 = vpop.f32.mrf.mxu0
      %v1831 = vadd.f32 0.0, %v1830
      %1832 = vmatprep.mubr.f32.mxu0 0.0
      %1833 = vmatmul.mubr.f32.gmra.mxu0 %v1754
      %v1834 = vpop.f32.mrf.mxu0
      %v1835 = vadd.f32 0.0, %v1834
      %v1836 = vpop.f32.mrf.mxu0
      %v1837 = vadd.f32 0.0, %v1836
      %1838 = vmatprep.mubr.f32.mxu0 0.0
      %1839 = vmatmul.mubr.f32.gmra.mxu0 %v1757
      %v1840 = vpop.f32.mrf.mxu0
      %v1841 = vadd.f32 0.0, %v1840
      %v1842 = vpop.f32.mrf.mxu0
      %v1843 = vadd.f32 0.0, %v1842
      %1844 = vmatprep.mubr.f32.mxu0 0.0
      %1845 = vmatmul.mubr.f32.gmra.mxu0 %v1760
      %v1846 = vpop.f32.mrf.mxu0
      %v1847 = vadd.f32 0.0, %v1846
      %v1848 = vpop.f32.mrf.mxu0
      %v1849 = vadd.f32 0.0, %v1848
      %1850 = vdwg.mxu0
      %v1852 = vsel %vm1749, %v1719, 0
      %v1855 = vsel %vm1749, %v1720, 0
      %v1858 = vsel %vm1749, %v1721, 0
      %v1861 = vsel %vm1749, %v1722, 0
      %1863 = vmatprep.subr.mxu0 0.0
      %1864 = vmatpush1.msra.mxu0 0.0
      %1865 = vmatprep.subr.mxu0 0.0
      %1866 = vmatpush1.msra.mxu0 0.0
      %1867 = vmatprep.subr.mxu0 0.0
      %1868 = vmatpush1.msra.mxu0 0.0
      %1869 = vmatprep.subr.mxu0 0.0
      %1870 = vmatpush1.msra.mxu0 0.0
      %1871 = vmatprep.subr.mxu0 0.0
      %1872 = vmatpush1.msra.mxu0 0.0
      %1873 = vmatprep.subr.mxu0 0.0
      %1874 = vmatpush1.msra.mxu0 0.0
      %1875 = vmatprep.subr.mxu0 0.0
      %1876 = vmatpush1.msra.mxu0 0.0
      %1877 = vmatprep.subr.mxu0 0.0
      %1878 = vmatpush1.msra.mxu0 0.0
      %1879 = vmatprep.subr.mxu0 0.0
      %1880 = vmatpush1.msra.mxu0 0.0
      %1881 = vmatprep.subr.mxu0 0.0
      %1882 = vmatpush1.msra.mxu0 0.0
      %1883 = vmatprep.subr.mxu0 0.0
      %1884 = vmatpush1.msra.mxu0 0.0
      %1885 = vmatprep.subr.mxu0 0.0
      %1886 = vmatpush1.msra.mxu0 0.0
      %1887 = vmatprep.subr.mxu0 0.0
      %1888 = vmatpush1.msra.mxu0 0.0
      %1889 = vmatprep.subr.mxu0 0.0
      %1890 = vmatpush1.msra.mxu0 0.0
      %1891 = vmatprep.subr.mxu0 0.0
      %1892 = vmatpush1.msra.mxu0 0.0
      %1893 = vmatprep.subr.mxu0 %v1718
      %1894 = vmatpush1.msra.mxu0 %v1717
      %1895 = vmatprep.subr.mxu0 0.0
      %1896 = vmatpush2.msra.mxu0 0.0
      %1897 = vmatprep.subr.mxu0 0.0
      %1898 = vmatpush2.msra.mxu0 0.0
      %1899 = vmatprep.subr.mxu0 0.0
      %1900 = vmatpush2.msra.mxu0 0.0
      %1901 = vmatprep.subr.mxu0 0.0
      %1902 = vmatpush2.msra.mxu0 0.0
      %1903 = vmatprep.subr.mxu0 0.0
      %1904 = vmatpush2.msra.mxu0 0.0
      %1905 = vmatprep.subr.mxu0 0.0
      %1906 = vmatpush2.msra.mxu0 0.0
      %1907 = vmatprep.subr.mxu0 0.0
      %1908 = vmatpush2.msra.mxu0 0.0
      %1909 = vmatprep.subr.mxu0 0.0
      %1910 = vmatpush2.msra.mxu0 0.0
      %1911 = vmatprep.subr.mxu0 0.0
      %1912 = vmatpush2.msra.mxu0 0.0
      %1913 = vmatprep.subr.mxu0 0.0
      %1914 = vmatpush2.msra.mxu0 0.0
      %1915 = vmatprep.subr.mxu0 0.0
      %1916 = vmatpush2.msra.mxu0 0.0
      %1917 = vmatprep.subr.mxu0 0.0
      %1918 = vmatpush2.msra.mxu0 0.0
      %1919 = vmatprep.subr.mxu0 0.0
      %1920 = vmatpush2.msra.mxu0 0.0
      %1921 = vmatprep.subr.mxu0 0.0
      %1922 = vmatpush2.msra.mxu0 0.0
      %1923 = vmatprep.subr.mxu0 0.0
      %1924 = vmatpush2.msra.mxu0 0.0
      %1925 = vmatprep.subr.mxu0 0.0
      %1926 = vmatpush2.msra.mxu0 0.0
      %1927 = vmatprep.mubr.f32.mxu0 0.0
      %1928 = vmatmul.mubr.f32.gmra.mxu0 %v1852
      %v1929 = vpop.f32.mrf.mxu0
      %v1930 = vadd.f32 %v1829, %v1929
      %v1931 = vpop.f32.mrf.mxu0
      %v1932 = vadd.f32 %v1831, %v1931
      %1933 = vmatprep.mubr.f32.mxu0 0.0
      %1934 = vmatmul.mubr.f32.gmra.mxu0 %v1855
      %v1935 = vpop.f32.mrf.mxu0
      %v1936 = vadd.f32 %v1835, %v1935
      %v1937 = vpop.f32.mrf.mxu0
      %v1938 = vadd.f32 %v1837, %v1937
      %1939 = vmatprep.mubr.f32.mxu0 0.0
      %1940 = vmatmul.mubr.f32.gmra.mxu0 %v1858
      %v1941 = vpop.f32.mrf.mxu0
      %v1942 = vadd.f32 %v1841, %v1941
      %v1943 = vpop.f32.mrf.mxu0
      %v1944 = vadd.f32 %v1843, %v1943
      %1945 = vmatprep.mubr.f32.mxu0 0.0
      %1946 = vmatmul.mubr.f32.gmra.mxu0 %v1861
      %v1947 = vpop.f32.mrf.mxu0
      %v1948 = vadd.f32 %v1847, %v1947
      %v1949 = vpop.f32.mrf.mxu0
      %v1950 = vadd.f32 %v1849, %v1949
      %1951 = vdwg.mxu0
      %1952 = vrot.lane.b32.xlu0 %v1697, 15
      %v1953 = vpop.permute.xlu0 %1952
      %1954 = vrot.lane.b32.xlu0 %v1698, 15
      %v1955 = vpop.permute.xlu0 %1954
      %v1956 = vsel %vm731, %v1953, %v1955
      %v1957 = vsel %vm731, %v1955, %v1953
      %s1958 = scalar_lea.vmem %s9, 4
      %v1959 = vld [vmem:[%s1958] sm:$0x3]
      %v1961 = vlaneseq
      %v1962 = vshrl.u32 %v1961, 7
      %v1963 = vsub.s32 0, %v1962
      %v1964 = vrot.slane %v1959, %v1963
      %v1965 = vlaneseq
      %v1966 = vshrl.u32 %v1965, 7
      %v1967 = vsub.s32 1, %v1966
      %v1968 = vrot.slane %v1959, %v1967
      %v1971 = vmul.f32 %v1957, %v1964
      %v1972 = vmul.f32 %v1956, %v1968
      %s1973 = scalar_lea.vmem %s4, 64
      %v1974 = vld [vmem:[%s1973] sm:$0xff]
      %v1975 = vld [vmem:[%s1973 + $0x8] sm:$0xff]
      %v1976 = vld [vmem:[%s1973 + $0x10] sm:$0xff]
      %v1977 = vld [vmem:[%s1973 + $0x18] sm:$0xff]
      %v1979 = vsel %vm1749, %v1974, 0
      %v1982 = vsel %vm1749, %v1975, 0
      %v1985 = vsel %vm1749, %v1976, 0
      %v1988 = vsel %vm1749, %v1977, 0
      %1990 = vmatprep.subr.mxu0 0.0
      %1991 = vmatpush1.msra.mxu0 0.0
      %1992 = vmatprep.subr.mxu0 0.0
      %1993 = vmatpush1.msra.mxu0 0.0
      %1994 = vmatprep.subr.mxu0 0.0
      %1995 = vmatpush1.msra.mxu0 0.0
      %1996 = vmatprep.subr.mxu0 0.0
      %1997 = vmatpush1.msra.mxu0 0.0
      %1998 = vmatprep.subr.mxu0 0.0
      %1999 = vmatpush1.msra.mxu0 0.0
      %2000 = vmatprep.subr.mxu0 0.0
      %2001 = vmatpush1.msra.mxu0 0.0
      %2002 = vmatprep.subr.mxu0 0.0
      %2003 = vmatpush1.msra.mxu0 0.0
      %2004 = vmatprep.subr.mxu0 0.0
      %2005 = vmatpush1.msra.mxu0 0.0
      %2006 = vmatprep.subr.mxu0 0.0
      %2007 = vmatpush1.msra.mxu0 0.0
      %2008 = vmatprep.subr.mxu0 0.0
      %2009 = vmatpush1.msra.mxu0 0.0
      %2010 = vmatprep.subr.mxu0 0.0
      %2011 = vmatpush1.msra.mxu0 0.0
      %2012 = vmatprep.subr.mxu0 0.0
      %2013 = vmatpush1.msra.mxu0 0.0
      %2014 = vmatprep.subr.mxu0 0.0
      %2015 = vmatpush1.msra.mxu0 0.0
      %2016 = vmatprep.subr.mxu0 0.0
      %2017 = vmatpush1.msra.mxu0 0.0
      %2018 = vmatprep.subr.mxu0 0.0
      %2019 = vmatpush1.msra.mxu0 0.0
      %2020 = vmatprep.subr.mxu0 %v1972
      %2021 = vmatpush1.msra.mxu0 %v1971
      %2022 = vmatprep.subr.mxu0 0.0
      %2023 = vmatpush2.msra.mxu0 0.0
      %2024 = vmatprep.subr.mxu0 0.0
      %2025 = vmatpush2.msra.mxu0 0.0
      %2026 = vmatprep.subr.mxu0 0.0
      %2027 = vmatpush2.msra.mxu0 0.0
      %2028 = vmatprep.subr.mxu0 0.0
      %2029 = vmatpush2.msra.mxu0 0.0
      %2030 = vmatprep.subr.mxu0 0.0
      %2031 = vmatpush2.msra.mxu0 0.0
      %2032 = vmatprep.subr.mxu0 0.0
      %2033 = vmatpush2.msra.mxu0 0.0
      %2034 = vmatprep.subr.mxu0 0.0
      %2035 = vmatpush2.msra.mxu0 0.0
      %2036 = vmatprep.subr.mxu0 0.0
      %2037 = vmatpush2.msra.mxu0 0.0
      %2038 = vmatprep.subr.mxu0 0.0
      %2039 = vmatpush2.msra.mxu0 0.0
      %2040 = vmatprep.subr.mxu0 0.0
      %2041 = vmatpush2.msra.mxu0 0.0
      %2042 = vmatprep.subr.mxu0 0.0
      %2043 = vmatpush2.msra.mxu0 0.0
      %2044 = vmatprep.subr.mxu0 0.0
      %2045 = vmatpush2.msra.mxu0 0.0
      %2046 = vmatprep.subr.mxu0 0.0
      %2047 = vmatpush2.msra.mxu0 0.0
      %2048 = vmatprep.subr.mxu0 0.0
      %2049 = vmatpush2.msra.mxu0 0.0
      %2050 = vmatprep.subr.mxu0 0.0
      %2051 = vmatpush2.msra.mxu0 0.0
      %2052 = vmatprep.subr.mxu0 0.0
      %2053 = vmatpush2.msra.mxu0 0.0
      %2054 = vmatprep.mubr.f32.mxu0 0.0
      %2055 = vmatmul.mubr.f32.gmra.mxu0 %v1979
      %v2056 = vpop.f32.mrf.mxu0
      %v2057 = vadd.f32 0.0, %v2056
      %v2058 = vpop.f32.mrf.mxu0
      %v2059 = vadd.f32 0.0, %v2058
      %2060 = vmatprep.mubr.f32.mxu0 0.0
      %2061 = vmatmul.mubr.f32.gmra.mxu0 %v1982
      %v2062 = vpop.f32.mrf.mxu0
      %v2063 = vadd.f32 0.0, %v2062
      %v2064 = vpop.f32.mrf.mxu0
      %v2065 = vadd.f32 0.0, %v2064
      %2066 = vmatprep.mubr.f32.mxu0 0.0
      %2067 = vmatmul.mubr.f32.gmra.mxu0 %v1985
      %v2068 = vpop.f32.mrf.mxu0
      %v2069 = vadd.f32 0.0, %v2068
      %v2070 = vpop.f32.mrf.mxu0
      %v2071 = vadd.f32 0.0, %v2070
      %2072 = vmatprep.mubr.f32.mxu0 0.0
      %2073 = vmatmul.mubr.f32.gmra.mxu0 %v1988
      %v2074 = vpop.f32.mrf.mxu0
      %v2075 = vadd.f32 0.0, %v2074
      %v2076 = vpop.f32.mrf.mxu0
      %v2077 = vadd.f32 0.0, %v2076
      %2078 = vdwg.mxu0
      %v2079 = vadd.f32 %v1930, %v2057
      %v2080 = vadd.f32 %v1932, %v2059
      %v2081 = vadd.f32 %v1936, %v2063
      %v2082 = vadd.f32 %v1938, %v2065
      %v2083 = vadd.f32 %v1942, %v2069
      %v2084 = vadd.f32 %v1944, %v2071
      %v2085 = vadd.f32 %v1948, %v2075
      %v2086 = vadd.f32 %v1950, %v2077
      %2087 = vrot.lane.b32.xlu0 %v1697, 1
      %v2088 = vpop.permute.xlu0 %2087
      %2089 = vrot.lane.b32.xlu0 %v1698, 1
      %v2090 = vpop.permute.xlu0 %2089
      %v2091 = vsel %vm873, %v2088, %v2090
      %v2092 = vsel %vm873, %v2090, %v2088
      %s2093 = scalar_lea.vmem %s9, 6
      %v2094 = vld [vmem:[%s2093] sm:$0x3]
      %v2096 = vlaneseq
      %v2097 = vshrl.u32 %v2096, 7
      %v2098 = vsub.s32 0, %v2097
      %v2099 = vrot.slane %v2094, %v2098
      %v2100 = vlaneseq
      %v2101 = vshrl.u32 %v2100, 7
      %v2102 = vsub.s32 1, %v2101
      %v2103 = vrot.slane %v2094, %v2102
      %v2106 = vmul.f32 %v2092, %v2099
      %v2107 = vmul.f32 %v2091, %v2103
      %s2108 = scalar_lea.vmem %s4, 96
      %v2109 = vld [vmem:[%s2108] sm:$0xff]
      %v2110 = vld [vmem:[%s2108 + $0x8] sm:$0xff]
      %v2111 = vld [vmem:[%s2108 + $0x10] sm:$0xff]
      %v2112 = vld [vmem:[%s2108 + $0x18] sm:$0xff]
      %v2114 = vsel %vm1749, %v2109, 0
      %v2117 = vsel %vm1749, %v2110, 0
      %v2120 = vsel %vm1749, %v2111, 0
      %v2123 = vsel %vm1749, %v2112, 0
      %2125 = vmatprep.subr.mxu0 0.0
      %2126 = vmatpush1.msra.mxu0 0.0
      %2127 = vmatprep.subr.mxu0 0.0
      %2128 = vmatpush1.msra.mxu0 0.0
      %2129 = vmatprep.subr.mxu0 0.0
      %2130 = vmatpush1.msra.mxu0 0.0
      %2131 = vmatprep.subr.mxu0 0.0
      %2132 = vmatpush1.msra.mxu0 0.0
      %2133 = vmatprep.subr.mxu0 0.0
      %2134 = vmatpush1.msra.mxu0 0.0
      %2135 = vmatprep.subr.mxu0 0.0
      %2136 = vmatpush1.msra.mxu0 0.0
      %2137 = vmatprep.subr.mxu0 0.0
      %2138 = vmatpush1.msra.mxu0 0.0
      %2139 = vmatprep.subr.mxu0 0.0
      %2140 = vmatpush1.msra.mxu0 0.0
      %2141 = vmatprep.subr.mxu0 0.0
      %2142 = vmatpush1.msra.mxu0 0.0
      %2143 = vmatprep.subr.mxu0 0.0
      %2144 = vmatpush1.msra.mxu0 0.0
      %2145 = vmatprep.subr.mxu0 0.0
      %2146 = vmatpush1.msra.mxu0 0.0
      %2147 = vmatprep.subr.mxu0 0.0
      %2148 = vmatpush1.msra.mxu0 0.0
      %2149 = vmatprep.subr.mxu0 0.0
      %2150 = vmatpush1.msra.mxu0 0.0
      %2151 = vmatprep.subr.mxu0 0.0
      %2152 = vmatpush1.msra.mxu0 0.0
      %2153 = vmatprep.subr.mxu0 0.0
      %2154 = vmatpush1.msra.mxu0 0.0
      %2155 = vmatprep.subr.mxu0 %v2107
      %2156 = vmatpush1.msra.mxu0 %v2106
      %2157 = vmatprep.subr.mxu0 0.0
      %2158 = vmatpush2.msra.mxu0 0.0
      %2159 = vmatprep.subr.mxu0 0.0
      %2160 = vmatpush2.msra.mxu0 0.0
      %2161 = vmatprep.subr.mxu0 0.0
      %2162 = vmatpush2.msra.mxu0 0.0
      %2163 = vmatprep.subr.mxu0 0.0
      %2164 = vmatpush2.msra.mxu0 0.0
      %2165 = vmatprep.subr.mxu0 0.0
      %2166 = vmatpush2.msra.mxu0 0.0
      %2167 = vmatprep.subr.mxu0 0.0
      %2168 = vmatpush2.msra.mxu0 0.0
      %2169 = vmatprep.subr.mxu0 0.0
      %2170 = vmatpush2.msra.mxu0 0.0
      %2171 = vmatprep.subr.mxu0 0.0
      %2172 = vmatpush2.msra.mxu0 0.0
      %2173 = vmatprep.subr.mxu0 0.0
      %2174 = vmatpush2.msra.mxu0 0.0
      %2175 = vmatprep.subr.mxu0 0.0
      %2176 = vmatpush2.msra.mxu0 0.0
      %2177 = vmatprep.subr.mxu0 0.0
      %2178 = vmatpush2.msra.mxu0 0.0
      %2179 = vmatprep.subr.mxu0 0.0
      %2180 = vmatpush2.msra.mxu0 0.0
      %2181 = vmatprep.subr.mxu0 0.0
      %2182 = vmatpush2.msra.mxu0 0.0
      %2183 = vmatprep.subr.mxu0 0.0
      %2184 = vmatpush2.msra.mxu0 0.0
      %2185 = vmatprep.subr.mxu0 0.0
      %2186 = vmatpush2.msra.mxu0 0.0
      %2187 = vmatprep.subr.mxu0 0.0
      %2188 = vmatpush2.msra.mxu0 0.0
      %2189 = vmatprep.mubr.f32.mxu0 0.0
      %2190 = vmatmul.mubr.f32.gmra.mxu0 %v2114
      %v2191 = vpop.f32.mrf.mxu0
      %v2192 = vadd.f32 0.0, %v2191
      %v2193 = vpop.f32.mrf.mxu0
      %v2194 = vadd.f32 0.0, %v2193
      %2195 = vmatprep.mubr.f32.mxu0 0.0
      %2196 = vmatmul.mubr.f32.gmra.mxu0 %v2117
      %v2197 = vpop.f32.mrf.mxu0
      %v2198 = vadd.f32 0.0, %v2197
      %v2199 = vpop.f32.mrf.mxu0
      %v2200 = vadd.f32 0.0, %v2199
      %2201 = vmatprep.mubr.f32.mxu0 0.0
      %2202 = vmatmul.mubr.f32.gmra.mxu0 %v2120
      %v2203 = vpop.f32.mrf.mxu0
      %v2204 = vadd.f32 0.0, %v2203
      %v2205 = vpop.f32.mrf.mxu0
      %v2206 = vadd.f32 0.0, %v2205
      %2207 = vmatprep.mubr.f32.mxu0 0.0
      %2208 = vmatmul.mubr.f32.gmra.mxu0 %v2123
      %v2209 = vpop.f32.mrf.mxu0
      %v2210 = vadd.f32 0.0, %v2209
      %v2211 = vpop.f32.mrf.mxu0
      %v2212 = vadd.f32 0.0, %v2211
      %2213 = vdwg.mxu0
      %v2214 = vadd.f32 %v2079, %v2192
      %v2215 = vadd.f32 %v2080, %v2194
      %v2216 = vadd.f32 %v2081, %v2198
      %v2217 = vadd.f32 %v2082, %v2200
      %v2218 = vadd.f32 %v2083, %v2204
      %v2219 = vadd.f32 %v2084, %v2206
      %v2220 = vadd.f32 %v2085, %v2210
      %v2221 = vadd.f32 %v2086, %v2212
      %s2222 = scalar_lea.vmem %s4, 128
      %v2223 = vld [vmem:[%s2222] sm:$0xff]
      %v2224 = vld [vmem:[%s2222 + $0x8] sm:$0xff]
      %v2225 = vld [vmem:[%s2222 + $0x10] sm:$0xff]
      %v2226 = vld [vmem:[%s2222 + $0x18] sm:$0xff]
      %v2228 = vsel %vm1749, %v2223, 0
      %v2231 = vsel %vm1749, %v2224, 0
      %v2234 = vsel %vm1749, %v2225, 0
      %v2237 = vsel %vm1749, %v2226, 0
      %2239 = vmatprep.subr.mxu0 0.0
      %2240 = vmatpush1.msra.mxu0 0.0
      %2241 = vmatprep.subr.mxu0 0.0
      %2242 = vmatpush1.msra.mxu0 0.0
      %2243 = vmatprep.subr.mxu0 0.0
      %2244 = vmatpush1.msra.mxu0 0.0
      %2245 = vmatprep.subr.mxu0 0.0
      %2246 = vmatpush1.msra.mxu0 0.0
      %2247 = vmatprep.subr.mxu0 0.0
      %2248 = vmatpush1.msra.mxu0 0.0
      %2249 = vmatprep.subr.mxu0 0.0
      %2250 = vmatpush1.msra.mxu0 0.0
      %2251 = vmatprep.subr.mxu0 0.0
      %2252 = vmatpush1.msra.mxu0 0.0
      %2253 = vmatprep.subr.mxu0 0.0
      %2254 = vmatpush1.msra.mxu0 0.0
      %2255 = vmatprep.subr.mxu0 0.0
      %2256 = vmatpush1.msra.mxu0 0.0
      %2257 = vmatprep.subr.mxu0 0.0
      %2258 = vmatpush1.msra.mxu0 0.0
      %2259 = vmatprep.subr.mxu0 0.0
      %2260 = vmatpush1.msra.mxu0 0.0
      %2261 = vmatprep.subr.mxu0 0.0
      %2262 = vmatpush1.msra.mxu0 0.0
      %2263 = vmatprep.subr.mxu0 0.0
      %2264 = vmatpush1.msra.mxu0 0.0
      %2265 = vmatprep.subr.mxu0 0.0
      %2266 = vmatpush1.msra.mxu0 0.0
      %2267 = vmatprep.subr.mxu0 0.0
      %2268 = vmatpush1.msra.mxu0 0.0
      %2269 = vmatprep.subr.mxu0 %v1698
      %2270 = vmatpush1.msra.mxu0 %v1697
      %2271 = vmatprep.subr.mxu0 0.0
      %2272 = vmatpush2.msra.mxu0 0.0
      %2273 = vmatprep.subr.mxu0 0.0
      %2274 = vmatpush2.msra.mxu0 0.0
      %2275 = vmatprep.subr.mxu0 0.0
      %2276 = vmatpush2.msra.mxu0 0.0
      %2277 = vmatprep.subr.mxu0 0.0
      %2278 = vmatpush2.msra.mxu0 0.0
      %2279 = vmatprep.subr.mxu0 0.0
      %2280 = vmatpush2.msra.mxu0 0.0
      %2281 = vmatprep.subr.mxu0 0.0
      %2282 = vmatpush2.msra.mxu0 0.0
      %2283 = vmatprep.subr.mxu0 0.0
      %2284 = vmatpush2.msra.mxu0 0.0
      %2285 = vmatprep.subr.mxu0 0.0
      %2286 = vmatpush2.msra.mxu0 0.0
      %2287 = vmatprep.subr.mxu0 0.0
      %2288 = vmatpush2.msra.mxu0 0.0
      %2289 = vmatprep.subr.mxu0 0.0
      %2290 = vmatpush2.msra.mxu0 0.0
      %2291 = vmatprep.subr.mxu0 0.0
      %2292 = vmatpush2.msra.mxu0 0.0
      %2293 = vmatprep.subr.mxu0 0.0
      %2294 = vmatpush2.msra.mxu0 0.0
      %2295 = vmatprep.subr.mxu0 0.0
      %2296 = vmatpush2.msra.mxu0 0.0
      %2297 = vmatprep.subr.mxu0 0.0
      %2298 = vmatpush2.msra.mxu0 0.0
      %2299 = vmatprep.subr.mxu0 0.0
      %2300 = vmatpush2.msra.mxu0 0.0
      %2301 = vmatprep.subr.mxu0 0.0
      %2302 = vmatpush2.msra.mxu0 0.0
      %2303 = vmatprep.mubr.f32.mxu0 0.0
      %2304 = vmatmul.mubr.f32.gmra.mxu0 %v2228
      %v2305 = vpop.f32.mrf.mxu0
      %v2306 = vadd.f32 0.0, %v2305
      %v2307 = vpop.f32.mrf.mxu0
      %v2308 = vadd.f32 0.0, %v2307
      %2309 = vmatprep.mubr.f32.mxu0 0.0
      %2310 = vmatmul.mubr.f32.gmra.mxu0 %v2231
      %v2311 = vpop.f32.mrf.mxu0
      %v2312 = vadd.f32 0.0, %v2311
      %v2313 = vpop.f32.mrf.mxu0
      %v2314 = vadd.f32 0.0, %v2313
      %2315 = vmatprep.mubr.f32.mxu0 0.0
      %2316 = vmatmul.mubr.f32.gmra.mxu0 %v2234
      %v2317 = vpop.f32.mrf.mxu0
      %v2318 = vadd.f32 0.0, %v2317
      %v2319 = vpop.f32.mrf.mxu0
      %v2320 = vadd.f32 0.0, %v2319
      %2321 = vmatprep.mubr.f32.mxu0 0.0
      %2322 = vmatmul.mubr.f32.gmra.mxu0 %v2237
      %v2323 = vpop.f32.mrf.mxu0
      %v2324 = vadd.f32 0.0, %v2323
      %v2325 = vpop.f32.mrf.mxu0
      %v2326 = vadd.f32 0.0, %v2325
      %2327 = vdwg.mxu0
      %v2328 = vadd.f32 %v2214, %v2306
      %v2329 = vadd.f32 %v2215, %v2308
      %v2330 = vadd.f32 %v2216, %v2312
      %v2331 = vadd.f32 %v2217, %v2314
      %v2332 = vadd.f32 %v2218, %v2318
      %v2333 = vadd.f32 %v2219, %v2320
      %v2334 = vadd.f32 %v2220, %v2324
      %v2335 = vadd.f32 %v2221, %v2326
      %2336 = vrot.lane.b32.xlu0 %v1697, 127
      %v2337 = vpop.permute.xlu0 %2336
      %2338 = vrot.lane.b32.xlu0 %v1698, 127
      %v2339 = vpop.permute.xlu0 %2338
      %v2340 = vsel %vm1133, %v2337, %v2339
      %v2341 = vsel %vm1133, %v2339, %v2337
      %s2342 = scalar_lea.vmem %s9, 10
      %v2343 = vld [vmem:[%s2342] sm:$0x3]
      %v2345 = vlaneseq
      %v2346 = vshrl.u32 %v2345, 7
      %v2347 = vsub.s32 0, %v2346
      %v2348 = vrot.slane %v2343, %v2347
      %v2349 = vlaneseq
      %v2350 = vshrl.u32 %v2349, 7
      %v2351 = vsub.s32 1, %v2350
      %v2352 = vrot.slane %v2343, %v2351
      %v2355 = vmul.f32 %v2340, %v2348
      %v2356 = vmul.f32 %v2341, %v2352
      %s2357 = scalar_lea.vmem %s4, 160
      %v2358 = vld [vmem:[%s2357] sm:$0xff]
      %v2359 = vld [vmem:[%s2357 + $0x8] sm:$0xff]
      %v2360 = vld [vmem:[%s2357 + $0x10] sm:$0xff]
      %v2361 = vld [vmem:[%s2357 + $0x18] sm:$0xff]
      %v2363 = vsel %vm1749, %v2358, 0
      %v2366 = vsel %vm1749, %v2359, 0
      %v2369 = vsel %vm1749, %v2360, 0
      %v2372 = vsel %vm1749, %v2361, 0
      %2374 = vmatprep.subr.mxu0 0.0
      %2375 = vmatpush1.msra.mxu0 0.0
      %2376 = vmatprep.subr.mxu0 0.0
      %2377 = vmatpush1.msra.mxu0 0.0
      %2378 = vmatprep.subr.mxu0 0.0
      %2379 = vmatpush1.msra.mxu0 0.0
      %2380 = vmatprep.subr.mxu0 0.0
      %2381 = vmatpush1.msra.mxu0 0.0
      %2382 = vmatprep.subr.mxu0 0.0
      %2383 = vmatpush1.msra.mxu0 0.0
      %2384 = vmatprep.subr.mxu0 0.0
      %2385 = vmatpush1.msra.mxu0 0.0
      %2386 = vmatprep.subr.mxu0 0.0
      %2387 = vmatpush1.msra.mxu0 0.0
      %2388 = vmatprep.subr.mxu0 0.0
      %2389 = vmatpush1.msra.mxu0 0.0
      %2390 = vmatprep.subr.mxu0 0.0
      %2391 = vmatpush1.msra.mxu0 0.0
      %2392 = vmatprep.subr.mxu0 0.0
      %2393 = vmatpush1.msra.mxu0 0.0
      %2394 = vmatprep.subr.mxu0 0.0
      %2395 = vmatpush1.msra.mxu0 0.0
      %2396 = vmatprep.subr.mxu0 0.0
      %2397 = vmatpush1.msra.mxu0 0.0
      %2398 = vmatprep.subr.mxu0 0.0
      %2399 = vmatpush1.msra.mxu0 0.0
      %2400 = vmatprep.subr.mxu0 0.0
      %2401 = vmatpush1.msra.mxu0 0.0
      %2402 = vmatprep.subr.mxu0 0.0
      %2403 = vmatpush1.msra.mxu0 0.0
      %2404 = vmatprep.subr.mxu0 %v2356
      %2405 = vmatpush1.msra.mxu0 %v2355
      %2406 = vmatprep.subr.mxu0 0.0
      %2407 = vmatpush2.msra.mxu0 0.0
      %2408 = vmatprep.subr.mxu0 0.0
      %2409 = vmatpush2.msra.mxu0 0.0
      %2410 = vmatprep.subr.mxu0 0.0
      %2411 = vmatpush2.msra.mxu0 0.0
      %2412 = vmatprep.subr.mxu0 0.0
      %2413 = vmatpush2.msra.mxu0 0.0
      %2414 = vmatprep.subr.mxu0 0.0
      %2415 = vmatpush2.msra.mxu0 0.0
      %2416 = vmatprep.subr.mxu0 0.0
      %2417 = vmatpush2.msra.mxu0 0.0
      %2418 = vmatprep.subr.mxu0 0.0
      %2419 = vmatpush2.msra.mxu0 0.0
      %2420 = vmatprep.subr.mxu0 0.0
      %2421 = vmatpush2.msra.mxu0 0.0
      %2422 = vmatprep.subr.mxu0 0.0
      %2423 = vmatpush2.msra.mxu0 0.0
      %2424 = vmatprep.subr.mxu0 0.0
      %2425 = vmatpush2.msra.mxu0 0.0
      %2426 = vmatprep.subr.mxu0 0.0
      %2427 = vmatpush2.msra.mxu0 0.0
      %2428 = vmatprep.subr.mxu0 0.0
      %2429 = vmatpush2.msra.mxu0 0.0
      %2430 = vmatprep.subr.mxu0 0.0
      %2431 = vmatpush2.msra.mxu0 0.0
      %2432 = vmatprep.subr.mxu0 0.0
      %2433 = vmatpush2.msra.mxu0 0.0
      %2434 = vmatprep.subr.mxu0 0.0
      %2435 = vmatpush2.msra.mxu0 0.0
      %2436 = vmatprep.subr.mxu0 0.0
      %2437 = vmatpush2.msra.mxu0 0.0
      %2438 = vmatprep.mubr.f32.mxu0 0.0
      %2439 = vmatmul.mubr.f32.gmra.mxu0 %v2363
      %v2440 = vpop.f32.mrf.mxu0
      %v2441 = vadd.f32 0.0, %v2440
      %v2442 = vpop.f32.mrf.mxu0
      %v2443 = vadd.f32 0.0, %v2442
      %2444 = vmatprep.mubr.f32.mxu0 0.0
      %2445 = vmatmul.mubr.f32.gmra.mxu0 %v2366
      %v2446 = vpop.f32.mrf.mxu0
      %v2447 = vadd.f32 0.0, %v2446
      %v2448 = vpop.f32.mrf.mxu0
      %v2449 = vadd.f32 0.0, %v2448
      %2450 = vmatprep.mubr.f32.mxu0 0.0
      %2451 = vmatmul.mubr.f32.gmra.mxu0 %v2369
      %v2452 = vpop.f32.mrf.mxu0
      %v2453 = vadd.f32 0.0, %v2452
      %v2454 = vpop.f32.mrf.mxu0
      %v2455 = vadd.f32 0.0, %v2454
      %2456 = vmatprep.mubr.f32.mxu0 0.0
      %2457 = vmatmul.mubr.f32.gmra.mxu0 %v2372
      %v2458 = vpop.f32.mrf.mxu0
      %v2459 = vadd.f32 0.0, %v2458
      %v2460 = vpop.f32.mrf.mxu0
      %v2461 = vadd.f32 0.0, %v2460
      %2462 = vdwg.mxu0
      %v2463 = vadd.f32 %v2328, %v2441
      %v2464 = vadd.f32 %v2329, %v2443
      %v2465 = vadd.f32 %v2330, %v2447
      %v2466 = vadd.f32 %v2331, %v2449
      %v2467 = vadd.f32 %v2332, %v2453
      %v2468 = vadd.f32 %v2333, %v2455
      %v2469 = vadd.f32 %v2334, %v2459
      %v2470 = vadd.f32 %v2335, %v2461
      %2471 = vrot.lane.b32.xlu0 %v1697, 113
      %v2472 = vpop.permute.xlu0 %2471
      %2473 = vrot.lane.b32.xlu0 %v1698, 113
      %v2474 = vpop.permute.xlu0 %2473
      %v2475 = vsel %vm1275, %v2472, %v2474
      %v2476 = vsel %vm1275, %v2474, %v2472
      %s2477 = scalar_lea.vmem %s9, 12
      %v2478 = vld [vmem:[%s2477] sm:$0x3]
      %v2480 = vlaneseq
      %v2481 = vshrl.u32 %v2480, 7
      %v2482 = vsub.s32 0, %v2481
      %v2483 = vrot.slane %v2478, %v2482
      %v2484 = vlaneseq
      %v2485 = vshrl.u32 %v2484, 7
      %v2486 = vsub.s32 1, %v2485
      %v2487 = vrot.slane %v2478, %v2486
      %v2490 = vmul.f32 %v2475, %v2483
      %v2491 = vmul.f32 %v2476, %v2487
      %s2492 = scalar_lea.vmem %s4, 192
      %v2493 = vld [vmem:[%s2492] sm:$0xff]
      %v2494 = vld [vmem:[%s2492 + $0x8] sm:$0xff]
      %v2495 = vld [vmem:[%s2492 + $0x10] sm:$0xff]
      %v2496 = vld [vmem:[%s2492 + $0x18] sm:$0xff]
      %v2498 = vsel %vm1749, %v2493, 0
      %v2501 = vsel %vm1749, %v2494, 0
      %v2504 = vsel %vm1749, %v2495, 0
      %v2507 = vsel %vm1749, %v2496, 0
      %2509 = vmatprep.subr.mxu0 0.0
      %2510 = vmatpush1.msra.mxu0 0.0
      %2511 = vmatprep.subr.mxu0 0.0
      %2512 = vmatpush1.msra.mxu0 0.0
      %2513 = vmatprep.subr.mxu0 0.0
      %2514 = vmatpush1.msra.mxu0 0.0
      %2515 = vmatprep.subr.mxu0 0.0
      %2516 = vmatpush1.msra.mxu0 0.0
      %2517 = vmatprep.subr.mxu0 0.0
      %2518 = vmatpush1.msra.mxu0 0.0
      %2519 = vmatprep.subr.mxu0 0.0
      %2520 = vmatpush1.msra.mxu0 0.0
      %2521 = vmatprep.subr.mxu0 0.0
      %2522 = vmatpush1.msra.mxu0 0.0
      %2523 = vmatprep.subr.mxu0 0.0
      %2524 = vmatpush1.msra.mxu0 0.0
      %2525 = vmatprep.subr.mxu0 0.0
      %2526 = vmatpush1.msra.mxu0 0.0
      %2527 = vmatprep.subr.mxu0 0.0
      %2528 = vmatpush1.msra.mxu0 0.0
      %2529 = vmatprep.subr.mxu0 0.0
      %2530 = vmatpush1.msra.mxu0 0.0
      %2531 = vmatprep.subr.mxu0 0.0
      %2532 = vmatpush1.msra.mxu0 0.0
      %2533 = vmatprep.subr.mxu0 0.0
      %2534 = vmatpush1.msra.mxu0 0.0
      %2535 = vmatprep.subr.mxu0 0.0
      %2536 = vmatpush1.msra.mxu0 0.0
      %2537 = vmatprep.subr.mxu0 0.0
      %2538 = vmatpush1.msra.mxu0 0.0
      %2539 = vmatprep.subr.mxu0 %v2491
      %2540 = vmatpush1.msra.mxu0 %v2490
      %2541 = vmatprep.subr.mxu0 0.0
      %2542 = vmatpush2.msra.mxu0 0.0
      %2543 = vmatprep.subr.mxu0 0.0
      %2544 = vmatpush2.msra.mxu0 0.0
      %2545 = vmatprep.subr.mxu0 0.0
      %2546 = vmatpush2.msra.mxu0 0.0
      %2547 = vmatprep.subr.mxu0 0.0
      %2548 = vmatpush2.msra.mxu0 0.0
      %2549 = vmatprep.subr.mxu0 0.0
      %2550 = vmatpush2.msra.mxu0 0.0
      %2551 = vmatprep.subr.mxu0 0.0
      %2552 = vmatpush2.msra.mxu0 0.0
      %2553 = vmatprep.subr.mxu0 0.0
      %2554 = vmatpush2.msra.mxu0 0.0
      %2555 = vmatprep.subr.mxu0 0.0
      %2556 = vmatpush2.msra.mxu0 0.0
      %2557 = vmatprep.subr.mxu0 0.0
      %2558 = vmatpush2.msra.mxu0 0.0
      %2559 = vmatprep.subr.mxu0 0.0
      %2560 = vmatpush2.msra.mxu0 0.0
      %2561 = vmatprep.subr.mxu0 0.0
      %2562 = vmatpush2.msra.mxu0 0.0
      %2563 = vmatprep.subr.mxu0 0.0
      %2564 = vmatpush2.msra.mxu0 0.0
      %2565 = vmatprep.subr.mxu0 0.0
      %2566 = vmatpush2.msra.mxu0 0.0
      %2567 = vmatprep.subr.mxu0 0.0
      %2568 = vmatpush2.msra.mxu0 0.0
      %2569 = vmatprep.subr.mxu0 0.0
      %2570 = vmatpush2.msra.mxu0 0.0
      %2571 = vmatprep.subr.mxu0 0.0
      %2572 = vmatpush2.msra.mxu0 0.0
      %2573 = vmatprep.mubr.f32.mxu0 0.0
      %2574 = vmatmul.mubr.f32.gmra.mxu0 %v2498
      %v2575 = vpop.f32.mrf.mxu0
      %v2576 = vadd.f32 0.0, %v2575
      %v2577 = vpop.f32.mrf.mxu0
      %v2578 = vadd.f32 0.0, %v2577
      %2579 = vmatprep.mubr.f32.mxu0 0.0
      %2580 = vmatmul.mubr.f32.gmra.mxu0 %v2501
      %v2581 = vpop.f32.mrf.mxu0
      %v2582 = vadd.f32 0.0, %v2581
      %v2583 = vpop.f32.mrf.mxu0
      %v2584 = vadd.f32 0.0, %v2583
      %2585 = vmatprep.mubr.f32.mxu0 0.0
      %2586 = vmatmul.mubr.f32.gmra.mxu0 %v2504
      %v2587 = vpop.f32.mrf.mxu0
      %v2588 = vadd.f32 0.0, %v2587
      %v2589 = vpop.f32.mrf.mxu0
      %v2590 = vadd.f32 0.0, %v2589
      %2591 = vmatprep.mubr.f32.mxu0 0.0
      %2592 = vmatmul.mubr.f32.gmra.mxu0 %v2507
      %v2593 = vpop.f32.mrf.mxu0
      %v2594 = vadd.f32 0.0, %v2593
      %v2595 = vpop.f32.mrf.mxu0
      %v2596 = vadd.f32 0.0, %v2595
      %2597 = vdwg.mxu0
      %v2598 = vadd.f32 %v2463, %v2576
      %v2599 = vadd.f32 %v2464, %v2578
      %v2600 = vadd.f32 %v2465, %v2582
      %v2601 = vadd.f32 %v2466, %v2584
      %v2602 = vadd.f32 %v2467, %v2588
      %v2603 = vadd.f32 %v2468, %v2590
      %v2604 = vadd.f32 %v2469, %v2594
      %v2605 = vadd.f32 %v2470, %v2596
      %2606 = vrot.lane.b32.xlu0 %v1697, 112
      %v2607 = vpop.permute.xlu0 %2606
      %2608 = vrot.lane.b32.xlu0 %v1698, 112
      %v2609 = vpop.permute.xlu0 %2608
      %v2610 = vsel %vm1417, %v2607, %v2609
      %v2611 = vsel %vm1417, %v2609, %v2607
      %s2612 = scalar_lea.vmem %s9, 14
      %v2613 = vld [vmem:[%s2612] sm:$0x3]
      %v2615 = vlaneseq
      %v2616 = vshrl.u32 %v2615, 7
      %v2617 = vsub.s32 0, %v2616
      %v2618 = vrot.slane %v2613, %v2617
      %v2619 = vlaneseq
      %v2620 = vshrl.u32 %v2619, 7
      %v2621 = vsub.s32 1, %v2620
      %v2622 = vrot.slane %v2613, %v2621
      %v2625 = vmul.f32 %v2610, %v2618
      %v2626 = vmul.f32 %v2611, %v2622
      %s2627 = scalar_lea.vmem %s4, 224
      %v2628 = vld [vmem:[%s2627] sm:$0xff]
      %v2629 = vld [vmem:[%s2627 + $0x8] sm:$0xff]
      %v2630 = vld [vmem:[%s2627 + $0x10] sm:$0xff]
      %v2631 = vld [vmem:[%s2627 + $0x18] sm:$0xff]
      %v2633 = vsel %vm1749, %v2628, 0
      %v2636 = vsel %vm1749, %v2629, 0
      %v2639 = vsel %vm1749, %v2630, 0
      %v2642 = vsel %vm1749, %v2631, 0
      %2644 = vmatprep.subr.mxu0 0.0
      %2645 = vmatpush1.msra.mxu0 0.0
      %2646 = vmatprep.subr.mxu0 0.0
      %2647 = vmatpush1.msra.mxu0 0.0
      %2648 = vmatprep.subr.mxu0 0.0
      %2649 = vmatpush1.msra.mxu0 0.0
      %2650 = vmatprep.subr.mxu0 0.0
      %2651 = vmatpush1.msra.mxu0 0.0
      %2652 = vmatprep.subr.mxu0 0.0
      %2653 = vmatpush1.msra.mxu0 0.0
      %2654 = vmatprep.subr.mxu0 0.0
      %2655 = vmatpush1.msra.mxu0 0.0
      %2656 = vmatprep.subr.mxu0 0.0
      %2657 = vmatpush1.msra.mxu0 0.0
      %2658 = vmatprep.subr.mxu0 0.0
      %2659 = vmatpush1.msra.mxu0 0.0
      %2660 = vmatprep.subr.mxu0 0.0
      %2661 = vmatpush1.msra.mxu0 0.0
      %2662 = vmatprep.subr.mxu0 0.0
      %2663 = vmatpush1.msra.mxu0 0.0
      %2664 = vmatprep.subr.mxu0 0.0
      %2665 = vmatpush1.msra.mxu0 0.0
      %2666 = vmatprep.subr.mxu0 0.0
      %2667 = vmatpush1.msra.mxu0 0.0
      %2668 = vmatprep.subr.mxu0 0.0
      %2669 = vmatpush1.msra.mxu0 0.0
      %2670 = vmatprep.subr.mxu0 0.0
      %2671 = vmatpush1.msra.mxu0 0.0
      %2672 = vmatprep.subr.mxu0 0.0
      %2673 = vmatpush1.msra.mxu0 0.0
      %2674 = vmatprep.subr.mxu0 %v2626
      %2675 = vmatpush1.msra.mxu0 %v2625
      %2676 = vmatprep.subr.mxu0 0.0
      %2677 = vmatpush2.msra.mxu0 0.0
      %2678 = vmatprep.subr.mxu0 0.0
      %2679 = vmatpush2.msra.mxu0 0.0
      %2680 = vmatprep.subr.mxu0 0.0
      %2681 = vmatpush2.msra.mxu0 0.0
      %2682 = vmatprep.subr.mxu0 0.0
      %2683 = vmatpush2.msra.mxu0 0.0
      %2684 = vmatprep.subr.mxu0 0.0
      %2685 = vmatpush2.msra.mxu0 0.0
      %2686 = vmatprep.subr.mxu0 0.0
      %2687 = vmatpush2.msra.mxu0 0.0
      %2688 = vmatprep.subr.mxu0 0.0
      %2689 = vmatpush2.msra.mxu0 0.0
      %2690 = vmatprep.subr.mxu0 0.0
      %2691 = vmatpush2.msra.mxu0 0.0
      %2692 = vmatprep.subr.mxu0 0.0
      %2693 = vmatpush2.msra.mxu0 0.0
      %2694 = vmatprep.subr.mxu0 0.0
      %2695 = vmatpush2.msra.mxu0 0.0
      %2696 = vmatprep.subr.mxu0 0.0
      %2697 = vmatpush2.msra.mxu0 0.0
      %2698 = vmatprep.subr.mxu0 0.0
      %2699 = vmatpush2.msra.mxu0 0.0
      %2700 = vmatprep.subr.mxu0 0.0
      %2701 = vmatpush2.msra.mxu0 0.0
      %2702 = vmatprep.subr.mxu0 0.0
      %2703 = vmatpush2.msra.mxu0 0.0
      %2704 = vmatprep.subr.mxu0 0.0
      %2705 = vmatpush2.msra.mxu0 0.0
      %2706 = vmatprep.subr.mxu0 0.0
      %2707 = vmatpush2.msra.mxu0 0.0
      %2708 = vmatprep.mubr.f32.mxu0 0.0
      %2709 = vmatmul.mubr.f32.gmra.mxu0 %v2633
      %v2710 = vpop.f32.mrf.mxu0
      %v2711 = vadd.f32 0.0, %v2710
      %v2712 = vpop.f32.mrf.mxu0
      %v2713 = vadd.f32 0.0, %v2712
      %2714 = vmatprep.mubr.f32.mxu0 0.0
      %2715 = vmatmul.mubr.f32.gmra.mxu0 %v2636
      %v2716 = vpop.f32.mrf.mxu0
      %v2717 = vadd.f32 0.0, %v2716
      %v2718 = vpop.f32.mrf.mxu0
      %v2719 = vadd.f32 0.0, %v2718
      %2720 = vmatprep.mubr.f32.mxu0 0.0
      %2721 = vmatmul.mubr.f32.gmra.mxu0 %v2639
      %v2722 = vpop.f32.mrf.mxu0
      %v2723 = vadd.f32 0.0, %v2722
      %v2724 = vpop.f32.mrf.mxu0
      %v2725 = vadd.f32 0.0, %v2724
      %2726 = vmatprep.mubr.f32.mxu0 0.0
      %2727 = vmatmul.mubr.f32.gmra.mxu0 %v2642
      %v2728 = vpop.f32.mrf.mxu0
      %v2729 = vadd.f32 0.0, %v2728
      %v2730 = vpop.f32.mrf.mxu0
      %v2731 = vadd.f32 0.0, %v2730
      %2732 = vdwg.mxu0
      %v2733 = vadd.f32 %v2598, %v2711
      %v2734 = vadd.f32 %v2599, %v2713
      %v2735 = vadd.f32 %v2600, %v2717
      %v2736 = vadd.f32 %v2601, %v2719
      %v2737 = vadd.f32 %v2602, %v2723
      %v2738 = vadd.f32 %v2603, %v2725
      %v2739 = vadd.f32 %v2604, %v2729
      %v2740 = vadd.f32 %v2605, %v2731
      %2741 = vrot.lane.b32.xlu0 %v1697, 111
      %v2742 = vpop.permute.xlu0 %2741
      %2743 = vrot.lane.b32.xlu0 %v1698, 111
      %v2744 = vpop.permute.xlu0 %2743
      %v2745 = vsel %vm1559, %v2742, %v2744
      %v2746 = vsel %vm1559, %v2744, %v2742
      %s2747 = scalar_lea.vmem %s9, 16
      %v2748 = vld [vmem:[%s2747] sm:$0x3]
      %v2750 = vlaneseq
      %v2751 = vshrl.u32 %v2750, 7
      %v2752 = vsub.s32 0, %v2751
      %v2753 = vrot.slane %v2748, %v2752
      %v2754 = vlaneseq
      %v2755 = vshrl.u32 %v2754, 7
      %v2756 = vsub.s32 1, %v2755
      %v2757 = vrot.slane %v2748, %v2756
      %v2760 = vmul.f32 %v2745, %v2753
      %v2761 = vmul.f32 %v2746, %v2757
      %s2762 = scalar_lea.vmem %s4, 256
      %v2763 = vld [vmem:[%s2762] sm:$0xff]
      %v2764 = vld [vmem:[%s2762 + $0x8] sm:$0xff]
      %v2765 = vld [vmem:[%s2762 + $0x10] sm:$0xff]
      %v2766 = vld [vmem:[%s2762 + $0x18] sm:$0xff]
      %v2768 = vsel %vm1749, %v2763, 0
      %v2771 = vsel %vm1749, %v2764, 0
      %v2774 = vsel %vm1749, %v2765, 0
      %v2777 = vsel %vm1749, %v2766, 0
      %2779 = vmatprep.subr.mxu0 0.0
      %2780 = vmatpush1.msra.mxu0 0.0
      %2781 = vmatprep.subr.mxu0 0.0
      %2782 = vmatpush1.msra.mxu0 0.0
      %2783 = vmatprep.subr.mxu0 0.0
      %2784 = vmatpush1.msra.mxu0 0.0
      %2785 = vmatprep.subr.mxu0 0.0
      %2786 = vmatpush1.msra.mxu0 0.0
      %2787 = vmatprep.subr.mxu0 0.0
      %2788 = vmatpush1.msra.mxu0 0.0
      %2789 = vmatprep.subr.mxu0 0.0
      %2790 = vmatpush1.msra.mxu0 0.0
      %2791 = vmatprep.subr.mxu0 0.0
      %2792 = vmatpush1.msra.mxu0 0.0
      %2793 = vmatprep.subr.mxu0 0.0
      %2794 = vmatpush1.msra.mxu0 0.0
      %2795 = vmatprep.subr.mxu0 0.0
      %2796 = vmatpush1.msra.mxu0 0.0
      %2797 = vmatprep.subr.mxu0 0.0
      %2798 = vmatpush1.msra.mxu0 0.0
      %2799 = vmatprep.subr.mxu0 0.0
      %2800 = vmatpush1.msra.mxu0 0.0
      %2801 = vmatprep.subr.mxu0 0.0
      %2802 = vmatpush1.msra.mxu0 0.0
      %2803 = vmatprep.subr.mxu0 0.0
      %2804 = vmatpush1.msra.mxu0 0.0
      %2805 = vmatprep.subr.mxu0 0.0
      %2806 = vmatpush1.msra.mxu0 0.0
      %2807 = vmatprep.subr.mxu0 0.0
      %2808 = vmatpush1.msra.mxu0 0.0
      %2809 = vmatprep.subr.mxu0 %v2761
      %2810 = vmatpush1.msra.mxu0 %v2760
      %2811 = vmatprep.subr.mxu0 0.0
      %2812 = vmatpush2.msra.mxu0 0.0
      %2813 = vmatprep.subr.mxu0 0.0
      %2814 = vmatpush2.msra.mxu0 0.0
      %2815 = vmatprep.subr.mxu0 0.0
      %2816 = vmatpush2.msra.mxu0 0.0
      %2817 = vmatprep.subr.mxu0 0.0
      %2818 = vmatpush2.msra.mxu0 0.0
      %2819 = vmatprep.subr.mxu0 0.0
      %2820 = vmatpush2.msra.mxu0 0.0
      %2821 = vmatprep.subr.mxu0 0.0
      %2822 = vmatpush2.msra.mxu0 0.0
      %2823 = vmatprep.subr.mxu0 0.0
      %2824 = vmatpush2.msra.mxu0 0.0
      %2825 = vmatprep.subr.mxu0 0.0
      %2826 = vmatpush2.msra.mxu0 0.0
      %2827 = vmatprep.subr.mxu0 0.0
      %2828 = vmatpush2.msra.mxu0 0.0
      %2829 = vmatprep.subr.mxu0 0.0
      %2830 = vmatpush2.msra.mxu0 0.0
      %2831 = vmatprep.subr.mxu0 0.0
      %2832 = vmatpush2.msra.mxu0 0.0
      %2833 = vmatprep.subr.mxu0 0.0
      %2834 = vmatpush2.msra.mxu0 0.0
      %2835 = vmatprep.subr.mxu0 0.0
      %2836 = vmatpush2.msra.mxu0 0.0
      %2837 = vmatprep.subr.mxu0 0.0
      %2838 = vmatpush2.msra.mxu0 0.0
      %2839 = vmatprep.subr.mxu0 0.0
      %2840 = vmatpush2.msra.mxu0 0.0
      %2841 = vmatprep.subr.mxu0 0.0
      %2842 = vmatpush2.msra.mxu0 0.0
      %2843 = vmatprep.mubr.f32.mxu0 0.0
      %2844 = vmatmul.mubr.f32.gmra.mxu0 %v2768
      %v2845 = vpop.f32.mrf.mxu0
      %v2846 = vadd.f32 0.0, %v2845
      %v2847 = vpop.f32.mrf.mxu0
      %v2848 = vadd.f32 0.0, %v2847
      %2849 = vmatprep.mubr.f32.mxu0 0.0
      %2850 = vmatmul.mubr.f32.gmra.mxu0 %v2771
      %v2851 = vpop.f32.mrf.mxu0
      %v2852 = vadd.f32 0.0, %v2851
      %v2853 = vpop.f32.mrf.mxu0
      %v2854 = vadd.f32 0.0, %v2853
      %2855 = vmatprep.mubr.f32.mxu0 0.0
      %2856 = vmatmul.mubr.f32.gmra.mxu0 %v2774
      %v2857 = vpop.f32.mrf.mxu0
      %v2858 = vadd.f32 0.0, %v2857
      %v2859 = vpop.f32.mrf.mxu0
      %v2860 = vadd.f32 0.0, %v2859
      %2861 = vmatprep.mubr.f32.mxu0 0.0
      %2862 = vmatmul.mubr.f32.gmra.mxu0 %v2777
      %v2863 = vpop.f32.mrf.mxu0
      %v2864 = vadd.f32 0.0, %v2863
      %v2865 = vpop.f32.mrf.mxu0
      %v2866 = vadd.f32 0.0, %v2865
      %2867 = vdwg.mxu0
      %v2868 = vadd.f32 %v2733, %v2846
      %v2869 = vadd.f32 %v2734, %v2848
      %v2870 = vadd.f32 %v2735, %v2852
      %v2871 = vadd.f32 %v2736, %v2854
      %v2872 = vadd.f32 %v2737, %v2858
      %v2873 = vadd.f32 %v2738, %v2860
      %v2874 = vadd.f32 %v2739, %v2864
      %v2875 = vadd.f32 %v2740, %v2866
      %v2876 = vadd.f32 %v1689, %v2868
      %v2877 = vadd.f32 %v1690, %v2869
      %v2878 = vadd.f32 %v1691, %v2870
      %v2879 = vadd.f32 %v1692, %v2871
      %v2880 = vadd.f32 %v1693, %v2872
      %v2881 = vadd.f32 %v1694, %v2873
      %v2882 = vadd.f32 %v1695, %v2874
      %v2883 = vadd.f32 %v1696, %v2875
      %v2884 = vld [vmem:[%s5] sm:$0xff]
      %v2885 = vld [vmem:[%s5 + $0x8] sm:$0xff]
      %v2886 = vld [vmem:[%s5 + $0x10] sm:$0xff]
      %v2887 = vld [vmem:[%s5 + $0x18] sm:$0xff]
      %2889 = vset.pattern.permute.xlu0 0
      %2890 = vperm.xlu0 %2889, %v2884
      %v2891 = vpop.permute.xlu0 %2890
      %2894 = vset.pattern.permute.xlu0 0
      %2895 = vperm.xlu0 %2894, %v2885
      %v2896 = vpop.permute.xlu0 %2895
      %2899 = vset.pattern.permute.xlu0 0
      %2900 = vperm.xlu0 %2899, %v2886
      %v2901 = vpop.permute.xlu0 %2900
      %2904 = vset.pattern.permute.xlu0 0
      %2905 = vperm.xlu0 %2904, %v2887
      %v2906 = vpop.permute.xlu0 %2905
      %v2908 = vadd.f32 %v2876, %v2891
      %v2909 = vadd.f32 %v2877, %v2891
      %v2910 = vadd.f32 %v2878, %v2896
      %v2911 = vadd.f32 %v2879, %v2896
      %v2912 = vadd.f32 %v2880, %v2901
      %v2913 = vadd.f32 %v2881, %v2901
      %v2914 = vadd.f32 %v2882, %v2906
      %v2915 = vadd.f32 %v2883, %v2906
      %v2916 = vxor.u32 %v2908, 2147483648
      %v2917 = vxor.u32 %v2909, 2147483648
      %v2918 = vxor.u32 %v2910, 2147483648
      %v2919 = vxor.u32 %v2911, 2147483648
      %v2920 = vxor.u32 %v2912, 2147483648
      %v2921 = vxor.u32 %v2913, 2147483648
      %v2922 = vmul.f32 %v2916, 1.442695
      %v2923 = vpow.pop %v2922
      %v2924 = vmul.f32 %v2917, 1.442695
      %v2925 = vpow.pop %v2924
      %v2926 = vmul.f32 %v2918, 1.442695
      %v2927 = vpow.pop %v2926
      %v2928 = vmul.f32 %v2919, 1.442695
      %v2929 = vpow.pop %v2928
      %v2930 = vmul.f32 %v2920, 1.442695
      %v2931 = vpow.pop %v2930
      %v2932 = vmul.f32 %v2921, 1.442695
      %v2933 = vpow.pop %v2932
      %v2934 = vadd.f32 %v2923, 1.0
      %v2935 = vadd.f32 %v2925, 1.0
      %v2936 = vadd.f32 %v2927, 1.0
      %v2937 = vadd.f32 %v2929, 1.0
      %v2938 = vadd.f32 %v2931, 1.0
      %v2939 = vadd.f32 %v2933, 1.0
      %v2940 = vrcp.pop %v2934
      %v2941 = vmul.f32 1.0, %v2940
      %v2942 = vrcp.pop %v2935
      %v2943 = vmul.f32 1.0, %v2942
      %v2944 = vrcp.pop %v2936
      %v2945 = vmul.f32 1.0, %v2944
      %v2946 = vrcp.pop %v2937
      %v2947 = vmul.f32 1.0, %v2946
      %v2948 = vrcp.pop %v2938
      %v2949 = vmul.f32 1.0, %v2948
      %v2950 = vrcp.pop %v2939
      %v2951 = vmul.f32 1.0, %v2950
      %v2952 = vtanh.pop %v2914
      %v2953 = vtanh.pop %v2915
      %v2954 = vld [vmem:[#allocation4] sm:$0xff]
      %v2955 = vld [vmem:[#allocation4 + $0x8] sm:$0xff]
      %v2956 = vmul.f32 %v2945, %v2954
      %v2957 = vmul.f32 %v2947, %v2955
      %v2958 = vmul.f32 %v2941, %v2952
      %v2959 = vmul.f32 %v2943, %v2953
      %v2960 = vadd.f32 %v2956, %v2958
      %v2961 = vadd.f32 %v2957, %v2959
      %v2962 = vtanh.pop %v2960
      %v2963 = vtanh.pop %v2961
      %v2964 = vmul.f32 %v2949, %v2962
      %v2965 = vmul.f32 %v2951, %v2963
      %2966 = vst [vmem:[#allocation4] sm:$0xff] %v2960
      %2967 = vst [vmem:[#allocation4 + $0x8] sm:$0xff] %v2961
      %2968 = vst [vmem:[#allocation3] sm:$0xff] %v2964
      %2969 = vst [vmem:[#allocation3 + $0x8] sm:$0xff] %v2965
      %2970 = vrot.lane.b32.xlu0 %v2964, 17
      %v2971 = vpop.permute.xlu0 %2970
      %2972 = vrot.lane.b32.xlu0 %v2965, 17
      %v2973 = vpop.permute.xlu0 %2972
      %v2974 = vsel %vm463, %v2971, %v2973
      %v2975 = vsel %vm463, %v2973, %v2971
      %v2976 = vld [vmem:[%s10] sm:$0x3]
      %v2978 = vlaneseq
      %v2979 = vshrl.u32 %v2978, 7
      %v2980 = vsub.s32 0, %v2979
      %v2981 = vrot.slane %v2976, %v2980
      %v2982 = vlaneseq
      %v2983 = vshrl.u32 %v2982, 7
      %v2984 = vsub.s32 1, %v2983
      %v2985 = vrot.slane %v2976, %v2984
      %v2988 = vmul.f32 %v2975, %v2981
      %v2989 = vmul.f32 %v2974, %v2985
      %v2990 = vld [vmem:[%s6] sm:$0x7]
      %2991 = vrot.lane.b32.xlu0 %v2964, 16
      %v2992 = vpop.permute.xlu0 %2991
      %2993 = vrot.lane.b32.xlu0 %v2965, 16
      %v2994 = vpop.permute.xlu0 %2993
      %v2995 = vsel %vm488, %v2992, %v2994
      %v2996 = vsel %vm488, %v2994, %v2992
      %s2997 = scalar_lea.vmem %s10, 2
      %v2998 = vld [vmem:[%s2997] sm:$0x3]
      %v3000 = vlaneseq
      %v3001 = vshrl.u32 %v3000, 7
      %v3002 = vsub.s32 0, %v3001
      %v3003 = vrot.slane %v2998, %v3002
      %v3004 = vlaneseq
      %v3005 = vshrl.u32 %v3004, 7
      %v3006 = vsub.s32 1, %v3005
      %v3007 = vrot.slane %v2998, %v3006
      %v3010 = vmul.f32 %v2996, %v3003
      %v3011 = vmul.f32 %v2995, %v3007
      %s3012 = scalar_lea.vmem %s6, 4
      %v3013 = vld [vmem:[%s3012] sm:$0x7]
      %v3015 = vsel %vm1749, %v3013, 0
      %3017 = vmatprep.subr.mxu0 0.0
      %3018 = vmatpush1.msra.mxu0 0.0
      %3019 = vmatprep.subr.mxu0 0.0
      %3020 = vmatpush1.msra.mxu0 0.0
      %3021 = vmatprep.subr.mxu0 0.0
      %3022 = vmatpush1.msra.mxu0 0.0
      %3023 = vmatprep.subr.mxu0 0.0
      %3024 = vmatpush1.msra.mxu0 0.0
      %3025 = vmatprep.subr.mxu0 0.0
      %3026 = vmatpush1.msra.mxu0 0.0
      %3027 = vmatprep.subr.mxu0 0.0
      %3028 = vmatpush1.msra.mxu0 0.0
      %3029 = vmatprep.subr.mxu0 0.0
      %3030 = vmatpush1.msra.mxu0 0.0
      %3031 = vmatprep.subr.mxu0 0.0
      %3032 = vmatpush1.msra.mxu0 0.0
      %3033 = vmatprep.subr.mxu0 0.0
      %3034 = vmatpush1.msra.mxu0 0.0
      %3035 = vmatprep.subr.mxu0 0.0
      %3036 = vmatpush1.msra.mxu0 0.0
      %3037 = vmatprep.subr.mxu0 0.0
      %3038 = vmatpush1.msra.mxu0 0.0
      %3039 = vmatprep.subr.mxu0 0.0
      %3040 = vmatpush1.msra.mxu0 0.0
      %3041 = vmatprep.subr.mxu0 0.0
      %3042 = vmatpush1.msra.mxu0 0.0
      %3043 = vmatprep.subr.mxu0 0.0
      %3044 = vmatpush1.msra.mxu0 0.0
      %3045 = vmatprep.subr.mxu0 0.0
      %3046 = vmatpush1.msra.mxu0 0.0
      %3047 = vmatprep.subr.mxu0 %v3011
      %3048 = vmatpush1.msra.mxu0 %v3010
      %3049 = vmatprep.subr.mxu0 0.0
      %3050 = vmatpush2.msra.mxu0 0.0
      %3051 = vmatprep.subr.mxu0 0.0
      %3052 = vmatpush2.msra.mxu0 0.0
      %3053 = vmatprep.subr.mxu0 0.0
      %3054 = vmatpush2.msra.mxu0 0.0
      %3055 = vmatprep.subr.mxu0 0.0
      %3056 = vmatpush2.msra.mxu0 0.0
      %3057 = vmatprep.subr.mxu0 0.0
      %3058 = vmatpush2.msra.mxu0 0.0
      %3059 = vmatprep.subr.mxu0 0.0
      %3060 = vmatpush2.msra.mxu0 0.0
      %3061 = vmatprep.subr.mxu0 0.0
      %3062 = vmatpush2.msra.mxu0 0.0
      %3063 = vmatprep.subr.mxu0 0.0
      %3064 = vmatpush2.msra.mxu0 0.0
      %3065 = vmatprep.subr.mxu0 0.0
      %3066 = vmatpush2.msra.mxu0 0.0
      %3067 = vmatprep.subr.mxu0 0.0
      %3068 = vmatpush2.msra.mxu0 0.0
      %3069 = vmatprep.subr.mxu0 0.0
      %3070 = vmatpush2.msra.mxu0 0.0
      %3071 = vmatprep.subr.mxu0 0.0
      %3072 = vmatpush2.msra.mxu0 0.0
      %3073 = vmatprep.subr.mxu0 0.0
      %3074 = vmatpush2.msra.mxu0 0.0
      %3075 = vmatprep.subr.mxu0 0.0
      %3076 = vmatpush2.msra.mxu0 0.0
      %3077 = vmatprep.subr.mxu0 0.0
      %3078 = vmatpush2.msra.mxu0 0.0
      %3079 = vmatprep.subr.mxu0 0.0
      %3080 = vmatpush2.msra.mxu0 0.0
      %3081 = vmatprep.mubr.f32.mxu0 0.0
      %3082 = vmatmul.mubr.f32.gmra.mxu0 %v3015
      %v3083 = vpop.f32.mrf.mxu0
      %v3084 = vadd.f32 0.0, %v3083
      %v3085 = vpop.f32.mrf.mxu0
      %v3086 = vadd.f32 0.0, %v3085
      %3087 = vdwg.mxu0
      %v3089 = vsel %vm1749, %v2990, 0
      %3091 = vmatprep.subr.mxu0 0.0
      %3092 = vmatpush1.msra.mxu0 0.0
      %3093 = vmatprep.subr.mxu0 0.0
      %3094 = vmatpush1.msra.mxu0 0.0
      %3095 = vmatprep.subr.mxu0 0.0
      %3096 = vmatpush1.msra.mxu0 0.0
      %3097 = vmatprep.subr.mxu0 0.0
      %3098 = vmatpush1.msra.mxu0 0.0
      %3099 = vmatprep.subr.mxu0 0.0
      %3100 = vmatpush1.msra.mxu0 0.0
      %3101 = vmatprep.subr.mxu0 0.0
      %3102 = vmatpush1.msra.mxu0 0.0
      %3103 = vmatprep.subr.mxu0 0.0
      %3104 = vmatpush1.msra.mxu0 0.0
      %3105 = vmatprep.subr.mxu0 0.0
      %3106 = vmatpush1.msra.mxu0 0.0
      %3107 = vmatprep.subr.mxu0 0.0
      %3108 = vmatpush1.msra.mxu0 0.0
      %3109 = vmatprep.subr.mxu0 0.0
      %3110 = vmatpush1.msra.mxu0 0.0
      %3111 = vmatprep.subr.mxu0 0.0
      %3112 = vmatpush1.msra.mxu0 0.0
      %3113 = vmatprep.subr.mxu0 0.0
      %3114 = vmatpush1.msra.mxu0 0.0
      %3115 = vmatprep.subr.mxu0 0.0
      %3116 = vmatpush1.msra.mxu0 0.0
      %3117 = vmatprep.subr.mxu0 0.0
      %3118 = vmatpush1.msra.mxu0 0.0
      %3119 = vmatprep.subr.mxu0 0.0
      %3120 = vmatpush1.msra.mxu0 0.0
      %3121 = vmatprep.subr.mxu0 %v2989
      %3122 = vmatpush1.msra.mxu0 %v2988
      %3123 = vmatprep.subr.mxu0 0.0
      %3124 = vmatpush2.msra.mxu0 0.0
      %3125 = vmatprep.subr.mxu0 0.0
      %3126 = vmatpush2.msra.mxu0 0.0
      %3127 = vmatprep.subr.mxu0 0.0
      %3128 = vmatpush2.msra.mxu0 0.0
      %3129 = vmatprep.subr.mxu0 0.0
      %3130 = vmatpush2.msra.mxu0 0.0
      %3131 = vmatprep.subr.mxu0 0.0
      %3132 = vmatpush2.msra.mxu0 0.0
      %3133 = vmatprep.subr.mxu0 0.0
      %3134 = vmatpush2.msra.mxu0 0.0
      %3135 = vmatprep.subr.mxu0 0.0
      %3136 = vmatpush2.msra.mxu0 0.0
      %3137 = vmatprep.subr.mxu0 0.0
      %3138 = vmatpush2.msra.mxu0 0.0
      %3139 = vmatprep.subr.mxu0 0.0
      %3140 = vmatpush2.msra.mxu0 0.0
      %3141 = vmatprep.subr.mxu0 0.0
      %3142 = vmatpush2.msra.mxu0 0.0
      %3143 = vmatprep.subr.mxu0 0.0
      %3144 = vmatpush2.msra.mxu0 0.0
      %3145 = vmatprep.subr.mxu0 0.0
      %3146 = vmatpush2.msra.mxu0 0.0
      %3147 = vmatprep.subr.mxu0 0.0
      %3148 = vmatpush2.msra.mxu0 0.0
      %3149 = vmatprep.subr.mxu0 0.0
      %3150 = vmatpush2.msra.mxu0 0.0
      %3151 = vmatprep.subr.mxu0 0.0
      %3152 = vmatpush2.msra.mxu0 0.0
      %3153 = vmatprep.subr.mxu0 0.0
      %3154 = vmatpush2.msra.mxu0 0.0
      %3155 = vmatprep.mubr.f32.mxu0 0.0
      %3156 = vmatmul.mubr.f32.gmra.mxu0 %v3089
      %v3157 = vpop.f32.mrf.mxu0
      %v3158 = vadd.f32 %v3084, %v3157
      %v3159 = vpop.f32.mrf.mxu0
      %v3160 = vadd.f32 %v3086, %v3159
      %3161 = vdwg.mxu0
      %3162 = vrot.lane.b32.xlu0 %v2964, 15
      %v3163 = vpop.permute.xlu0 %3162
      %3164 = vrot.lane.b32.xlu0 %v2965, 15
      %v3165 = vpop.permute.xlu0 %3164
      %v3166 = vsel %vm731, %v3163, %v3165
      %v3167 = vsel %vm731, %v3165, %v3163
      %s3168 = scalar_lea.vmem %s10, 4
      %v3169 = vld [vmem:[%s3168] sm:$0x3]
      %v3171 = vlaneseq
      %v3172 = vshrl.u32 %v3171, 7
      %v3173 = vsub.s32 0, %v3172
      %v3174 = vrot.slane %v3169, %v3173
      %v3175 = vlaneseq
      %v3176 = vshrl.u32 %v3175, 7
      %v3177 = vsub.s32 1, %v3176
      %v3178 = vrot.slane %v3169, %v3177
      %v3181 = vmul.f32 %v3167, %v3174
      %v3182 = vmul.f32 %v3166, %v3178
      %s3183 = scalar_lea.vmem %s6, 8
      %v3184 = vld [vmem:[%s3183] sm:$0x7]
      %v3186 = vsel %vm1749, %v3184, 0
      %3188 = vmatprep.subr.mxu0 0.0
      %3189 = vmatpush1.msra.mxu0 0.0
      %3190 = vmatprep.subr.mxu0 0.0
      %3191 = vmatpush1.msra.mxu0 0.0
      %3192 = vmatprep.subr.mxu0 0.0
      %3193 = vmatpush1.msra.mxu0 0.0
      %3194 = vmatprep.subr.mxu0 0.0
      %3195 = vmatpush1.msra.mxu0 0.0
      %3196 = vmatprep.subr.mxu0 0.0
      %3197 = vmatpush1.msra.mxu0 0.0
      %3198 = vmatprep.subr.mxu0 0.0
      %3199 = vmatpush1.msra.mxu0 0.0
      %3200 = vmatprep.subr.mxu0 0.0
      %3201 = vmatpush1.msra.mxu0 0.0
      %3202 = vmatprep.subr.mxu0 0.0
      %3203 = vmatpush1.msra.mxu0 0.0
      %3204 = vmatprep.subr.mxu0 0.0
      %3205 = vmatpush1.msra.mxu0 0.0
      %3206 = vmatprep.subr.mxu0 0.0
      %3207 = vmatpush1.msra.mxu0 0.0
      %3208 = vmatprep.subr.mxu0 0.0
      %3209 = vmatpush1.msra.mxu0 0.0
      %3210 = vmatprep.subr.mxu0 0.0
      %3211 = vmatpush1.msra.mxu0 0.0
      %3212 = vmatprep.subr.mxu0 0.0
      %3213 = vmatpush1.msra.mxu0 0.0
      %3214 = vmatprep.subr.mxu0 0.0
      %3215 = vmatpush1.msra.mxu0 0.0
      %3216 = vmatprep.subr.mxu0 0.0
      %3217 = vmatpush1.msra.mxu0 0.0
      %3218 = vmatprep.subr.mxu0 %v3182
      %3219 = vmatpush1.msra.mxu0 %v3181
      %3220 = vmatprep.subr.mxu0 0.0
      %3221 = vmatpush2.msra.mxu0 0.0
      %3222 = vmatprep.subr.mxu0 0.0
      %3223 = vmatpush2.msra.mxu0 0.0
      %3224 = vmatprep.subr.mxu0 0.0
      %3225 = vmatpush2.msra.mxu0 0.0
      %3226 = vmatprep.subr.mxu0 0.0
      %3227 = vmatpush2.msra.mxu0 0.0
      %3228 = vmatprep.subr.mxu0 0.0
      %3229 = vmatpush2.msra.mxu0 0.0
      %3230 = vmatprep.subr.mxu0 0.0
      %3231 = vmatpush2.msra.mxu0 0.0
      %3232 = vmatprep.subr.mxu0 0.0
      %3233 = vmatpush2.msra.mxu0 0.0
      %3234 = vmatprep.subr.mxu0 0.0
      %3235 = vmatpush2.msra.mxu0 0.0
      %3236 = vmatprep.subr.mxu0 0.0
      %3237 = vmatpush2.msra.mxu0 0.0
      %3238 = vmatprep.subr.mxu0 0.0
      %3239 = vmatpush2.msra.mxu0 0.0
      %3240 = vmatprep.subr.mxu0 0.0
      %3241 = vmatpush2.msra.mxu0 0.0
      %3242 = vmatprep.subr.mxu0 0.0
      %3243 = vmatpush2.msra.mxu0 0.0
      %3244 = vmatprep.subr.mxu0 0.0
      %3245 = vmatpush2.msra.mxu0 0.0
      %3246 = vmatprep.subr.mxu0 0.0
      %3247 = vmatpush2.msra.mxu0 0.0
      %3248 = vmatprep.subr.mxu0 0.0
      %3249 = vmatpush2.msra.mxu0 0.0
      %3250 = vmatprep.subr.mxu0 0.0
      %3251 = vmatpush2.msra.mxu0 0.0
      %3252 = vmatprep.mubr.f32.mxu0 0.0
      %3253 = vmatmul.mubr.f32.gmra.mxu0 %v3186
      %v3254 = vpop.f32.mrf.mxu0
      %v3255 = vadd.f32 0.0, %v3254
      %v3256 = vpop.f32.mrf.mxu0
      %v3257 = vadd.f32 0.0, %v3256
      %3258 = vdwg.mxu0
      %v3259 = vadd.f32 %v3158, %v3255
      %v3260 = vadd.f32 %v3160, %v3257
      %3261 = vrot.lane.b32.xlu0 %v2964, 1
      %v3262 = vpop.permute.xlu0 %3261
      %3263 = vrot.lane.b32.xlu0 %v2965, 1
      %v3264 = vpop.permute.xlu0 %3263
      %v3265 = vsel %vm873, %v3262, %v3264
      %v3266 = vsel %vm873, %v3264, %v3262
      %s3267 = scalar_lea.vmem %s10, 6
      %v3268 = vld [vmem:[%s3267] sm:$0x3]
      %v3270 = vlaneseq
      %v3271 = vshrl.u32 %v3270, 7
      %v3272 = vsub.s32 0, %v3271
      %v3273 = vrot.slane %v3268, %v3272
      %v3274 = vlaneseq
      %v3275 = vshrl.u32 %v3274, 7
      %v3276 = vsub.s32 1, %v3275
      %v3277 = vrot.slane %v3268, %v3276
      %v3280 = vmul.f32 %v3266, %v3273
      %v3281 = vmul.f32 %v3265, %v3277
      %s3282 = scalar_lea.vmem %s6, 12
      %v3283 = vld [vmem:[%s3282] sm:$0x7]
      %v3285 = vsel %vm1749, %v3283, 0
      %3287 = vmatprep.subr.mxu0 0.0
      %3288 = vmatpush1.msra.mxu0 0.0
      %3289 = vmatprep.subr.mxu0 0.0
      %3290 = vmatpush1.msra.mxu0 0.0
      %3291 = vmatprep.subr.mxu0 0.0
      %3292 = vmatpush1.msra.mxu0 0.0
      %3293 = vmatprep.subr.mxu0 0.0
      %3294 = vmatpush1.msra.mxu0 0.0
      %3295 = vmatprep.subr.mxu0 0.0
      %3296 = vmatpush1.msra.mxu0 0.0
      %3297 = vmatprep.subr.mxu0 0.0
      %3298 = vmatpush1.msra.mxu0 0.0
      %3299 = vmatprep.subr.mxu0 0.0
      %3300 = vmatpush1.msra.mxu0 0.0
      %3301 = vmatprep.subr.mxu0 0.0
      %3302 = vmatpush1.msra.mxu0 0.0
      %3303 = vmatprep.subr.mxu0 0.0
      %3304 = vmatpush1.msra.mxu0 0.0
      %3305 = vmatprep.subr.mxu0 0.0
      %3306 = vmatpush1.msra.mxu0 0.0
      %3307 = vmatprep.subr.mxu0 0.0
      %3308 = vmatpush1.msra.mxu0 0.0
      %3309 = vmatprep.subr.mxu0 0.0
      %3310 = vmatpush1.msra.mxu0 0.0
      %3311 = vmatprep.subr.mxu0 0.0
      %3312 = vmatpush1.msra.mxu0 0.0
      %3313 = vmatprep.subr.mxu0 0.0
      %3314 = vmatpush1.msra.mxu0 0.0
      %3315 = vmatprep.subr.mxu0 0.0
      %3316 = vmatpush1.msra.mxu0 0.0
      %3317 = vmatprep.subr.mxu0 %v3281
      %3318 = vmatpush1.msra.mxu0 %v3280
      %3319 = vmatprep.subr.mxu0 0.0
      %3320 = vmatpush2.msra.mxu0 0.0
      %3321 = vmatprep.subr.mxu0 0.0
      %3322 = vmatpush2.msra.mxu0 0.0
      %3323 = vmatprep.subr.mxu0 0.0
      %3324 = vmatpush2.msra.mxu0 0.0
      %3325 = vmatprep.subr.mxu0 0.0
      %3326 = vmatpush2.msra.mxu0 0.0
      %3327 = vmatprep.subr.mxu0 0.0
      %3328 = vmatpush2.msra.mxu0 0.0
      %3329 = vmatprep.subr.mxu0 0.0
      %3330 = vmatpush2.msra.mxu0 0.0
      %3331 = vmatprep.subr.mxu0 0.0
      %3332 = vmatpush2.msra.mxu0 0.0
      %3333 = vmatprep.subr.mxu0 0.0
      %3334 = vmatpush2.msra.mxu0 0.0
      %3335 = vmatprep.subr.mxu0 0.0
      %3336 = vmatpush2.msra.mxu0 0.0
      %3337 = vmatprep.subr.mxu0 0.0
      %3338 = vmatpush2.msra.mxu0 0.0
      %3339 = vmatprep.subr.mxu0 0.0
      %3340 = vmatpush2.msra.mxu0 0.0
      %3341 = vmatprep.subr.mxu0 0.0
      %3342 = vmatpush2.msra.mxu0 0.0
      %3343 = vmatprep.subr.mxu0 0.0
      %3344 = vmatpush2.msra.mxu0 0.0
      %3345 = vmatprep.subr.mxu0 0.0
      %3346 = vmatpush2.msra.mxu0 0.0
      %3347 = vmatprep.subr.mxu0 0.0
      %3348 = vmatpush2.msra.mxu0 0.0
      %3349 = vmatprep.subr.mxu0 0.0
      %3350 = vmatpush2.msra.mxu0 0.0
      %3351 = vmatprep.mubr.f32.mxu0 0.0
      %3352 = vmatmul.mubr.f32.gmra.mxu0 %v3285
      %v3353 = vpop.f32.mrf.mxu0
      %v3354 = vadd.f32 0.0, %v3353
      %v3355 = vpop.f32.mrf.mxu0
      %v3356 = vadd.f32 0.0, %v3355
      %3357 = vdwg.mxu0
      %v3358 = vadd.f32 %v3259, %v3354
      %v3359 = vadd.f32 %v3260, %v3356
      %s3360 = scalar_lea.vmem %s6, 16
      %v3361 = vld [vmem:[%s3360] sm:$0x7]
      %v3363 = vsel %vm1749, %v3361, 0
      %3365 = vmatprep.subr.mxu0 0.0
      %3366 = vmatpush1.msra.mxu0 0.0
      %3367 = vmatprep.subr.mxu0 0.0
      %3368 = vmatpush1.msra.mxu0 0.0
      %3369 = vmatprep.subr.mxu0 0.0
      %3370 = vmatpush1.msra.mxu0 0.0
      %3371 = vmatprep.subr.mxu0 0.0
      %3372 = vmatpush1.msra.mxu0 0.0
      %3373 = vmatprep.subr.mxu0 0.0
      %3374 = vmatpush1.msra.mxu0 0.0
      %3375 = vmatprep.subr.mxu0 0.0
      %3376 = vmatpush1.msra.mxu0 0.0
      %3377 = vmatprep.subr.mxu0 0.0
      %3378 = vmatpush1.msra.mxu0 0.0
      %3379 = vmatprep.subr.mxu0 0.0
      %3380 = vmatpush1.msra.mxu0 0.0
      %3381 = vmatprep.subr.mxu0 0.0
      %3382 = vmatpush1.msra.mxu0 0.0
      %3383 = vmatprep.subr.mxu0 0.0
      %3384 = vmatpush1.msra.mxu0 0.0
      %3385 = vmatprep.subr.mxu0 0.0
      %3386 = vmatpush1.msra.mxu0 0.0
      %3387 = vmatprep.subr.mxu0 0.0
      %3388 = vmatpush1.msra.mxu0 0.0
      %3389 = vmatprep.subr.mxu0 0.0
      %3390 = vmatpush1.msra.mxu0 0.0
      %3391 = vmatprep.subr.mxu0 0.0
      %3392 = vmatpush1.msra.mxu0 0.0
      %3393 = vmatprep.subr.mxu0 0.0
      %3394 = vmatpush1.msra.mxu0 0.0
      %3395 = vmatprep.subr.mxu0 %v2965
      %3396 = vmatpush1.msra.mxu0 %v2964
      %3397 = vmatprep.subr.mxu0 0.0
      %3398 = vmatpush2.msra.mxu0 0.0
      %3399 = vmatprep.subr.mxu0 0.0
      %3400 = vmatpush2.msra.mxu0 0.0
      %3401 = vmatprep.subr.mxu0 0.0
      %3402 = vmatpush2.msra.mxu0 0.0
      %3403 = vmatprep.subr.mxu0 0.0
      %3404 = vmatpush2.msra.mxu0 0.0
      %3405 = vmatprep.subr.mxu0 0.0
      %3406 = vmatpush2.msra.mxu0 0.0
      %3407 = vmatprep.subr.mxu0 0.0
      %3408 = vmatpush2.msra.mxu0 0.0
      %3409 = vmatprep.subr.mxu0 0.0
      %3410 = vmatpush2.msra.mxu0 0.0
      %3411 = vmatprep.subr.mxu0 0.0
      %3412 = vmatpush2.msra.mxu0 0.0
      %3413 = vmatprep.subr.mxu0 0.0
      %3414 = vmatpush2.msra.mxu0 0.0
      %3415 = vmatprep.subr.mxu0 0.0
      %3416 = vmatpush2.msra.mxu0 0.0
      %3417 = vmatprep.subr.mxu0 0.0
      %3418 = vmatpush2.msra.mxu0 0.0
      %3419 = vmatprep.subr.mxu0 0.0
      %3420 = vmatpush2.msra.mxu0 0.0
      %3421 = vmatprep.subr.mxu0 0.0
      %3422 = vmatpush2.msra.mxu0 0.0
      %3423 = vmatprep.subr.mxu0 0.0
      %3424 = vmatpush2.msra.mxu0 0.0
      %3425 = vmatprep.subr.mxu0 0.0
      %3426 = vmatpush2.msra.mxu0 0.0
      %3427 = vmatprep.subr.mxu0 0.0
      %3428 = vmatpush2.msra.mxu0 0.0
      %3429 = vmatprep.mubr.f32.mxu0 0.0
      %3430 = vmatmul.mubr.f32.gmra.mxu0 %v3363
      %v3431 = vpop.f32.mrf.mxu0
      %v3432 = vadd.f32 0.0, %v3431
      %v3433 = vpop.f32.mrf.mxu0
      %v3434 = vadd.f32 0.0, %v3433
      %3435 = vdwg.mxu0
      %v3436 = vadd.f32 %v3358, %v3432
      %v3437 = vadd.f32 %v3359, %v3434
      %3438 = vrot.lane.b32.xlu0 %v2964, 127
      %v3439 = vpop.permute.xlu0 %3438
      %3440 = vrot.lane.b32.xlu0 %v2965, 127
      %v3441 = vpop.permute.xlu0 %3440
      %v3442 = vsel %vm1133, %v3439, %v3441
      %v3443 = vsel %vm1133, %v3441, %v3439
      %s3444 = scalar_lea.vmem %s10, 10
      %v3445 = vld [vmem:[%s3444] sm:$0x3]
      %v3447 = vlaneseq
      %v3448 = vshrl.u32 %v3447, 7
      %v3449 = vsub.s32 0, %v3448
      %v3450 = vrot.slane %v3445, %v3449
      %v3451 = vlaneseq
      %v3452 = vshrl.u32 %v3451, 7
      %v3453 = vsub.s32 1, %v3452
      %v3454 = vrot.slane %v3445, %v3453
      %v3457 = vmul.f32 %v3442, %v3450
      %v3458 = vmul.f32 %v3443, %v3454
      %s3459 = scalar_lea.vmem %s6, 20
      %v3460 = vld [vmem:[%s3459] sm:$0x7]
      %v3462 = vsel %vm1749, %v3460, 0
      %3464 = vmatprep.subr.mxu0 0.0
      %3465 = vmatpush1.msra.mxu0 0.0
      %3466 = vmatprep.subr.mxu0 0.0
      %3467 = vmatpush1.msra.mxu0 0.0
      %3468 = vmatprep.subr.mxu0 0.0
      %3469 = vmatpush1.msra.mxu0 0.0
      %3470 = vmatprep.subr.mxu0 0.0
      %3471 = vmatpush1.msra.mxu0 0.0
      %3472 = vmatprep.subr.mxu0 0.0
      %3473 = vmatpush1.msra.mxu0 0.0
      %3474 = vmatprep.subr.mxu0 0.0
      %3475 = vmatpush1.msra.mxu0 0.0
      %3476 = vmatprep.subr.mxu0 0.0
      %3477 = vmatpush1.msra.mxu0 0.0
      %3478 = vmatprep.subr.mxu0 0.0
      %3479 = vmatpush1.msra.mxu0 0.0
      %3480 = vmatprep.subr.mxu0 0.0
      %3481 = vmatpush1.msra.mxu0 0.0
      %3482 = vmatprep.subr.mxu0 0.0
      %3483 = vmatpush1.msra.mxu0 0.0
      %3484 = vmatprep.subr.mxu0 0.0
      %3485 = vmatpush1.msra.mxu0 0.0
      %3486 = vmatprep.subr.mxu0 0.0
      %3487 = vmatpush1.msra.mxu0 0.0
      %3488 = vmatprep.subr.mxu0 0.0
      %3489 = vmatpush1.msra.mxu0 0.0
      %3490 = vmatprep.subr.mxu0 0.0
      %3491 = vmatpush1.msra.mxu0 0.0
      %3492 = vmatprep.subr.mxu0 0.0
      %3493 = vmatpush1.msra.mxu0 0.0
      %3494 = vmatprep.subr.mxu0 %v3458
      %3495 = vmatpush1.msra.mxu0 %v3457
      %3496 = vmatprep.subr.mxu0 0.0
      %3497 = vmatpush2.msra.mxu0 0.0
      %3498 = vmatprep.subr.mxu0 0.0
      %3499 = vmatpush2.msra.mxu0 0.0
      %3500 = vmatprep.subr.mxu0 0.0
      %3501 = vmatpush2.msra.mxu0 0.0
      %3502 = vmatprep.subr.mxu0 0.0
      %3503 = vmatpush2.msra.mxu0 0.0
      %3504 = vmatprep.subr.mxu0 0.0
      %3505 = vmatpush2.msra.mxu0 0.0
      %3506 = vmatprep.subr.mxu0 0.0
      %3507 = vmatpush2.msra.mxu0 0.0
      %3508 = vmatprep.subr.mxu0 0.0
      %3509 = vmatpush2.msra.mxu0 0.0
      %3510 = vmatprep.subr.mxu0 0.0
      %3511 = vmatpush2.msra.mxu0 0.0
      %3512 = vmatprep.subr.mxu0 0.0
      %3513 = vmatpush2.msra.mxu0 0.0
      %3514 = vmatprep.subr.mxu0 0.0
      %3515 = vmatpush2.msra.mxu0 0.0
      %3516 = vmatprep.subr.mxu0 0.0
      %3517 = vmatpush2.msra.mxu0 0.0
      %3518 = vmatprep.subr.mxu0 0.0
      %3519 = vmatpush2.msra.mxu0 0.0
      %3520 = vmatprep.subr.mxu0 0.0
      %3521 = vmatpush2.msra.mxu0 0.0
      %3522 = vmatprep.subr.mxu0 0.0
      %3523 = vmatpush2.msra.mxu0 0.0
      %3524 = vmatprep.subr.mxu0 0.0
      %3525 = vmatpush2.msra.mxu0 0.0
      %3526 = vmatprep.subr.mxu0 0.0
      %3527 = vmatpush2.msra.mxu0 0.0
      %3528 = vmatprep.mubr.f32.mxu0 0.0
      %3529 = vmatmul.mubr.f32.gmra.mxu0 %v3462
      %v3530 = vpop.f32.mrf.mxu0
      %v3531 = vadd.f32 0.0, %v3530
      %v3532 = vpop.f32.mrf.mxu0
      %v3533 = vadd.f32 0.0, %v3532
      %3534 = vdwg.mxu0
      %v3535 = vadd.f32 %v3436, %v3531
      %v3536 = vadd.f32 %v3437, %v3533
      %3537 = vrot.lane.b32.xlu0 %v2964, 113
      %v3538 = vpop.permute.xlu0 %3537
      %3539 = vrot.lane.b32.xlu0 %v2965, 113
      %v3540 = vpop.permute.xlu0 %3539
      %v3541 = vsel %vm1275, %v3538, %v3540
      %v3542 = vsel %vm1275, %v3540, %v3538
      %s3543 = scalar_lea.vmem %s10, 12
      %v3544 = vld [vmem:[%s3543] sm:$0x3]
      %v3546 = vlaneseq
      %v3547 = vshrl.u32 %v3546, 7
      %v3548 = vsub.s32 0, %v3547
      %v3549 = vrot.slane %v3544, %v3548
      %v3550 = vlaneseq
      %v3551 = vshrl.u32 %v3550, 7
      %v3552 = vsub.s32 1, %v3551
      %v3553 = vrot.slane %v3544, %v3552
      %v3556 = vmul.f32 %v3541, %v3549
      %v3557 = vmul.f32 %v3542, %v3553
      %s3558 = scalar_lea.vmem %s6, 24
      %v3559 = vld [vmem:[%s3558] sm:$0x7]
      %v3561 = vsel %vm1749, %v3559, 0
      %3563 = vmatprep.subr.mxu0 0.0
      %3564 = vmatpush1.msra.mxu0 0.0
      %3565 = vmatprep.subr.mxu0 0.0
      %3566 = vmatpush1.msra.mxu0 0.0
      %3567 = vmatprep.subr.mxu0 0.0
      %3568 = vmatpush1.msra.mxu0 0.0
      %3569 = vmatprep.subr.mxu0 0.0
      %3570 = vmatpush1.msra.mxu0 0.0
      %3571 = vmatprep.subr.mxu0 0.0
      %3572 = vmatpush1.msra.mxu0 0.0
      %3573 = vmatprep.subr.mxu0 0.0
      %3574 = vmatpush1.msra.mxu0 0.0
      %3575 = vmatprep.subr.mxu0 0.0
      %3576 = vmatpush1.msra.mxu0 0.0
      %3577 = vmatprep.subr.mxu0 0.0
      %3578 = vmatpush1.msra.mxu0 0.0
      %3579 = vmatprep.subr.mxu0 0.0
      %3580 = vmatpush1.msra.mxu0 0.0
      %3581 = vmatprep.subr.mxu0 0.0
      %3582 = vmatpush1.msra.mxu0 0.0
      %3583 = vmatprep.subr.mxu0 0.0
      %3584 = vmatpush1.msra.mxu0 0.0
      %3585 = vmatprep.subr.mxu0 0.0
      %3586 = vmatpush1.msra.mxu0 0.0
      %3587 = vmatprep.subr.mxu0 0.0
      %3588 = vmatpush1.msra.mxu0 0.0
      %3589 = vmatprep.subr.mxu0 0.0
      %3590 = vmatpush1.msra.mxu0 0.0
      %3591 = vmatprep.subr.mxu0 0.0
      %3592 = vmatpush1.msra.mxu0 0.0
      %3593 = vmatprep.subr.mxu0 %v3557
      %3594 = vmatpush1.msra.mxu0 %v3556
      %3595 = vmatprep.subr.mxu0 0.0
      %3596 = vmatpush2.msra.mxu0 0.0
      %3597 = vmatprep.subr.mxu0 0.0
      %3598 = vmatpush2.msra.mxu0 0.0
      %3599 = vmatprep.subr.mxu0 0.0
      %3600 = vmatpush2.msra.mxu0 0.0
      %3601 = vmatprep.subr.mxu0 0.0
      %3602 = vmatpush2.msra.mxu0 0.0
      %3603 = vmatprep.subr.mxu0 0.0
      %3604 = vmatpush2.msra.mxu0 0.0
      %3605 = vmatprep.subr.mxu0 0.0
      %3606 = vmatpush2.msra.mxu0 0.0
      %3607 = vmatprep.subr.mxu0 0.0
      %3608 = vmatpush2.msra.mxu0 0.0
      %3609 = vmatprep.subr.mxu0 0.0
      %3610 = vmatpush2.msra.mxu0 0.0
      %3611 = vmatprep.subr.mxu0 0.0
      %3612 = vmatpush2.msra.mxu0 0.0
      %3613 = vmatprep.subr.mxu0 0.0
      %3614 = vmatpush2.msra.mxu0 0.0
      %3615 = vmatprep.subr.mxu0 0.0
      %3616 = vmatpush2.msra.mxu0 0.0
      %3617 = vmatprep.subr.mxu0 0.0
      %3618 = vmatpush2.msra.mxu0 0.0
      %3619 = vmatprep.subr.mxu0 0.0
      %3620 = vmatpush2.msra.mxu0 0.0
      %3621 = vmatprep.subr.mxu0 0.0
      %3622 = vmatpush2.msra.mxu0 0.0
      %3623 = vmatprep.subr.mxu0 0.0
      %3624 = vmatpush2.msra.mxu0 0.0
      %3625 = vmatprep.subr.mxu0 0.0
      %3626 = vmatpush2.msra.mxu0 0.0
      %3627 = vmatprep.mubr.f32.mxu0 0.0
      %3628 = vmatmul.mubr.f32.gmra.mxu0 %v3561
      %v3629 = vpop.f32.mrf.mxu0
      %v3630 = vadd.f32 0.0, %v3629
      %v3631 = vpop.f32.mrf.mxu0
      %v3632 = vadd.f32 0.0, %v3631
      %3633 = vdwg.mxu0
      %v3634 = vadd.f32 %v3535, %v3630
      %v3635 = vadd.f32 %v3536, %v3632
      %3636 = vrot.lane.b32.xlu0 %v2964, 112
      %v3637 = vpop.permute.xlu0 %3636
      %3638 = vrot.lane.b32.xlu0 %v2965, 112
      %v3639 = vpop.permute.xlu0 %3638
      %v3640 = vsel %vm1417, %v3637, %v3639
      %v3641 = vsel %vm1417, %v3639, %v3637
      %s3642 = scalar_lea.vmem %s10, 14
      %v3643 = vld [vmem:[%s3642] sm:$0x3]
      %v3645 = vlaneseq
      %v3646 = vshrl.u32 %v3645, 7
      %v3647 = vsub.s32 0, %v3646
      %v3648 = vrot.slane %v3643, %v3647
      %v3649 = vlaneseq
      %v3650 = vshrl.u32 %v3649, 7
      %v3651 = vsub.s32 1, %v3650
      %v3652 = vrot.slane %v3643, %v3651
      %v3655 = vmul.f32 %v3640, %v3648
      %v3656 = vmul.f32 %v3641, %v3652
      %s3657 = scalar_lea.vmem %s6, 28
      %v3658 = vld [vmem:[%s3657] sm:$0x7]
      %v3660 = vsel %vm1749, %v3658, 0
      %3662 = vmatprep.subr.mxu0 0.0
      %3663 = vmatpush1.msra.mxu0 0.0
      %3664 = vmatprep.subr.mxu0 0.0
      %3665 = vmatpush1.msra.mxu0 0.0
      %3666 = vmatprep.subr.mxu0 0.0
      %3667 = vmatpush1.msra.mxu0 0.0
      %3668 = vmatprep.subr.mxu0 0.0
      %3669 = vmatpush1.msra.mxu0 0.0
      %3670 = vmatprep.subr.mxu0 0.0
      %3671 = vmatpush1.msra.mxu0 0.0
      %3672 = vmatprep.subr.mxu0 0.0
      %3673 = vmatpush1.msra.mxu0 0.0
      %3674 = vmatprep.subr.mxu0 0.0
      %3675 = vmatpush1.msra.mxu0 0.0
      %3676 = vmatprep.subr.mxu0 0.0
      %3677 = vmatpush1.msra.mxu0 0.0
      %3678 = vmatprep.subr.mxu0 0.0
      %3679 = vmatpush1.msra.mxu0 0.0
      %3680 = vmatprep.subr.mxu0 0.0
      %3681 = vmatpush1.msra.mxu0 0.0
      %3682 = vmatprep.subr.mxu0 0.0
      %3683 = vmatpush1.msra.mxu0 0.0
      %3684 = vmatprep.subr.mxu0 0.0
      %3685 = vmatpush1.msra.mxu0 0.0
      %3686 = vmatprep.subr.mxu0 0.0
      %3687 = vmatpush1.msra.mxu0 0.0
      %3688 = vmatprep.subr.mxu0 0.0
      %3689 = vmatpush1.msra.mxu0 0.0
      %3690 = vmatprep.subr.mxu0 0.0
      %3691 = vmatpush1.msra.mxu0 0.0
      %3692 = vmatprep.subr.mxu0 %v3656
      %3693 = vmatpush1.msra.mxu0 %v3655
      %3694 = vmatprep.subr.mxu0 0.0
      %3695 = vmatpush2.msra.mxu0 0.0
      %3696 = vmatprep.subr.mxu0 0.0
      %3697 = vmatpush2.msra.mxu0 0.0
      %3698 = vmatprep.subr.mxu0 0.0
      %3699 = vmatpush2.msra.mxu0 0.0
      %3700 = vmatprep.subr.mxu0 0.0
      %3701 = vmatpush2.msra.mxu0 0.0
      %3702 = vmatprep.subr.mxu0 0.0
      %3703 = vmatpush2.msra.mxu0 0.0
      %3704 = vmatprep.subr.mxu0 0.0
      %3705 = vmatpush2.msra.mxu0 0.0
      %3706 = vmatprep.subr.mxu0 0.0
      %3707 = vmatpush2.msra.mxu0 0.0
      %3708 = vmatprep.subr.mxu0 0.0
      %3709 = vmatpush2.msra.mxu0 0.0
      %3710 = vmatprep.subr.mxu0 0.0
      %3711 = vmatpush2.msra.mxu0 0.0
      %3712 = vmatprep.subr.mxu0 0.0
      %3713 = vmatpush2.msra.mxu0 0.0
      %3714 = vmatprep.subr.mxu0 0.0
      %3715 = vmatpush2.msra.mxu0 0.0
      %3716 = vmatprep.subr.mxu0 0.0
      %3717 = vmatpush2.msra.mxu0 0.0
      %3718 = vmatprep.subr.mxu0 0.0
      %3719 = vmatpush2.msra.mxu0 0.0
      %3720 = vmatprep.subr.mxu0 0.0
      %3721 = vmatpush2.msra.mxu0 0.0
      %3722 = vmatprep.subr.mxu0 0.0
      %3723 = vmatpush2.msra.mxu0 0.0
      %3724 = vmatprep.subr.mxu0 0.0
      %3725 = vmatpush2.msra.mxu0 0.0
      %3726 = vmatprep.mubr.f32.mxu0 0.0
      %3727 = vmatmul.mubr.f32.gmra.mxu0 %v3660
      %v3728 = vpop.f32.mrf.mxu0
      %v3729 = vadd.f32 0.0, %v3728
      %v3730 = vpop.f32.mrf.mxu0
      %v3731 = vadd.f32 0.0, %v3730
      %3732 = vdwg.mxu0
      %v3733 = vadd.f32 %v3634, %v3729
      %v3734 = vadd.f32 %v3635, %v3731
      %3735 = vrot.lane.b32.xlu0 %v2964, 111
      %v3736 = vpop.permute.xlu0 %3735
      %3737 = vrot.lane.b32.xlu0 %v2965, 111
      %v3738 = vpop.permute.xlu0 %3737
      %v3739 = vsel %vm1559, %v3736, %v3738
      %v3740 = vsel %vm1559, %v3738, %v3736
      %s3741 = scalar_lea.vmem %s10, 16
      %v3742 = vld [vmem:[%s3741] sm:$0x3]
      %v3744 = vlaneseq
      %v3745 = vshrl.u32 %v3744, 7
      %v3746 = vsub.s32 0, %v3745
      %v3747 = vrot.slane %v3742, %v3746
      %v3748 = vlaneseq
      %v3749 = vshrl.u32 %v3748, 7
      %v3750 = vsub.s32 1, %v3749
      %v3751 = vrot.slane %v3742, %v3750
      %v3754 = vmul.f32 %v3739, %v3747
      %v3755 = vmul.f32 %v3740, %v3751
      %s3756 = scalar_lea.vmem %s6, 32
      %v3757 = vld [vmem:[%s3756] sm:$0x7]
      %v3759 = vsel %vm1749, %v3757, 0
      %3761 = vmatprep.subr.mxu0 0.0
      %3762 = vmatpush1.msra.mxu0 0.0
      %3763 = vmatprep.subr.mxu0 0.0
      %3764 = vmatpush1.msra.mxu0 0.0
      %3765 = vmatprep.subr.mxu0 0.0
      %3766 = vmatpush1.msra.mxu0 0.0
      %3767 = vmatprep.subr.mxu0 0.0
      %3768 = vmatpush1.msra.mxu0 0.0
      %3769 = vmatprep.subr.mxu0 0.0
      %3770 = vmatpush1.msra.mxu0 0.0
      %3771 = vmatprep.subr.mxu0 0.0
      %3772 = vmatpush1.msra.mxu0 0.0
      %3773 = vmatprep.subr.mxu0 0.0
      %3774 = vmatpush1.msra.mxu0 0.0
      %3775 = vmatprep.subr.mxu0 0.0
      %3776 = vmatpush1.msra.mxu0 0.0
      %3777 = vmatprep.subr.mxu0 0.0
      %3778 = vmatpush1.msra.mxu0 0.0
      %3779 = vmatprep.subr.mxu0 0.0
      %3780 = vmatpush1.msra.mxu0 0.0
      %3781 = vmatprep.subr.mxu0 0.0
      %3782 = vmatpush1.msra.mxu0 0.0
      %3783 = vmatprep.subr.mxu0 0.0
      %3784 = vmatpush1.msra.mxu0 0.0
      %3785 = vmatprep.subr.mxu0 0.0
      %3786 = vmatpush1.msra.mxu0 0.0
      %3787 = vmatprep.subr.mxu0 0.0
      %3788 = vmatpush1.msra.mxu0 0.0
      %3789 = vmatprep.subr.mxu0 0.0
      %3790 = vmatpush1.msra.mxu0 0.0
      %3791 = vmatprep.subr.mxu0 %v3755
      %3792 = vmatpush1.msra.mxu0 %v3754
      %3793 = vmatprep.subr.mxu0 0.0
      %3794 = vmatpush2.msra.mxu0 0.0
      %3795 = vmatprep.subr.mxu0 0.0
      %3796 = vmatpush2.msra.mxu0 0.0
      %3797 = vmatprep.subr.mxu0 0.0
      %3798 = vmatpush2.msra.mxu0 0.0
      %3799 = vmatprep.subr.mxu0 0.0
      %3800 = vmatpush2.msra.mxu0 0.0
      %3801 = vmatprep.subr.mxu0 0.0
      %3802 = vmatpush2.msra.mxu0 0.0
      %3803 = vmatprep.subr.mxu0 0.0
      %3804 = vmatpush2.msra.mxu0 0.0
      %3805 = vmatprep.subr.mxu0 0.0
      %3806 = vmatpush2.msra.mxu0 0.0
      %3807 = vmatprep.subr.mxu0 0.0
      %3808 = vmatpush2.msra.mxu0 0.0
      %3809 = vmatprep.subr.mxu0 0.0
      %3810 = vmatpush2.msra.mxu0 0.0
      %3811 = vmatprep.subr.mxu0 0.0
      %3812 = vmatpush2.msra.mxu0 0.0
      %3813 = vmatprep.subr.mxu0 0.0
      %3814 = vmatpush2.msra.mxu0 0.0
      %3815 = vmatprep.subr.mxu0 0.0
      %3816 = vmatpush2.msra.mxu0 0.0
      %3817 = vmatprep.subr.mxu0 0.0
      %3818 = vmatpush2.msra.mxu0 0.0
      %3819 = vmatprep.subr.mxu0 0.0
      %3820 = vmatpush2.msra.mxu0 0.0
      %3821 = vmatprep.subr.mxu0 0.0
      %3822 = vmatpush2.msra.mxu0 0.0
      %3823 = vmatprep.subr.mxu0 0.0
      %3824 = vmatpush2.msra.mxu0 0.0
      %3825 = vmatprep.mubr.f32.mxu0 0.0
      %3826 = vmatmul.mubr.f32.gmra.mxu0 %v3759
      %v3827 = vpop.f32.mrf.mxu0
      %v3828 = vadd.f32 0.0, %v3827
      %v3829 = vpop.f32.mrf.mxu0
      %v3830 = vadd.f32 0.0, %v3829
      %3831 = vdwg.mxu0
      %v3832 = vadd.f32 %v3733, %v3828
      %v3833 = vadd.f32 %v3734, %v3830
      %v3834 = vld [vmem:[%s7] sm:$0x7]
      %3836 = vset.pattern.permute.xlu0 0
      %3837 = vperm.xlu0 %3836, %v3834
      %v3838 = vpop.permute.xlu0 %3837
      %v3840 = vadd.f32 %v3832, %v3838
      %v3841 = vadd.f32 %v3833, %v3838
      %v3844 = vcombine.low %v3840, %v3841
      %3846 = vst [vmem:[#allocation2] sm:$0x77] %v3844
      %s3847 = smul.u32 %s27, 2
      %s3848 = smul.addr %s3847, 4
      %s3849 = scalar_lea.vmem %s438, %s3848
      %3850 = vst [vmem:[%s3849] sm:$0x77] %v3844
      %p3851 = scmp.lt.s32.totalorder %s26, 1
      %s3852 = scalar_select %p3851, %s26, 1
      %s3853 = smul.addr %s3852, 14
      %s3854 = smul.addr %s3853, 4
      %s3855 = scalar_lea.vmem %s11, %s3854
      // Predicated region
      $region69: #{_lambda_.1} parent=63 // pred_check
        %p3856 = pneg %p298
      $region70: #{_lambda_.1} parent=63 // pred_check_branch
        %3858 = sbr.rel (%p3856) target = $region72
      $region71: #{_lambda_.1} parent=63 // pred_region
        _
      $region72: #{_lambda_.1} parent=63 // pred_fallthru
        _
    $region64: #{_lambda_.1} parent=5 // pred_fallthru
      _
    %p3859 = scmp.le.s32.totalorder 2, %s17
    // Predicated region
    $region73: #{_lambda_.1} parent=5 // pred_check
      %p3860 = pneg %p3859
    $region74: #{_lambda_.1} parent=5 // pred_check_branch
      %3862 = sbr.rel (%p3860) target = $region76
    $region75: #{_lambda_.1} parent=5 // pred_region
      %s3863 = ssub.s32 %s17, 2
      // Predicated region
      $region77: #{_lambda_.1} parent=75 // pred_check
        %p3864 = pneg %p304
      $region78: #{_lambda_.1} parent=75 // pred_check_branch
        %3866 = sbr.rel (%p3864) target = $region80
      $region79: #{_lambda_.1} parent=75 // pred_region
        %p3867 = scmp.lt.s32.totalorder %s28, 1
        %s3868 = scalar_select %p3867, %s28, 1
        %s3869 = smul.addr %s3868, 14
        %s3870 = smul.addr %s3869, 4
        %s3871 = scalar_lea.vmem %s11, %s3870
      $region80: #{_lambda_.1} parent=75 // pred_fallthru
        _
    $region76: #{_lambda_.1} parent=5 // pred_fallthru
      _
  $region6: #{_lambda_.1} parent=0 // loop_footer
    %s21 = sadd.s32 1, %s17
  $region7: #{_lambda_.1} parent=0 // loop_footer_branch
    %16 = sbr.rel target = $region3
  $region8: #{_lambda_.1} parent=0 // loop_exit
    _

</llo_original>
